<compile_context>
chip_gen: v7x
topology: tpu7x:2x2x1
jax: 0.10.0
libtpu: 0.0.40
codegen_flags: <defaults>
</compile_context>

<pallas_src>
import functools
import math

import jax
import jax.numpy as jnp
import numpy as np
from jax import lax
from jax.experimental import pallas as pl
from jax.experimental.pallas import tpu as pltpu


def _round_up(x, m):
    return (x + m - 1) // m * m


def _min_sublane(dtype):
    return {4: 8, 2: 16, 1: 32}.get(jnp.dtype(dtype).itemsize, 8)


def _lstm_recurrence_kernel(xproj_ref, wh_ref, hseq_ref, c_out_ref,
                            c_sc, h_sc, *, seq_true, t_chunk, unroll, needs_mask):
    """One grid step = `t_chunk` timesteps of one batch tile.

    Grid = (batch_tiles [parallel], seq_chunks [arbitrary / sequential]).
    The c/h carries live in vregs (fori_loop carry) across the chunk; the VMEM
    scratch is only read/written once per chunk to persist state across the
    sequential chunk axis (re-initialized when the chunk index wraps to 0).
    """
    chunk = pl.program_id(1)
    HSp = c_sc.shape[-1]

    @pl.when(chunk == 0)
    def _():
        c_sc[...] = jnp.zeros_like(c_sc)
        h_sc[...] = jnp.zeros_like(h_sc)

    c0 = c_sc[...]
    h0 = h_sc[...]

    def step(i, carry):
        c_t, h_t = carry
        # gates = (x_t @ W_x + bias) [precomputed, possibly bf16 -> upcast]
        #       +  h_t @ W_h         [W_h streamed from the VMEM ref, f32 acc]
        gates = (xproj_ref[i].astype(jnp.float32)
                 + jnp.dot(h_t.astype(wh_ref.dtype), wh_ref[...],
                           preferred_element_type=jnp.float32))
        # Gate columns reordered host-side to (i, f, o, g): one contiguous,
        # lane-aligned sigmoid slab + one tanh slab.
        sig = jax.nn.sigmoid(gates[:, 0:3 * HSp])
        g_t = jnp.tanh(gates[:, 3 * HSp:4 * HSp])
        i_t = sig[:, 0 * HSp:1 * HSp]
        f_t = sig[:, 1 * HSp:2 * HSp]
        o_t = sig[:, 2 * HSp:3 * HSp]
        c_new = f_t * c_t + i_t * g_t
        h_new = o_t * jnp.tanh(c_new)

        if needs_mask:  # static: only present when seq was padded to a chunk multiple
            valid = (chunk * t_chunk + i) < seq_true
            c_new = jnp.where(valid, c_new, c_t)
            h_new = jnp.where(valid, h_new, h_t)

        hseq_ref[i] = h_new.astype(hseq_ref.dtype)
        return (c_new, h_new)

    c_f, h_f = lax.fori_loop(0, t_chunk, step, (c0, h0), unroll=unroll)

    # Persist carries for the next sequential chunk (single VMEM write per chunk).
    c_sc[...] = c_f
    h_sc[...] = h_f

    @pl.when(chunk == pl.num_programs(1) - 1)
    def _():
        c_out_ref[...] = c_f.astype(c_out_ref.dtype)


def peephole_lstm_forward(x, W, bias, hidden_size, *,
                          t_chunk=32, num_batch_tiles=1,
                          matmul_dtype=jnp.bfloat16, out_dtype=None):
    """x: (seq, batch, input_size); W: (input_size + hidden, 4*hidden); bias: (4*hidden,).

    Returns (hidden_seq, (c_t, h_t)) matching the PyTorch module's default path.
    NOTE: with matmul_dtype=bf16 both the hoisted x-projection and the recurrent
    matmul run in bf16 (f32 accumulate); nonlinearities and the c/h carry are f32.
    """
    seq, bs, input_size = x.shape
    HS = hidden_size
    HSp = _round_up(HS, 128)                     # lane-align gate slices / hseq stores
    out_dtype = x.dtype if out_dtype is None else out_dtype

    # dtype-aware sublane alignment for the batch tile (8 f32 / 16 bf16 / 32 int8)
    sub = max(_min_sublane(matmul_dtype), _min_sublane(out_dtype))
    bs_pad = _round_up(bs, sub * num_batch_tiles)
    b_tile = bs_pad // num_batch_tiles

    t_chunk = max(1, min(t_chunk, seq))
    seq_pad = _round_up(seq, t_chunk)
    n_chunks = seq_pad // t_chunk

    # ---- host-side prep: reorder gate columns (i,f,g,o) -> (i,f,o,g), pad HS→HSp ----
    pad_c = lambda w: jnp.pad(w, ((0, 0), (0, HSp - HS)))
    pad_b = lambda b: jnp.pad(b, (0, HSp - HS))
    Wi, Wf, Wg, Wo = W[:, 0:HS], W[:, HS:2 * HS], W[:, 2 * HS:3 * HS], W[:, 3 * HS:4 * HS]
    bi, bf_, bg, bo = bias[0:HS], bias[HS:2 * HS], bias[2 * HS:3 * HS], bias[3 * HS:4 * HS]
    W_re = jnp.concatenate([pad_c(Wi), pad_c(Wf), pad_c(Wo), pad_c(Wg)], axis=1)
    bias_re = jnp.concatenate([pad_b(bi), pad_b(bf_), pad_b(bo), pad_b(bg)])

    W_x = W_re[:input_size, :]
    W_h = jnp.pad(W_re[input_size:, :], ((0, HSp - HS), (0, 0))).astype(matmul_dtype)

    x_pad = jnp.pad(x, ((0, seq_pad - seq), (0, bs_pad - bs), (0, 0)))

    # Hoisted input projection + bias fold: one large MXU-friendly GEMM (plain XLA).
    x2 = x_pad.reshape(seq_pad * bs_pad, input_size).astype(matmul_dtype)
    xproj = (jnp.dot(x2, W_x.astype(matmul_dtype),
                     preferred_element_type=jnp.float32)
             + bias_re.astype(jnp.float32))
    xproj = xproj.astype(matmul_dtype).reshape(seq_pad, bs_pad, 4 * HSp)

    kernel = functools.partial(
        _lstm_recurrence_kernel,
        seq_true=seq,
        t_chunk=t_chunk,
        unroll=min(8, t_chunk),                  # fixed partial unroll
        needs_mask=(seq_pad != seq),
    )

    mm_B = jnp.dtype(matmul_dtype).itemsize
    out_B = jnp.dtype(out_dtype).itemsize
    vmem_needed = (2 * t_chunk * b_tile * 4 * HSp * mm_B      # xproj blocks (double buf)
                   + 2 * t_chunk * b_tile * HSp * out_B        # hseq blocks
                   + 2 * b_tile * HSp * out_B                  # c_out block
                   + 2 * HSp * 4 * HSp * mm_B                  # W_h (worst case: double buf)
                   + 2 * b_tile * HSp * 4)                     # c/h carry scratch
    vmem_limit = int(min(128 << 20, max(vmem_needed + (4 << 20), 32 << 20)))

    cost = pl.CostEstimate(
        flops=int(2 * seq_pad * bs_pad * HSp * 4 * HSp),
        transcendentals=int(5 * seq_pad * bs_pad * HSp),
        bytes_accessed=int(xproj.size * mm_B + W_h.size * mm_B
                           + seq_pad * bs_pad * HSp * out_B + bs_pad * HSp * out_B),
    )

    def run(weight_pipeline_mode):
        if weight_pipeline_mode is None:
            wh_spec = pl.BlockSpec((HSp, 4 * HSp), lambda b, t: (0, 0))
        else:
            wh_spec = pl.BlockSpec((HSp, 4 * HSp), lambda b, t: (0, 0),
                                   pipeline_mode=weight_pipeline_mode)
        grid_spec = pltpu.PrefetchScalarGridSpec(
            num_scalar_prefetch=0,
            grid=(num_batch_tiles, n_chunks),
            in_specs=[
                # per-chunk slab of precomputed gate inputs (bf16 or f32)
                pl.BlockSpec((t_chunk, b_tile, 4 * HSp), lambda b, t: (t, b, 0)),
                # recurrent weight, resident (constant index_map)
                wh_spec,
            ],
            out_specs=[
                pl.BlockSpec((t_chunk, b_tile, HSp), lambda b, t: (t, b, 0)),  # hidden_seq
                pl.BlockSpec((b_tile, HSp), lambda b, t: (b, 0)),              # final c_t
            ],
            scratch_shapes=[
                pltpu.VMEM((b_tile, HSp), jnp.float32),   # c carry (across chunks)
                pltpu.VMEM((b_tile, HSp), jnp.float32),   # h carry (across chunks)
            ],
        )
        return pl.pallas_call(
            kernel,
            out_shape=(
                jax.ShapeDtypeStruct((seq_pad, bs_pad, HSp), out_dtype),
                jax.ShapeDtypeStruct((bs_pad, HSp), out_dtype),
            ),
            grid_spec=grid_spec,
            compiler_params=pltpu.CompilerParams(
                dimension_semantics=("parallel", "arbitrary"),
                vmem_limit_bytes=vmem_limit,
            ),
            cost_estimate=cost,
        )(xproj, W_h)

    try:
        # Constant index_map ⇒ single-buffer the resident recurrent weight.
        hseq_pad, c_pad = run(pl.Buffered(1))
    except Exception:
        # TODO(synk): fallback for jax builds that reject single-buffer
        # pipeline_mode on an input BlockSpec (uses default double-buffering).
        hseq_pad, c_pad = run(None)

    # Skip the slicing copies when no padding was applied.
    hidden_seq = hseq_pad
    if (seq_pad, bs_pad, HSp) != (seq, bs, HS):
        hidden_seq = hseq_pad[:seq, :bs, :HS]
    c_t = c_pad if (bs_pad, HSp) == (bs, HS) else c_pad[:bs, :HS]
    h_t = hidden_seq[seq - 1]            # final h == last emitted hidden state
    return hidden_seq, (c_t, h_t)


def _reference_forward(x, W, bias, hidden_size):
    """Pure-JAX reference mirroring the PyTorch loop (peephole=False path)."""
    seq, bs, _ = x.shape
    HS = hidden_size
    c_t = jnp.zeros((bs, HS), jnp.float32)
    h_t = jnp.zeros((bs, HS), jnp.float32)
    outs = []
    for t in range(seq):
        lstm_mat = jnp.concatenate([x[t], h_t], axis=1)
        gates = lstm_mat @ W + bias
        g_t = jnp.tanh(gates[:, 2 * HS:3 * HS])
        i_t = jax.nn.sigmoid(gates[:, :HS])
        f_t = jax.nn.sigmoid(gates[:, HS:2 * HS])
        o_t = jax.nn.sigmoid(gates[:, 3 * HS:])
        c_t = f_t * c_t + i_t * g_t
        h_t = o_t * jnp.tanh(c_t)
        outs.append(h_t[None])
    return jnp.concatenate(outs, axis=0), (c_t, h_t)


if __name__ == "__main__":
    SEQ, BATCH, INPUT, HIDDEN = 8, 2, 4, 32

    key = jax.random.PRNGKey(0)
    k_x, k_w, k_b = jax.random.split(key, 3)

    # Deterministic init matching nn.Module init_weights(): uniform(-stdv, stdv)
    stdv = 1.0 / math.sqrt(HIDDEN)
    x = jax.random.normal(k_x, (SEQ, BATCH, INPUT), dtype=jnp.float32)
    W = jax.random.uniform(k_w, (INPUT + HIDDEN, 4 * HIDDEN),
                           minval=-stdv, maxval=stdv, dtype=jnp.float32)
    bias = jax.random.uniform(k_b, (4 * HIDDEN,),
                              minval=-stdv, maxval=stdv, dtype=jnp.float32)

    ref_seq, (ref_c, ref_h) = _reference_forward(x, W, bias, HIDDEN)

    # 1) f32 matmul path, single chunk, single batch tile — tight tolerance.
    hs1, (c1, h1) = peephole_lstm_forward(x, W, bias, HIDDEN,
                                          matmul_dtype=jnp.float32)
    jax.block_until_ready((hs1, c1, h1))
    np.testing.assert_allclose(np.asarray(hs1), np.asarray(ref_seq), rtol=1e-5, atol=1e-5)
    np.testing.assert_allclose(np.asarray(c1), np.asarray(ref_c), rtol=1e-5, atol=1e-5)
    np.testing.assert_allclose(np.asarray(h1), np.asarray(ref_h), rtol=1e-5, atol=1e-5)

    # 2) f32 path exercising seq padding/masking, multi-chunk carry and the
    #    parallel batch-tile axis (v7x megacore path) — tight tolerance.
    hs2, (c2, h2) = peephole_lstm_forward(x, W, bias, HIDDEN, t_chunk=5,
                                          num_batch_tiles=2,
                                          matmul_dtype=jnp.float32)
    jax.block_until_ready((hs2, c2, h2))
    np.testing.assert_allclose(np.asarray(hs2), np.asarray(ref_seq), rtol=1e-5, atol=1e-5)
    np.testing.assert_allclose(np.asarray(c2), np.asarray(ref_c), rtol=1e-5, atol=1e-5)
    np.testing.assert_allclose(np.asarray(h2), np.asarray(ref_h), rtol=1e-5, atol=1e-5)

    # 3) default bf16 matmul / bf16 xproj path with bf16 hidden_seq output
    #    (f32 accumulate + f32 elementwise/state) — loose tolerance.
    hs3, (c3, h3) = peephole_lstm_forward(x, W, bias, HIDDEN,
                                          out_dtype=jnp.bfloat16)
    jax.block_until_ready((hs3, c3, h3))
    np.testing.assert_allclose(np.asarray(hs3.astype(jnp.float32)), np.asarray(ref_seq),
                               rtol=5e-2, atol=5e-2)
    np.testing.assert_allclose(np.asarray(c3.astype(jnp.float32)), np.asarray(ref_c),
                               rtol=5e-2, atol=5e-2)
    np.testing.assert_allclose(np.asarray(h3.astype(jnp.float32)), np.asarray(ref_h),
                               rtol=5e-2, atol=5e-2)

    print("KERNEL_OK")
</pallas_src>

<mosaic_0001>
module attributes {stable_mosaic.version = 11 : i64} {
  func.func @_lstm_recurrence_kernel(%arg0: i32, %arg1: i32, %arg2: memref<8x8x512xf32, #tpu.memory_space<vmem>>, %arg3: memref<128x512xf32, #tpu.memory_space<vmem>>, %arg4: memref<8x8x128xf32, #tpu.memory_space<vmem>>, %arg5: memref<8x128xf32, #tpu.memory_space<vmem>>, %arg6: memref<8x128xf32, #tpu.memory_space<vmem>>, %arg7: memref<8x128xf32, #tpu.memory_space<vmem>>) attributes {dimension_semantics = [#tpu.dimension_semantics<parallel>, #tpu.dimension_semantics<arbitrary>], iteration_bounds = array<i64: 1, 1>, scalar_prefetch = 0 : i64, scratch_operands = 2 : i64, tpu.core_type = #tpu.core_type<tc>, window_params = [{transform_indices = @transform_0, window_bounds = array<i64: 8, 8, 512>}, {pipeline_mode = #tpu.pipeline_mode<synchronous>, transform_indices = @transform_1, window_bounds = array<i64: 128, 512>}, {transform_indices = @transform_2, window_bounds = array<i64: 8, 8, 128>}, {transform_indices = @transform_3, window_bounds = array<i64: 8, 128>}]} {
    %c0_i32 = arith.constant 0 : i32
    %0 = arith.cmpi eq, %arg1, %c0_i32 : i32
    %1 = arith.extui %0 : i1 to i32
    %c0_i32_0 = arith.constant 0 : i32
    %2 = arith.cmpi ne, %1, %c0_i32_0 : i32
    scf.if %2 {
      %cst_74 = arith.constant 0.000000e+00 : f32
      %218 = vector.broadcast %cst_74 : f32 to vector<8x128xf32>
      %c0_75 = arith.constant 0 : index
      %c0_76 = arith.constant 0 : index
      %219 = vector.load %arg6[%c0_75, %c0_76] : memref<8x128xf32, #tpu.memory_space<vmem>>, vector<8x128xf32>
      tpu.vector_store %arg6[%c0_75, %c0_76], %218 {strides = array<i32>} : memref<8x128xf32, #tpu.memory_space<vmem>>, vector<8x128xf32>,
      %cst_77 = arith.constant 0.000000e+00 : f32
      %220 = vector.broadcast %cst_77 : f32 to vector<8x128xf32>
      %c0_78 = arith.constant 0 : index
      %c0_79 = arith.constant 0 : index
      %221 = vector.load %arg7[%c0_78, %c0_79] : memref<8x128xf32, #tpu.memory_space<vmem>>, vector<8x128xf32>
      tpu.vector_store %arg7[%c0_78, %c0_79], %220 {strides = array<i32>} : memref<8x128xf32, #tpu.memory_space<vmem>>, vector<8x128xf32>,
    } else {
    }
    %c0 = arith.constant 0 : index
    %c0_1 = arith.constant 0 : index
    %3 = vector.load %arg6[%c0, %c0_1] : memref<8x128xf32, #tpu.memory_space<vmem>>, vector<8x128xf32>
    %c0_2 = arith.constant 0 : index
    %c0_3 = arith.constant 0 : index
    %4 = vector.load %arg7[%c0_2, %c0_3] : memref<8x128xf32, #tpu.memory_space<vmem>>, vector<8x128xf32>
    %c0_i32_4 = arith.constant 0 : i32
    %5 = arith.index_cast %c0_i32_4 : i32 to index
    %c0_5 = arith.constant 0 : index
    %c0_6 = arith.constant 0 : index
    %6 = vector.load %arg2[%5, %c0_5, %c0_6] : memref<8x8x512xf32, #tpu.memory_space<vmem>>, vector<1x8x512xf32>
    %7 = vector.shape_cast %6 : vector<1x8x512xf32> to vector<8x512xf32>
    %c0_7 = arith.constant 0 : index
    %c0_8 = arith.constant 0 : index
    %8 = vector.load %arg3[%c0_7, %c0_8] : memref<128x512xf32, #tpu.memory_space<vmem>>, vector<128x512xf32>
    %cst = arith.constant dense<0.000000e+00> : vector<8x512xf32>
    %9 = tpu.matmul %4, %8, %cst {dimension_numbers = #tpu.dot_dimension_numbers<[1], [0], [0], [1], [0, 0, 1, 1], [], []>} : vector<8x128xf32>, vector<128x512xf32>, vector<8x512xf32> -> vector<8x512xf32>
    %10 = arith.addf %7, %9 : vector<8x512xf32>
    %11 = vector.extract_strided_slice %10 {offsets = [0, 0], sizes = [8, 384], strides = [1, 1]} : vector<8x512xf32> to vector<8x384xf32>
    %12 = arith.negf %11 : vector<8x384xf32>
    %13 = math.exp %12 : vector<8x384xf32>
    %cst_9 = arith.constant 1.000000e+00 : f32
    %14 = vector.broadcast %cst_9 : f32 to vector<8x384xf32>
    %15 = arith.addf %14, %13 : vector<8x384xf32>
    %16 = arith.divf %14, %15 : vector<8x384xf32>
    %17 = vector.extract_strided_slice %10 {offsets = [0, 384], sizes = [8, 128], strides = [1, 1]} : vector<8x512xf32> to vector<8x128xf32>
    %18 = math.tanh %17 : vector<8x128xf32>
    %19 = vector.extract_strided_slice %16 {offsets = [0, 0], sizes = [8, 128], strides = [1, 1]} : vector<8x384xf32> to vector<8x128xf32>
    %20 = vector.extract_strided_slice %16 {offsets = [0, 128], sizes = [8, 128], strides = [1, 1]} : vector<8x384xf32> to vector<8x128xf32>
    %21 = vector.extract_strided_slice %16 {offsets = [0, 256], sizes = [8, 128], strides = [1, 1]} : vector<8x384xf32> to vector<8x128xf32>
    %22 = arith.mulf %20, %3 : vector<8x128xf32>
    %23 = arith.mulf %19, %18 : vector<8x128xf32>
    %24 = arith.addf %22, %23 : vector<8x128xf32>
    %25 = math.tanh %24 : vector<8x128xf32>
    %26 = arith.mulf %21, %25 : vector<8x128xf32>
    %27 = arith.index_cast %c0_i32_4 : i32 to index
    %c0_10 = arith.constant 0 : index
    %c0_11 = arith.constant 0 : index
    %28 = vector.load %arg4[%27, %c0_10, %c0_11] : memref<8x8x128xf32, #tpu.memory_space<vmem>>, vector<1x8x128xf32>
    %29 = vector.shape_cast %28 : vector<1x8x128xf32> to vector<8x128xf32>
    %30 = vector.shape_cast %26 : vector<8x128xf32> to vector<1x8x128xf32>
    tpu.vector_store %arg4[%27, %c0_10, %c0_11], %30 {strides = array<i32>} : memref<8x8x128xf32, #tpu.memory_space<vmem>>, vector<1x8x128xf32>,
    %c1_i32 = arith.constant 1 : i32
    %31 = arith.index_cast %c1_i32 : i32 to index
    %c0_12 = arith.constant 0 : index
    %c0_13 = arith.constant 0 : index
    %32 = vector.load %arg2[%31, %c0_12, %c0_13] : memref<8x8x512xf32, #tpu.memory_space<vmem>>, vector<1x8x512xf32>
    %33 = vector.shape_cast %32 : vector<1x8x512xf32> to vector<8x512xf32>
    %c0_14 = arith.constant 0 : index
    %c0_15 = arith.constant 0 : index
    %34 = vector.load %arg3[%c0_14, %c0_15] : memref<128x512xf32, #tpu.memory_space<vmem>>, vector<128x512xf32>
    %cst_16 = arith.constant dense<0.000000e+00> : vector<8x512xf32>
    %35 = tpu.matmul %26, %34, %cst_16 {dimension_numbers = #tpu.dot_dimension_numbers<[1], [0], [0], [1], [0, 0, 1, 1], [], []>} : vector<8x128xf32>, vector<128x512xf32>, vector<8x512xf32> -> vector<8x512xf32>
    %36 = arith.addf %33, %35 : vector<8x512xf32>
    %37 = vector.extract_strided_slice %36 {offsets = [0, 0], sizes = [8, 384], strides = [1, 1]} : vector<8x512xf32> to vector<8x384xf32>
    %38 = arith.negf %37 : vector<8x384xf32>
    %39 = math.exp %38 : vector<8x384xf32>
    %cst_17 = arith.constant 1.000000e+00 : f32
    %40 = vector.broadcast %cst_17 : f32 to vector<8x384xf32>
    %41 = arith.addf %40, %39 : vector<8x384xf32>
    %42 = arith.divf %40, %41 : vector<8x384xf32>
    %43 = vector.extract_strided_slice %36 {offsets = [0, 384], sizes = [8, 128], strides = [1, 1]} : vector<8x512xf32> to vector<8x128xf32>
    %44 = math.tanh %43 : vector<8x128xf32>
    %45 = vector.extract_strided_slice %42 {offsets = [0, 0], sizes = [8, 128], strides = [1, 1]} : vector<8x384xf32> to vector<8x128xf32>
    %46 = vector.extract_strided_slice %42 {offsets = [0, 128], sizes = [8, 128], strides = [1, 1]} : vector<8x384xf32> to vector<8x128xf32>
    %47 = vector.extract_strided_slice %42 {offsets = [0, 256], sizes = [8, 128], strides = [1, 1]} : vector<8x384xf32> to vector<8x128xf32>
    %48 = arith.mulf %46, %24 : vector<8x128xf32>
    %49 = arith.mulf %45, %44 : vector<8x128xf32>
    %50 = arith.addf %48, %49 : vector<8x128xf32>
    %51 = math.tanh %50 : vector<8x128xf32>
    %52 = arith.mulf %47, %51 : vector<8x128xf32>
    %53 = arith.index_cast %c1_i32 : i32 to index
    %c0_18 = arith.constant 0 : index
    %c0_19 = arith.constant 0 : index
    %54 = vector.load %arg4[%53, %c0_18, %c0_19] : memref<8x8x128xf32, #tpu.memory_space<vmem>>, vector<1x8x128xf32>
    %55 = vector.shape_cast %54 : vector<1x8x128xf32> to vector<8x128xf32>
    %56 = vector.shape_cast %52 : vector<8x128xf32> to vector<1x8x128xf32>
    tpu.vector_store %arg4[%53, %c0_18, %c0_19], %56 {strides = array<i32>} : memref<8x8x128xf32, #tpu.memory_space<vmem>>, vector<1x8x128xf32>,
    %c2_i32 = arith.constant 2 : i32
    %57 = arith.index_cast %c2_i32 : i32 to index
    %c0_20 = arith.constant 0 : index
    %c0_21 = arith.constant 0 : index
    %58 = vector.load %arg2[%57, %c0_20, %c0_21] : memref<8x8x512xf32, #tpu.memory_space<vmem>>, vector<1x8x512xf32>
    %59 = vector.shape_cast %58 : vector<1x8x512xf32> to vector<8x512xf32>
    %c0_22 = arith.constant 0 : index
    %c0_23 = arith.constant 0 : index
    %60 = vector.load %arg3[%c0_22, %c0_23] : memref<128x512xf32, #tpu.memory_space<vmem>>, vector<128x512xf32>
    %cst_24 = arith.constant dense<0.000000e+00> : vector<8x512xf32>
    %61 = tpu.matmul %52, %60, %cst_24 {dimension_numbers = #tpu.dot_dimension_numbers<[1], [0], [0], [1], [0, 0, 1, 1], [], []>} : vector<8x128xf32>, vector<128x512xf32>, vector<8x512xf32> -> vector<8x512xf32>
    %62 = arith.addf %59, %61 : vector<8x512xf32>
    %63 = vector.extract_strided_slice %62 {offsets = [0, 0], sizes = [8, 384], strides = [1, 1]} : vector<8x512xf32> to vector<8x384xf32>
    %64 = arith.negf %63 : vector<8x384xf32>
    %65 = math.exp %64 : vector<8x384xf32>
    %cst_25 = arith.constant 1.000000e+00 : f32
    %66 = vector.broadcast %cst_25 : f32 to vector<8x384xf32>
    %67 = arith.addf %66, %65 : vector<8x384xf32>
    %68 = arith.divf %66, %67 : vector<8x384xf32>
    %69 = vector.extract_strided_slice %62 {offsets = [0, 384], sizes = [8, 128], strides = [1, 1]} : vector<8x512xf32> to vector<8x128xf32>
    %70 = math.tanh %69 : vector<8x128xf32>
    %71 = vector.extract_strided_slice %68 {offsets = [0, 0], sizes = [8, 128], strides = [1, 1]} : vector<8x384xf32> to vector<8x128xf32>
    %72 = vector.extract_strided_slice %68 {offsets = [0, 128], sizes = [8, 128], strides = [1, 1]} : vector<8x384xf32> to vector<8x128xf32>
    %73 = vector.extract_strided_slice %68 {offsets = [0, 256], sizes = [8, 128], strides = [1, 1]} : vector<8x384xf32> to vector<8x128xf32>
    %74 = arith.mulf %72, %50 : vector<8x128xf32>
    %75 = arith.mulf %71, %70 : vector<8x128xf32>
    %76 = arith.addf %74, %75 : vector<8x128xf32>
    %77 = math.tanh %76 : vector<8x128xf32>
    %78 = arith.mulf %73, %77 : vector<8x128xf32>
    %79 = arith.index_cast %c2_i32 : i32 to index
    %c0_26 = arith.constant 0 : index
    %c0_27 = arith.constant 0 : index
    %80 = vector.load %arg4[%79, %c0_26, %c0_27] : memref<8x8x128xf32, #tpu.memory_space<vmem>>, vector<1x8x128xf32>
    %81 = vector.shape_cast %80 : vector<1x8x128xf32> to vector<8x128xf32>
    %82 = vector.shape_cast %78 : vector<8x128xf32> to vector<1x8x128xf32>
    tpu.vector_store %arg4[%79, %c0_26, %c0_27], %82 {strides = array<i32>} : memref<8x8x128xf32, #tpu.memory_space<vmem>>, vector<1x8x128xf32>,
    %c3_i32 = arith.constant 3 : i32
    %83 = arith.index_cast %c3_i32 : i32 to index
    %c0_28 = arith.constant 0 : index
    %c0_29 = arith.constant 0 : index
    %84 = vector.load %arg2[%83, %c0_28, %c0_29] : memref<8x8x512xf32, #tpu.memory_space<vmem>>, vector<1x8x512xf32>
    %85 = vector.shape_cast %84 : vector<1x8x512xf32> to vector<8x512xf32>
    %c0_30 = arith.constant 0 : index
    %c0_31 = arith.constant 0 : index
    %86 = vector.load %arg3[%c0_30, %c0_31] : memref<128x512xf32, #tpu.memory_space<vmem>>, vector<128x512xf32>
    %cst_32 = arith.constant dense<0.000000e+00> : vector<8x512xf32>
    %87 = tpu.matmul %78, %86, %cst_32 {dimension_numbers = #tpu.dot_dimension_numbers<[1], [0], [0], [1], [0, 0, 1, 1], [], []>} : vector<8x128xf32>, vector<128x512xf32>, vector<8x512xf32> -> vector<8x512xf32>
    %88 = arith.addf %85, %87 : vector<8x512xf32>
    %89 = vector.extract_strided_slice %88 {offsets = [0, 0], sizes = [8, 384], strides = [1, 1]} : vector<8x512xf32> to vector<8x384xf32>
    %90 = arith.negf %89 : vector<8x384xf32>
    %91 = math.exp %90 : vector<8x384xf32>
    %cst_33 = arith.constant 1.000000e+00 : f32
    %92 = vector.broadcast %cst_33 : f32 to vector<8x384xf32>
    %93 = arith.addf %92, %91 : vector<8x384xf32>
    %94 = arith.divf %92, %93 : vector<8x384xf32>
    %95 = vector.extract_strided_slice %88 {offsets = [0, 384], sizes = [8, 128], strides = [1, 1]} : vector<8x512xf32> to vector<8x128xf32>
    %96 = math.tanh %95 : vector<8x128xf32>
    %97 = vector.extract_strided_slice %94 {offsets = [0, 0], sizes = [8, 128], strides = [1, 1]} : vector<8x384xf32> to vector<8x128xf32>
    %98 = vector.extract_strided_slice %94 {offsets = [0, 128], sizes = [8, 128], strides = [1, 1]} : vector<8x384xf32> to vector<8x128xf32>
    %99 = vector.extract_strided_slice %94 {offsets = [0, 256], sizes = [8, 128], strides = [1, 1]} : vector<8x384xf32> to vector<8x128xf32>
    %100 = arith.mulf %98, %76 : vector<8x128xf32>
    %101 = arith.mulf %97, %96 : vector<8x128xf32>
    %102 = arith.addf %100, %101 : vector<8x128xf32>
    %103 = math.tanh %102 : vector<8x128xf32>
    %104 = arith.mulf %99, %103 : vector<8x128xf32>
    %105 = arith.index_cast %c3_i32 : i32 to index
    %c0_34 = arith.constant 0 : index
    %c0_35 = arith.constant 0 : index
    %106 = vector.load %arg4[%105, %c0_34, %c0_35] : memref<8x8x128xf32, #tpu.memory_space<vmem>>, vector<1x8x128xf32>
    %107 = vector.shape_cast %106 : vector<1x8x128xf32> to vector<8x128xf32>
    %108 = vector.shape_cast %104 : vector<8x128xf32> to vector<1x8x128xf32>
    tpu.vector_store %arg4[%105, %c0_34, %c0_35], %108 {strides = array<i32>} : memref<8x8x128xf32, #tpu.memory_space<vmem>>, vector<1x8x128xf32>,
    %c4_i32 = arith.constant 4 : i32
    %109 = arith.index_cast %c4_i32 : i32 to index
    %c0_36 = arith.constant 0 : index
    %c0_37 = arith.constant 0 : index
    %110 = vector.load %arg2[%109, %c0_36, %c0_37] : memref<8x8x512xf32, #tpu.memory_space<vmem>>, vector<1x8x512xf32>
    %111 = vector.shape_cast %110 : vector<1x8x512xf32> to vector<8x512xf32>
    %c0_38 = arith.constant 0 : index
    %c0_39 = arith.constant 0 : index
    %112 = vector.load %arg3[%c0_38, %c0_39] : memref<128x512xf32, #tpu.memory_space<vmem>>, vector<128x512xf32>
    %cst_40 = arith.constant dense<0.000000e+00> : vector<8x512xf32>
    %113 = tpu.matmul %104, %112, %cst_40 {dimension_numbers = #tpu.dot_dimension_numbers<[1], [0], [0], [1], [0, 0, 1, 1], [], []>} : vector<8x128xf32>, vector<128x512xf32>, vector<8x512xf32> -> vector<8x512xf32>
    %114 = arith.addf %111, %113 : vector<8x512xf32>
    %115 = vector.extract_strided_slice %114 {offsets = [0, 0], sizes = [8, 384], strides = [1, 1]} : vector<8x512xf32> to vector<8x384xf32>
    %116 = arith.negf %115 : vector<8x384xf32>
    %117 = math.exp %116 : vector<8x384xf32>
    %cst_41 = arith.constant 1.000000e+00 : f32
    %118 = vector.broadcast %cst_41 : f32 to vector<8x384xf32>
    %119 = arith.addf %118, %117 : vector<8x384xf32>
    %120 = arith.divf %118, %119 : vector<8x384xf32>
    %121 = vector.extract_strided_slice %114 {offsets = [0, 384], sizes = [8, 128], strides = [1, 1]} : vector<8x512xf32> to vector<8x128xf32>
    %122 = math.tanh %121 : vector<8x128xf32>
    %123 = vector.extract_strided_slice %120 {offsets = [0, 0], sizes = [8, 128], strides = [1, 1]} : vector<8x384xf32> to vector<8x128xf32>
    %124 = vector.extract_strided_slice %120 {offsets = [0, 128], sizes = [8, 128], strides = [1, 1]} : vector<8x384xf32> to vector<8x128xf32>
    %125 = vector.extract_strided_slice %120 {offsets = [0, 256], sizes = [8, 128], strides = [1, 1]} : vector<8x384xf32> to vector<8x128xf32>
    %126 = arith.mulf %124, %102 : vector<8x128xf32>
    %127 = arith.mulf %123, %122 : vector<8x128xf32>
    %128 = arith.addf %126, %127 : vector<8x128xf32>
    %129 = math.tanh %128 : vector<8x128xf32>
    %130 = arith.mulf %125, %129 : vector<8x128xf32>
    %131 = arith.index_cast %c4_i32 : i32 to index
    %c0_42 = arith.constant 0 : index
    %c0_43 = arith.constant 0 : index
    %132 = vector.load %arg4[%131, %c0_42, %c0_43] : memref<8x8x128xf32, #tpu.memory_space<vmem>>, vector<1x8x128xf32>
    %133 = vector.shape_cast %132 : vector<1x8x128xf32> to vector<8x128xf32>
    %134 = vector.shape_cast %130 : vector<8x128xf32> to vector<1x8x128xf32>
    tpu.vector_store %arg4[%131, %c0_42, %c0_43], %134 {strides = array<i32>} : memref<8x8x128xf32, #tpu.memory_space<vmem>>, vector<1x8x128xf32>,
    %c5_i32 = arith.constant 5 : i32
    %135 = arith.index_cast %c5_i32 : i32 to index
    %c0_44 = arith.constant 0 : index
    %c0_45 = arith.constant 0 : index
    %136 = vector.load %arg2[%135, %c0_44, %c0_45] : memref<8x8x512xf32, #tpu.memory_space<vmem>>, vector<1x8x512xf32>
    %137 = vector.shape_cast %136 : vector<1x8x512xf32> to vector<8x512xf32>
    %c0_46 = arith.constant 0 : index
    %c0_47 = arith.constant 0 : index
    %138 = vector.load %arg3[%c0_46, %c0_47] : memref<128x512xf32, #tpu.memory_space<vmem>>, vector<128x512xf32>
    %cst_48 = arith.constant dense<0.000000e+00> : vector<8x512xf32>
    %139 = tpu.matmul %130, %138, %cst_48 {dimension_numbers = #tpu.dot_dimension_numbers<[1], [0], [0], [1], [0, 0, 1, 1], [], []>} : vector<8x128xf32>, vector<128x512xf32>, vector<8x512xf32> -> vector<8x512xf32>
    %140 = arith.addf %137, %139 : vector<8x512xf32>
    %141 = vector.extract_strided_slice %140 {offsets = [0, 0], sizes = [8, 384], strides = [1, 1]} : vector<8x512xf32> to vector<8x384xf32>
    %142 = arith.negf %141 : vector<8x384xf32>
    %143 = math.exp %142 : vector<8x384xf32>
    %cst_49 = arith.constant 1.000000e+00 : f32
    %144 = vector.broadcast %cst_49 : f32 to vector<8x384xf32>
    %145 = arith.addf %144, %143 : vector<8x384xf32>
    %146 = arith.divf %144, %145 : vector<8x384xf32>
    %147 = vector.extract_strided_slice %140 {offsets = [0, 384], sizes = [8, 128], strides = [1, 1]} : vector<8x512xf32> to vector<8x128xf32>
    %148 = math.tanh %147 : vector<8x128xf32>
    %149 = vector.extract_strided_slice %146 {offsets = [0, 0], sizes = [8, 128], strides = [1, 1]} : vector<8x384xf32> to vector<8x128xf32>
    %150 = vector.extract_strided_slice %146 {offsets = [0, 128], sizes = [8, 128], strides = [1, 1]} : vector<8x384xf32> to vector<8x128xf32>
    %151 = vector.extract_strided_slice %146 {offsets = [0, 256], sizes = [8, 128], strides = [1, 1]} : vector<8x384xf32> to vector<8x128xf32>
    %152 = arith.mulf %150, %128 : vector<8x128xf32>
    %153 = arith.mulf %149, %148 : vector<8x128xf32>
    %154 = arith.addf %152, %153 : vector<8x128xf32>
    %155 = math.tanh %154 : vector<8x128xf32>
    %156 = arith.mulf %151, %155 : vector<8x128xf32>
    %157 = arith.index_cast %c5_i32 : i32 to index
    %c0_50 = arith.constant 0 : index
    %c0_51 = arith.constant 0 : index
    %158 = vector.load %arg4[%157, %c0_50, %c0_51] : memref<8x8x128xf32, #tpu.memory_space<vmem>>, vector<1x8x128xf32>
    %159 = vector.shape_cast %158 : vector<1x8x128xf32> to vector<8x128xf32>
    %160 = vector.shape_cast %156 : vector<8x128xf32> to vector<1x8x128xf32>
    tpu.vector_store %arg4[%157, %c0_50, %c0_51], %160 {strides = array<i32>} : memref<8x8x128xf32, #tpu.memory_space<vmem>>, vector<1x8x128xf32>,
    %c6_i32 = arith.constant 6 : i32
    %161 = arith.index_cast %c6_i32 : i32 to index
    %c0_52 = arith.constant 0 : index
    %c0_53 = arith.constant 0 : index
    %162 = vector.load %arg2[%161, %c0_52, %c0_53] : memref<8x8x512xf32, #tpu.memory_space<vmem>>, vector<1x8x512xf32>
    %163 = vector.shape_cast %162 : vector<1x8x512xf32> to vector<8x512xf32>
    %c0_54 = arith.constant 0 : index
    %c0_55 = arith.constant 0 : index
    %164 = vector.load %arg3[%c0_54, %c0_55] : memref<128x512xf32, #tpu.memory_space<vmem>>, vector<128x512xf32>
    %cst_56 = arith.constant dense<0.000000e+00> : vector<8x512xf32>
    %165 = tpu.matmul %156, %164, %cst_56 {dimension_numbers = #tpu.dot_dimension_numbers<[1], [0], [0], [1], [0, 0, 1, 1], [], []>} : vector<8x128xf32>, vector<128x512xf32>, vector<8x512xf32> -> vector<8x512xf32>
    %166 = arith.addf %163, %165 : vector<8x512xf32>
    %167 = vector.extract_strided_slice %166 {offsets = [0, 0], sizes = [8, 384], strides = [1, 1]} : vector<8x512xf32> to vector<8x384xf32>
    %168 = arith.negf %167 : vector<8x384xf32>
    %169 = math.exp %168 : vector<8x384xf32>
    %cst_57 = arith.constant 1.000000e+00 : f32
    %170 = vector.broadcast %cst_57 : f32 to vector<8x384xf32>
    %171 = arith.addf %170, %169 : vector<8x384xf32>
    %172 = arith.divf %170, %171 : vector<8x384xf32>
    %173 = vector.extract_strided_slice %166 {offsets = [0, 384], sizes = [8, 128], strides = [1, 1]} : vector<8x512xf32> to vector<8x128xf32>
    %174 = math.tanh %173 : vector<8x128xf32>
    %175 = vector.extract_strided_slice %172 {offsets = [0, 0], sizes = [8, 128], strides = [1, 1]} : vector<8x384xf32> to vector<8x128xf32>
    %176 = vector.extract_strided_slice %172 {offsets = [0, 128], sizes = [8, 128], strides = [1, 1]} : vector<8x384xf32> to vector<8x128xf32>
    %177 = vector.extract_strided_slice %172 {offsets = [0, 256], sizes = [8, 128], strides = [1, 1]} : vector<8x384xf32> to vector<8x128xf32>
    %178 = arith.mulf %176, %154 : vector<8x128xf32>
    %179 = arith.mulf %175, %174 : vector<8x128xf32>
    %180 = arith.addf %178, %179 : vector<8x128xf32>
    %181 = math.tanh %180 : vector<8x128xf32>
    %182 = arith.mulf %177, %181 : vector<8x128xf32>
    %183 = arith.index_cast %c6_i32 : i32 to index
    %c0_58 = arith.constant 0 : index
    %c0_59 = arith.constant 0 : index
    %184 = vector.load %arg4[%183, %c0_58, %c0_59] : memref<8x8x128xf32, #tpu.memory_space<vmem>>, vector<1x8x128xf32>
    %185 = vector.shape_cast %184 : vector<1x8x128xf32> to vector<8x128xf32>
    %186 = vector.shape_cast %182 : vector<8x128xf32> to vector<1x8x128xf32>
    tpu.vector_store %arg4[%183, %c0_58, %c0_59], %186 {strides = array<i32>} : memref<8x8x128xf32, #tpu.memory_space<vmem>>, vector<1x8x128xf32>,
    %c7_i32 = arith.constant 7 : i32
    %187 = arith.index_cast %c7_i32 : i32 to index
    %c0_60 = arith.constant 0 : index
    %c0_61 = arith.constant 0 : index
    %188 = vector.load %arg2[%187, %c0_60, %c0_61] : memref<8x8x512xf32, #tpu.memory_space<vmem>>, vector<1x8x512xf32>
    %189 = vector.shape_cast %188 : vector<1x8x512xf32> to vector<8x512xf32>
    %c0_62 = arith.constant 0 : index
    %c0_63 = arith.constant 0 : index
    %190 = vector.load %arg3[%c0_62, %c0_63] : memref<128x512xf32, #tpu.memory_space<vmem>>, vector<128x512xf32>
    %cst_64 = arith.constant dense<0.000000e+00> : vector<8x512xf32>
    %191 = tpu.matmul %182, %190, %cst_64 {dimension_numbers = #tpu.dot_dimension_numbers<[1], [0], [0], [1], [0, 0, 1, 1], [], []>} : vector<8x128xf32>, vector<128x512xf32>, vector<8x512xf32> -> vector<8x512xf32>
    %192 = arith.addf %189, %191 : vector<8x512xf32>
    %193 = vector.extract_strided_slice %192 {offsets = [0, 0], sizes = [8, 384], strides = [1, 1]} : vector<8x512xf32> to vector<8x384xf32>
    %194 = arith.negf %193 : vector<8x384xf32>
    %195 = math.exp %194 : vector<8x384xf32>
    %cst_65 = arith.constant 1.000000e+00 : f32
    %196 = vector.broadcast %cst_65 : f32 to vector<8x384xf32>
    %197 = arith.addf %196, %195 : vector<8x384xf32>
    %198 = arith.divf %196, %197 : vector<8x384xf32>
    %199 = vector.extract_strided_slice %192 {offsets = [0, 384], sizes = [8, 128], strides = [1, 1]} : vector<8x512xf32> to vector<8x128xf32>
    %200 = math.tanh %199 : vector<8x128xf32>
    %201 = vector.extract_strided_slice %198 {offsets = [0, 0], sizes = [8, 128], strides = [1, 1]} : vector<8x384xf32> to vector<8x128xf32>
    %202 = vector.extract_strided_slice %198 {offsets = [0, 128], sizes = [8, 128], strides = [1, 1]} : vector<8x384xf32> to vector<8x128xf32>
    %203 = vector.extract_strided_slice %198 {offsets = [0, 256], sizes = [8, 128], strides = [1, 1]} : vector<8x384xf32> to vector<8x128xf32>
    %204 = arith.mulf %202, %180 : vector<8x128xf32>
    %205 = arith.mulf %201, %200 : vector<8x128xf32>
    %206 = arith.addf %204, %205 : vector<8x128xf32>
    %207 = math.tanh %206 : vector<8x128xf32>
    %208 = arith.mulf %203, %207 : vector<8x128xf32>
    %209 = arith.index_cast %c7_i32 : i32 to index
    %c0_66 = arith.constant 0 : index
    %c0_67 = arith.constant 0 : index
    %210 = vector.load %arg4[%209, %c0_66, %c0_67] : memref<8x8x128xf32, #tpu.memory_space<vmem>>, vector<1x8x128xf32>
    %211 = vector.shape_cast %210 : vector<1x8x128xf32> to vector<8x128xf32>
    %212 = vector.shape_cast %208 : vector<8x128xf32> to vector<1x8x128xf32>
    tpu.vector_store %arg4[%209, %c0_66, %c0_67], %212 {strides = array<i32>} : memref<8x8x128xf32, #tpu.memory_space<vmem>>, vector<1x8x128xf32>,
    %c8_i32 = arith.constant 8 : i32
    %c0_68 = arith.constant 0 : index
    %c0_69 = arith.constant 0 : index
    %213 = vector.load %arg6[%c0_68, %c0_69] : memref<8x128xf32, #tpu.memory_space<vmem>>, vector<8x128xf32>
    tpu.vector_store %arg6[%c0_68, %c0_69], %206 {strides = array<i32>} : memref<8x128xf32, #tpu.memory_space<vmem>>, vector<8x128xf32>,
    %c0_70 = arith.constant 0 : index
    %c0_71 = arith.constant 0 : index
    %214 = vector.load %arg7[%c0_70, %c0_71] : memref<8x128xf32, #tpu.memory_space<vmem>>, vector<8x128xf32>
    tpu.vector_store %arg7[%c0_70, %c0_71], %208 {strides = array<i32>} : memref<8x128xf32, #tpu.memory_space<vmem>>, vector<8x128xf32>,
    %c0_i32_72 = arith.constant 0 : i32
    %215 = arith.cmpi eq, %arg1, %c0_i32_72 : i32
    %216 = arith.extui %215 : i1 to i32
    %c0_i32_73 = arith.constant 0 : i32
    %217 = arith.cmpi ne, %216, %c0_i32_73 : i32
    scf.if %217 {
      %c0_74 = arith.constant 0 : index
      %c0_75 = arith.constant 0 : index
      %218 = vector.load %arg5[%c0_74, %c0_75] : memref<8x128xf32, #tpu.memory_space<vmem>>, vector<8x128xf32>
      tpu.vector_store %arg5[%c0_74, %c0_75], %206 {strides = array<i32>} : memref<8x128xf32, #tpu.memory_space<vmem>>, vector<8x128xf32>,
    } else {
    }
    return
  }
  func.func @transform_0(%arg0: i32, %arg1: i32) -> (i32, i32, i32) {
    %c0_i32 = arith.constant 0 : i32
    %c0_i32_0 = arith.constant 0 : i32
    return %arg1, %arg0, %c0_i32 : i32, i32, i32
  }
  func.func @transform_1(%arg0: i32, %arg1: i32) -> (i32, i32) {
    %c0_i32 = arith.constant 0 : i32
    %c0_i32_0 = arith.constant 0 : i32
    %c0_i32_1 = arith.constant 0 : i32
    return %c0_i32, %c0_i32_0 : i32, i32
  }
  func.func @transform_2(%arg0: i32, %arg1: i32) -> (i32, i32, i32) {
    %c0_i32 = arith.constant 0 : i32
    %c0_i32_0 = arith.constant 0 : i32
    return %arg1, %arg0, %c0_i32 : i32, i32, i32
  }
  func.func @transform_3(%arg0: i32, %arg1: i32) -> (i32, i32) {
    %c0_i32 = arith.constant 0 : i32
    %c0_i32_0 = arith.constant 0 : i32
    return %arg0, %c0_i32 : i32, i32
  }
}

module attributes {stable_mosaic.version = 11 : i64} {
  func.func @_lstm_recurrence_kernel(%arg0: i32, %arg1: i32, %arg2: memref<8x8x512xf32, #tpu.memory_space<vmem>>, %arg3: memref<128x512xf32, #tpu.memory_space<vmem>>, %arg4: memref<8x8x128xf32, #tpu.memory_space<vmem>>, %arg5: memref<8x128xf32, #tpu.memory_space<vmem>>, %arg6: memref<8x128xf32, #tpu.memory_space<vmem>>, %arg7: memref<8x128xf32, #tpu.memory_space<vmem>>) attributes {dimension_semantics = [#tpu.dimension_semantics<parallel>, #tpu.dimension_semantics<arbitrary>], iteration_bounds = array<i64: 1, 1>, scalar_prefetch = 0 : i64, scratch_operands = 2 : i64, tpu.core_type = #tpu.core_type<tc>, window_params = [{transform_indices = @transform_0, window_bounds = array<i64: 8, 8, 512>}, {pipeline_mode = #tpu.pipeline_mode<synchronous>, transform_indices = @transform_1, window_bounds = array<i64: 128, 512>}, {transform_indices = @transform_2, window_bounds = array<i64: 8, 8, 128>}, {transform_indices = @transform_3, window_bounds = array<i64: 8, 128>}]} {
    %c0_i32 = arith.constant 0 : i32
    %0 = arith.cmpi eq, %arg1, %c0_i32 : i32
    %1 = arith.extui %0 : i1 to i32
    %c0_i32_0 = arith.constant 0 : i32
    %2 = arith.cmpi ne, %1, %c0_i32_0 : i32
    scf.if %2 {
      %cst_74 = arith.constant 0.000000e+00 : f32
      %218 = vector.broadcast %cst_74 : f32 to vector<8x128xf32>
      %c0_75 = arith.constant 0 : index
      %c0_76 = arith.constant 0 : index
      %219 = vector.load %arg6[%c0_75, %c0_76] : memref<8x128xf32, #tpu.memory_space<vmem>>, vector<8x128xf32>
      tpu.vector_store %arg6[%c0_75, %c0_76], %218 {strides = array<i32>} : memref<8x128xf32, #tpu.memory_space<vmem>>, vector<8x128xf32>,
      %cst_77 = arith.constant 0.000000e+00 : f32
      %220 = vector.broadcast %cst_77 : f32 to vector<8x128xf32>
      %c0_78 = arith.constant 0 : index
      %c0_79 = arith.constant 0 : index
      %221 = vector.load %arg7[%c0_78, %c0_79] : memref<8x128xf32, #tpu.memory_space<vmem>>, vector<8x128xf32>
      tpu.vector_store %arg7[%c0_78, %c0_79], %220 {strides = array<i32>} : memref<8x128xf32, #tpu.memory_space<vmem>>, vector<8x128xf32>,
    } else {
    }
    %c0 = arith.constant 0 : index
    %c0_1 = arith.constant 0 : index
    %3 = vector.load %arg6[%c0, %c0_1] : memref<8x128xf32, #tpu.memory_space<vmem>>, vector<8x128xf32>
    %c0_2 = arith.constant 0 : index
    %c0_3 = arith.constant 0 : index
    %4 = vector.load %arg7[%c0_2, %c0_3] : memref<8x128xf32, #tpu.memory_space<vmem>>, vector<8x128xf32>
    %c0_i32_4 = arith.constant 0 : i32
    %5 = arith.index_cast %c0_i32_4 : i32 to index
    %c0_5 = arith.constant 0 : index
    %c0_6 = arith.constant 0 : index
    %6 = vector.load %arg2[%5, %c0_5, %c0_6] : memref<8x8x512xf32, #tpu.memory_space<vmem>>, vector<1x8x512xf32>
    %7 = vector.shape_cast %6 : vector<1x8x512xf32> to vector<8x512xf32>
    %c0_7 = arith.constant 0 : index
    %c0_8 = arith.constant 0 : index
    %8 = vector.load %arg3[%c0_7, %c0_8] : memref<128x512xf32, #tpu.memory_space<vmem>>, vector<128x512xf32>
    %cst = arith.constant dense<0.000000e+00> : vector<8x512xf32>
    %9 = tpu.matmul %4, %8, %cst {dimension_numbers = #tpu.dot_dimension_numbers<[1], [0], [0], [1], [0, 0, 1, 1], [], []>} : vector<8x128xf32>, vector<128x512xf32>, vector<8x512xf32> -> vector<8x512xf32>
    %10 = arith.addf %7, %9 : vector<8x512xf32>
    %11 = vector.extract_strided_slice %10 {offsets = [0, 0], sizes = [8, 384], strides = [1, 1]} : vector<8x512xf32> to vector<8x384xf32>
    %12 = arith.negf %11 : vector<8x384xf32>
    %13 = math.exp %12 : vector<8x384xf32>
    %cst_9 = arith.constant 1.000000e+00 : f32
    %14 = vector.broadcast %cst_9 : f32 to vector<8x384xf32>
    %15 = arith.addf %14, %13 : vector<8x384xf32>
    %16 = arith.divf %14, %15 : vector<8x384xf32>
    %17 = vector.extract_strided_slice %10 {offsets = [0, 384], sizes = [8, 128], strides = [1, 1]} : vector<8x512xf32> to vector<8x128xf32>
    %18 = math.tanh %17 : vector<8x128xf32>
    %19 = vector.extract_strided_slice %16 {offsets = [0, 0], sizes = [8, 128], strides = [1, 1]} : vector<8x384xf32> to vector<8x128xf32>
    %20 = vector.extract_strided_slice %16 {offsets = [0, 128], sizes = [8, 128], strides = [1, 1]} : vector<8x384xf32> to vector<8x128xf32>
    %21 = vector.extract_strided_slice %16 {offsets = [0, 256], sizes = [8, 128], strides = [1, 1]} : vector<8x384xf32> to vector<8x128xf32>
    %22 = arith.mulf %20, %3 : vector<8x128xf32>
    %23 = arith.mulf %19, %18 : vector<8x128xf32>
    %24 = arith.addf %22, %23 : vector<8x128xf32>
    %25 = math.tanh %24 : vector<8x128xf32>
    %26 = arith.mulf %21, %25 : vector<8x128xf32>
    %27 = arith.index_cast %c0_i32_4 : i32 to index
    %c0_10 = arith.constant 0 : index
    %c0_11 = arith.constant 0 : index
    %28 = vector.load %arg4[%27, %c0_10, %c0_11] : memref<8x8x128xf32, #tpu.memory_space<vmem>>, vector<1x8x128xf32>
    %29 = vector.shape_cast %28 : vector<1x8x128xf32> to vector<8x128xf32>
    %30 = vector.shape_cast %26 : vector<8x128xf32> to vector<1x8x128xf32>
    tpu.vector_store %arg4[%27, %c0_10, %c0_11], %30 {strides = array<i32>} : memref<8x8x128xf32, #tpu.memory_space<vmem>>, vector<1x8x128xf32>,
    %c1_i32 = arith.constant 1 : i32
    %31 = arith.index_cast %c1_i32 : i32 to index
    %c0_12 = arith.constant 0 : index
    %c0_13 = arith.constant 0 : index
    %32 = vector.load %arg2[%31, %c0_12, %c0_13] : memref<8x8x512xf32, #tpu.memory_space<vmem>>, vector<1x8x512xf32>
    %33 = vector.shape_cast %32 : vector<1x8x512xf32> to vector<8x512xf32>
    %c0_14 = arith.constant 0 : index
    %c0_15 = arith.constant 0 : index
    %34 = vector.load %arg3[%c0_14, %c0_15] : memref<128x512xf32, #tpu.memory_space<vmem>>, vector<128x512xf32>
    %cst_16 = arith.constant dense<0.000000e+00> : vector<8x512xf32>
    %35 = tpu.matmul %26, %34, %cst_16 {dimension_numbers = #tpu.dot_dimension_numbers<[1], [0], [0], [1], [0, 0, 1, 1], [], []>} : vector<8x128xf32>, vector<128x512xf32>, vector<8x512xf32> -> vector<8x512xf32>
    %36 = arith.addf %33, %35 : vector<8x512xf32>
    %37 = vector.extract_strided_slice %36 {offsets = [0, 0], sizes = [8, 384], strides = [1, 1]} : vector<8x512xf32> to vector<8x384xf32>
    %38 = arith.negf %37 : vector<8x384xf32>
    %39 = math.exp %38 : vector<8x384xf32>
    %cst_17 = arith.constant 1.000000e+00 : f32
    %40 = vector.broadcast %cst_17 : f32 to vector<8x384xf32>
    %41 = arith.addf %40, %39 : vector<8x384xf32>
    %42 = arith.divf %40, %41 : vector<8x384xf32>
    %43 = vector.extract_strided_slice %36 {offsets = [0, 384], sizes = [8, 128], strides = [1, 1]} : vector<8x512xf32> to vector<8x128xf32>
    %44 = math.tanh %43 : vector<8x128xf32>
    %45 = vector.extract_strided_slice %42 {offsets = [0, 0], sizes = [8, 128], strides = [1, 1]} : vector<8x384xf32> to vector<8x128xf32>
    %46 = vector.extract_strided_slice %42 {offsets = [0, 128], sizes = [8, 128], strides = [1, 1]} : vector<8x384xf32> to vector<8x128xf32>
    %47 = vector.extract_strided_slice %42 {offsets = [0, 256], sizes = [8, 128], strides = [1, 1]} : vector<8x384xf32> to vector<8x128xf32>
    %48 = arith.mulf %46, %24 : vector<8x128xf32>
    %49 = arith.mulf %45, %44 : vector<8x128xf32>
    %50 = arith.addf %48, %49 : vector<8x128xf32>
    %51 = math.tanh %50 : vector<8x128xf32>
    %52 = arith.mulf %47, %51 : vector<8x128xf32>
    %53 = arith.index_cast %c1_i32 : i32 to index
    %c0_18 = arith.constant 0 : index
    %c0_19 = arith.constant 0 : index
    %54 = vector.load %arg4[%53, %c0_18, %c0_19] : memref<8x8x128xf32, #tpu.memory_space<vmem>>, vector<1x8x128xf32>
    %55 = vector.shape_cast %54 : vector<1x8x128xf32> to vector<8x128xf32>
    %56 = vector.shape_cast %52 : vector<8x128xf32> to vector<1x8x128xf32>
    tpu.vector_store %arg4[%53, %c0_18, %c0_19], %56 {strides = array<i32>} : memref<8x8x128xf32, #tpu.memory_space<vmem>>, vector<1x8x128xf32>,
    %c2_i32 = arith.constant 2 : i32
    %57 = arith.index_cast %c2_i32 : i32 to index
    %c0_20 = arith.constant 0 : index
    %c0_21 = arith.constant 0 : index
    %58 = vector.load %arg2[%57, %c0_20, %c0_21] : memref<8x8x512xf32, #tpu.memory_space<vmem>>, vector<1x8x512xf32>
    %59 = vector.shape_cast %58 : vector<1x8x512xf32> to vector<8x512xf32>
    %c0_22 = arith.constant 0 : index
    %c0_23 = arith.constant 0 : index
    %60 = vector.load %arg3[%c0_22, %c0_23] : memref<128x512xf32, #tpu.memory_space<vmem>>, vector<128x512xf32>
    %cst_24 = arith.constant dense<0.000000e+00> : vector<8x512xf32>
    %61 = tpu.matmul %52, %60, %cst_24 {dimension_numbers = #tpu.dot_dimension_numbers<[1], [0], [0], [1], [0, 0, 1, 1], [], []>} : vector<8x128xf32>, vector<128x512xf32>, vector<8x512xf32> -> vector<8x512xf32>
    %62 = arith.addf %59, %61 : vector<8x512xf32>
    %63 = vector.extract_strided_slice %62 {offsets = [0, 0], sizes = [8, 384], strides = [1, 1]} : vector<8x512xf32> to vector<8x384xf32>
    %64 = arith.negf %63 : vector<8x384xf32>
    %65 = math.exp %64 : vector<8x384xf32>
    %cst_25 = arith.constant 1.000000e+00 : f32
    %66 = vector.broadcast %cst_25 : f32 to vector<8x384xf32>
    %67 = arith.addf %66, %65 : vector<8x384xf32>
    %68 = arith.divf %66, %67 : vector<8x384xf32>
    %69 = vector.extract_strided_slice %62 {offsets = [0, 384], sizes = [8, 128], strides = [1, 1]} : vector<8x512xf32> to vector<8x128xf32>
    %70 = math.tanh %69 : vector<8x128xf32>
    %71 = vector.extract_strided_slice %68 {offsets = [0, 0], sizes = [8, 128], strides = [1, 1]} : vector<8x384xf32> to vector<8x128xf32>
    %72 = vector.extract_strided_slice %68 {offsets = [0, 128], sizes = [8, 128], strides = [1, 1]} : vector<8x384xf32> to vector<8x128xf32>
    %73 = vector.extract_strided_slice %68 {offsets = [0, 256], sizes = [8, 128], strides = [1, 1]} : vector<8x384xf32> to vector<8x128xf32>
    %74 = arith.mulf %72, %50 : vector<8x128xf32>
    %75 = arith.mulf %71, %70 : vector<8x128xf32>
    %76 = arith.addf %74, %75 : vector<8x128xf32>
    %77 = math.tanh %76 : vector<8x128xf32>
    %78 = arith.mulf %73, %77 : vector<8x128xf32>
    %79 = arith.index_cast %c2_i32 : i32 to index
    %c0_26 = arith.constant 0 : index
    %c0_27 = arith.constant 0 : index
    %80 = vector.load %arg4[%79, %c0_26, %c0_27] : memref<8x8x128xf32, #tpu.memory_space<vmem>>, vector<1x8x128xf32>
    %81 = vector.shape_cast %80 : vector<1x8x128xf32> to vector<8x128xf32>
    %82 = vector.shape_cast %78 : vector<8x128xf32> to vector<1x8x128xf32>
    tpu.vector_store %arg4[%79, %c0_26, %c0_27], %82 {strides = array<i32>} : memref<8x8x128xf32, #tpu.memory_space<vmem>>, vector<1x8x128xf32>,
    %c3_i32 = arith.constant 3 : i32
    %83 = arith.index_cast %c3_i32 : i32 to index
    %c0_28 = arith.constant 0 : index
    %c0_29 = arith.constant 0 : index
    %84 = vector.load %arg2[%83, %c0_28, %c0_29] : memref<8x8x512xf32, #tpu.memory_space<vmem>>, vector<1x8x512xf32>
    %85 = vector.shape_cast %84 : vector<1x8x512xf32> to vector<8x512xf32>
    %c0_30 = arith.constant 0 : index
    %c0_31 = arith.constant 0 : index
    %86 = vector.load %arg3[%c0_30, %c0_31] : memref<128x512xf32, #tpu.memory_space<vmem>>, vector<128x512xf32>
    %cst_32 = arith.constant dense<0.000000e+00> : vector<8x512xf32>
    %87 = tpu.matmul %78, %86, %cst_32 {dimension_numbers = #tpu.dot_dimension_numbers<[1], [0], [0], [1], [0, 0, 1, 1], [], []>} : vector<8x128xf32>, vector<128x512xf32>, vector<8x512xf32> -> vector<8x512xf32>
    %88 = arith.addf %85, %87 : vector<8x512xf32>
    %89 = vector.extract_strided_slice %88 {offsets = [0, 0], sizes = [8, 384], strides = [1, 1]} : vector<8x512xf32> to vector<8x384xf32>
    %90 = arith.negf %89 : vector<8x384xf32>
    %91 = math.exp %90 : vector<8x384xf32>
    %cst_33 = arith.constant 1.000000e+00 : f32
    %92 = vector.broadcast %cst_33 : f32 to vector<8x384xf32>
    %93 = arith.addf %92, %91 : vector<8x384xf32>
    %94 = arith.divf %92, %93 : vector<8x384xf32>
    %95 = vector.extract_strided_slice %88 {offsets = [0, 384], sizes = [8, 128], strides = [1, 1]} : vector<8x512xf32> to vector<8x128xf32>
    %96 = math.tanh %95 : vector<8x128xf32>
    %97 = vector.extract_strided_slice %94 {offsets = [0, 0], sizes = [8, 128], strides = [1, 1]} : vector<8x384xf32> to vector<8x128xf32>
    %98 = vector.extract_strided_slice %94 {offsets = [0, 128], sizes = [8, 128], strides = [1, 1]} : vector<8x384xf32> to vector<8x128xf32>
    %99 = vector.extract_strided_slice %94 {offsets = [0, 256], sizes = [8, 128], strides = [1, 1]} : vector<8x384xf32> to vector<8x128xf32>
    %100 = arith.mulf %98, %76 : vector<8x128xf32>
    %101 = arith.mulf %97, %96 : vector<8x128xf32>
    %102 = arith.addf %100, %101 : vector<8x128xf32>
    %103 = math.tanh %102 : vector<8x128xf32>
    %104 = arith.mulf %99, %103 : vector<8x128xf32>
    %105 = arith.index_cast %c3_i32 : i32 to index
    %c0_34 = arith.constant 0 : index
    %c0_35 = arith.constant 0 : index
    %106 = vector.load %arg4[%105, %c0_34, %c0_35] : memref<8x8x128xf32, #tpu.memory_space<vmem>>, vector<1x8x128xf32>
    %107 = vector.shape_cast %106 : vector<1x8x128xf32> to vector<8x128xf32>
    %108 = vector.shape_cast %104 : vector<8x128xf32> to vector<1x8x128xf32>
    tpu.vector_store %arg4[%105, %c0_34, %c0_35], %108 {strides = array<i32>} : memref<8x8x128xf32, #tpu.memory_space<vmem>>, vector<1x8x128xf32>,
    %c4_i32 = arith.constant 4 : i32
    %109 = arith.index_cast %c4_i32 : i32 to index
    %c0_36 = arith.constant 0 : index
    %c0_37 = arith.constant 0 : index
    %110 = vector.load %arg2[%109, %c0_36, %c0_37] : memref<8x8x512xf32, #tpu.memory_space<vmem>>, vector<1x8x512xf32>
    %111 = vector.shape_cast %110 : vector<1x8x512xf32> to vector<8x512xf32>
    %c0_38 = arith.constant 0 : index
    %c0_39 = arith.constant 0 : index
    %112 = vector.load %arg3[%c0_38, %c0_39] : memref<128x512xf32, #tpu.memory_space<vmem>>, vector<128x512xf32>
    %cst_40 = arith.constant dense<0.000000e+00> : vector<8x512xf32>
    %113 = tpu.matmul %104, %112, %cst_40 {dimension_numbers = #tpu.dot_dimension_numbers<[1], [0], [0], [1], [0, 0, 1, 1], [], []>} : vector<8x128xf32>, vector<128x512xf32>, vector<8x512xf32> -> vector<8x512xf32>
    %114 = arith.addf %111, %113 : vector<8x512xf32>
    %115 = vector.extract_strided_slice %114 {offsets = [0, 0], sizes = [8, 384], strides = [1, 1]} : vector<8x512xf32> to vector<8x384xf32>
    %116 = arith.negf %115 : vector<8x384xf32>
    %117 = math.exp %116 : vector<8x384xf32>
    %cst_41 = arith.constant 1.000000e+00 : f32
    %118 = vector.broadcast %cst_41 : f32 to vector<8x384xf32>
    %119 = arith.addf %118, %117 : vector<8x384xf32>
    %120 = arith.divf %118, %119 : vector<8x384xf32>
    %121 = vector.extract_strided_slice %114 {offsets = [0, 384], sizes = [8, 128], strides = [1, 1]} : vector<8x512xf32> to vector<8x128xf32>
    %122 = math.tanh %121 : vector<8x128xf32>
    %123 = vector.extract_strided_slice %120 {offsets = [0, 0], sizes = [8, 128], strides = [1, 1]} : vector<8x384xf32> to vector<8x128xf32>
    %124 = vector.extract_strided_slice %120 {offsets = [0, 128], sizes = [8, 128], strides = [1, 1]} : vector<8x384xf32> to vector<8x128xf32>
    %125 = vector.extract_strided_slice %120 {offsets = [0, 256], sizes = [8, 128], strides = [1, 1]} : vector<8x384xf32> to vector<8x128xf32>
    %126 = arith.mulf %124, %102 : vector<8x128xf32>
    %127 = arith.mulf %123, %122 : vector<8x128xf32>
    %128 = arith.addf %126, %127 : vector<8x128xf32>
    %129 = math.tanh %128 : vector<8x128xf32>
    %130 = arith.mulf %125, %129 : vector<8x128xf32>
    %131 = arith.index_cast %c4_i32 : i32 to index
    %c0_42 = arith.constant 0 : index
    %c0_43 = arith.constant 0 : index
    %132 = vector.load %arg4[%131, %c0_42, %c0_43] : memref<8x8x128xf32, #tpu.memory_space<vmem>>, vector<1x8x128xf32>
    %133 = vector.shape_cast %132 : vector<1x8x128xf32> to vector<8x128xf32>
    %134 = vector.shape_cast %130 : vector<8x128xf32> to vector<1x8x128xf32>
    tpu.vector_store %arg4[%131, %c0_42, %c0_43], %134 {strides = array<i32>} : memref<8x8x128xf32, #tpu.memory_space<vmem>>, vector<1x8x128xf32>,
    %c5_i32 = arith.constant 5 : i32
    %135 = arith.index_cast %c5_i32 : i32 to index
    %c0_44 = arith.constant 0 : index
    %c0_45 = arith.constant 0 : index
    %136 = vector.load %arg2[%135, %c0_44, %c0_45] : memref<8x8x512xf32, #tpu.memory_space<vmem>>, vector<1x8x512xf32>
    %137 = vector.shape_cast %136 : vector<1x8x512xf32> to vector<8x512xf32>
    %c0_46 = arith.constant 0 : index
    %c0_47 = arith.constant 0 : index
    %138 = vector.load %arg3[%c0_46, %c0_47] : memref<128x512xf32, #tpu.memory_space<vmem>>, vector<128x512xf32>
    %cst_48 = arith.constant dense<0.000000e+00> : vector<8x512xf32>
    %139 = tpu.matmul %130, %138, %cst_48 {dimension_numbers = #tpu.dot_dimension_numbers<[1], [0], [0], [1], [0, 0, 1, 1], [], []>} : vector<8x128xf32>, vector<128x512xf32>, vector<8x512xf32> -> vector<8x512xf32>
    %140 = arith.addf %137, %139 : vector<8x512xf32>
    %141 = vector.extract_strided_slice %140 {offsets = [0, 0], sizes = [8, 384], strides = [1, 1]} : vector<8x512xf32> to vector<8x384xf32>
    %142 = arith.negf %141 : vector<8x384xf32>
    %143 = math.exp %142 : vector<8x384xf32>
    %cst_49 = arith.constant 1.000000e+00 : f32
    %144 = vector.broadcast %cst_49 : f32 to vector<8x384xf32>
    %145 = arith.addf %144, %143 : vector<8x384xf32>
    %146 = arith.divf %144, %145 : vector<8x384xf32>
    %147 = vector.extract_strided_slice %140 {offsets = [0, 384], sizes = [8, 128], strides = [1, 1]} : vector<8x512xf32> to vector<8x128xf32>
    %148 = math.tanh %147 : vector<8x128xf32>
    %149 = vector.extract_strided_slice %146 {offsets = [0, 0], sizes = [8, 128], strides = [1, 1]} : vector<8x384xf32> to vector<8x128xf32>
    %150 = vector.extract_strided_slice %146 {offsets = [0, 128], sizes = [8, 128], strides = [1, 1]} : vector<8x384xf32> to vector<8x128xf32>
    %151 = vector.extract_strided_slice %146 {offsets = [0, 256], sizes = [8, 128], strides = [1, 1]} : vector<8x384xf32> to vector<8x128xf32>
    %152 = arith.mulf %150, %128 : vector<8x128xf32>
    %153 = arith.mulf %149, %148 : vector<8x128xf32>
    %154 = arith.addf %152, %153 : vector<8x128xf32>
    %155 = math.tanh %154 : vector<8x128xf32>
    %156 = arith.mulf %151, %155 : vector<8x128xf32>
    %157 = arith.index_cast %c5_i32 : i32 to index
    %c0_50 = arith.constant 0 : index
    %c0_51 = arith.constant 0 : index
    %158 = vector.load %arg4[%157, %c0_50, %c0_51] : memref<8x8x128xf32, #tpu.memory_space<vmem>>, vector<1x8x128xf32>
    %159 = vector.shape_cast %158 : vector<1x8x128xf32> to vector<8x128xf32>
    %160 = vector.shape_cast %156 : vector<8x128xf32> to vector<1x8x128xf32>
    tpu.vector_store %arg4[%157, %c0_50, %c0_51], %160 {strides = array<i32>} : memref<8x8x128xf32, #tpu.memory_space<vmem>>, vector<1x8x128xf32>,
    %c6_i32 = arith.constant 6 : i32
    %161 = arith.index_cast %c6_i32 : i32 to index
    %c0_52 = arith.constant 0 : index
    %c0_53 = arith.constant 0 : index
    %162 = vector.load %arg2[%161, %c0_52, %c0_53] : memref<8x8x512xf32, #tpu.memory_space<vmem>>, vector<1x8x512xf32>
    %163 = vector.shape_cast %162 : vector<1x8x512xf32> to vector<8x512xf32>
    %c0_54 = arith.constant 0 : index
    %c0_55 = arith.constant 0 : index
    %164 = vector.load %arg3[%c0_54, %c0_55] : memref<128x512xf32, #tpu.memory_space<vmem>>, vector<128x512xf32>
    %cst_56 = arith.constant dense<0.000000e+00> : vector<8x512xf32>
    %165 = tpu.matmul %156, %164, %cst_56 {dimension_numbers = #tpu.dot_dimension_numbers<[1], [0], [0], [1], [0, 0, 1, 1], [], []>} : vector<8x128xf32>, vector<128x512xf32>, vector<8x512xf32> -> vector<8x512xf32>
    %166 = arith.addf %163, %165 : vector<8x512xf32>
    %167 = vector.extract_strided_slice %166 {offsets = [0, 0], sizes = [8, 384], strides = [1, 1]} : vector<8x512xf32> to vector<8x384xf32>
    %168 = arith.negf %167 : vector<8x384xf32>
    %169 = math.exp %168 : vector<8x384xf32>
    %cst_57 = arith.constant 1.000000e+00 : f32
    %170 = vector.broadcast %cst_57 : f32 to vector<8x384xf32>
    %171 = arith.addf %170, %169 : vector<8x384xf32>
    %172 = arith.divf %170, %171 : vector<8x384xf32>
    %173 = vector.extract_strided_slice %166 {offsets = [0, 384], sizes = [8, 128], strides = [1, 1]} : vector<8x512xf32> to vector<8x128xf32>
    %174 = math.tanh %173 : vector<8x128xf32>
    %175 = vector.extract_strided_slice %172 {offsets = [0, 0], sizes = [8, 128], strides = [1, 1]} : vector<8x384xf32> to vector<8x128xf32>
    %176 = vector.extract_strided_slice %172 {offsets = [0, 128], sizes = [8, 128], strides = [1, 1]} : vector<8x384xf32> to vector<8x128xf32>
    %177 = vector.extract_strided_slice %172 {offsets = [0, 256], sizes = [8, 128], strides = [1, 1]} : vector<8x384xf32> to vector<8x128xf32>
    %178 = arith.mulf %176, %154 : vector<8x128xf32>
    %179 = arith.mulf %175, %174 : vector<8x128xf32>
    %180 = arith.addf %178, %179 : vector<8x128xf32>
    %181 = math.tanh %180 : vector<8x128xf32>
    %182 = arith.mulf %177, %181 : vector<8x128xf32>
    %183 = arith.index_cast %c6_i32 : i32 to index
    %c0_58 = arith.constant 0 : index
    %c0_59 = arith.constant 0 : index
    %184 = vector.load %arg4[%183, %c0_58, %c0_59] : memref<8x8x128xf32, #tpu.memory_space<vmem>>, vector<1x8x128xf32>
    %185 = vector.shape_cast %184 : vector<1x8x128xf32> to vector<8x128xf32>
    %186 = vector.shape_cast %182 : vector<8x128xf32> to vector<1x8x128xf32>
    tpu.vector_store %arg4[%183, %c0_58, %c0_59], %186 {strides = array<i32>} : memref<8x8x128xf32, #tpu.memory_space<vmem>>, vector<1x8x128xf32>,
    %c7_i32 = arith.constant 7 : i32
    %187 = arith.index_cast %c7_i32 : i32 to index
    %c0_60 = arith.constant 0 : index
    %c0_61 = arith.constant 0 : index
    %188 = vector.load %arg2[%187, %c0_60, %c0_61] : memref<8x8x512xf32, #tpu.memory_space<vmem>>, vector<1x8x512xf32>
    %189 = vector.shape_cast %188 : vector<1x8x512xf32> to vector<8x512xf32>
    %c0_62 = arith.constant 0 : index
    %c0_63 = arith.constant 0 : index
    %190 = vector.load %arg3[%c0_62, %c0_63] : memref<128x512xf32, #tpu.memory_space<vmem>>, vector<128x512xf32>
    %cst_64 = arith.constant dense<0.000000e+00> : vector<8x512xf32>
    %191 = tpu.matmul %182, %190, %cst_64 {dimension_numbers = #tpu.dot_dimension_numbers<[1], [0], [0], [1], [0, 0, 1, 1], [], []>} : vector<8x128xf32>, vector<128x512xf32>, vector<8x512xf32> -> vector<8x512xf32>
    %192 = arith.addf %189, %191 : vector<8x512xf32>
    %193 = vector.extract_strided_slice %192 {offsets = [0, 0], sizes = [8, 384], strides = [1, 1]} : vector<8x512xf32> to vector<8x384xf32>
    %194 = arith.negf %193 : vector<8x384xf32>
    %195 = math.exp %194 : vector<8x384xf32>
    %cst_65 = arith.constant 1.000000e+00 : f32
    %196 = vector.broadcast %cst_65 : f32 to vector<8x384xf32>
    %197 = arith.addf %196, %195 : vector<8x384xf32>
    %198 = arith.divf %196, %197 : vector<8x384xf32>
    %199 = vector.extract_strided_slice %192 {offsets = [0, 384], sizes = [8, 128], strides = [1, 1]} : vector<8x512xf32> to vector<8x128xf32>
    %200 = math.tanh %199 : vector<8x128xf32>
    %201 = vector.extract_strided_slice %198 {offsets = [0, 0], sizes = [8, 128], strides = [1, 1]} : vector<8x384xf32> to vector<8x128xf32>
    %202 = vector.extract_strided_slice %198 {offsets = [0, 128], sizes = [8, 128], strides = [1, 1]} : vector<8x384xf32> to vector<8x128xf32>
    %203 = vector.extract_strided_slice %198 {offsets = [0, 256], sizes = [8, 128], strides = [1, 1]} : vector<8x384xf32> to vector<8x128xf32>
    %204 = arith.mulf %202, %180 : vector<8x128xf32>
    %205 = arith.mulf %201, %200 : vector<8x128xf32>
    %206 = arith.addf %204, %205 : vector<8x128xf32>
    %207 = math.tanh %206 : vector<8x128xf32>
    %208 = arith.mulf %203, %207 : vector<8x128xf32>
    %209 = arith.index_cast %c7_i32 : i32 to index
    %c0_66 = arith.constant 0 : index
    %c0_67 = arith.constant 0 : index
    %210 = vector.load %arg4[%209, %c0_66, %c0_67] : memref<8x8x128xf32, #tpu.memory_space<vmem>>, vector<1x8x128xf32>
    %211 = vector.shape_cast %210 : vector<1x8x128xf32> to vector<8x128xf32>
    %212 = vector.shape_cast %208 : vector<8x128xf32> to vector<1x8x128xf32>
    tpu.vector_store %arg4[%209, %c0_66, %c0_67], %212 {strides = array<i32>} : memref<8x8x128xf32, #tpu.memory_space<vmem>>, vector<1x8x128xf32>,
    %c8_i32 = arith.constant 8 : i32
    %c0_68 = arith.constant 0 : index
    %c0_69 = arith.constant 0 : index
    %213 = vector.load %arg6[%c0_68, %c0_69] : memref<8x128xf32, #tpu.memory_space<vmem>>, vector<8x128xf32>
    tpu.vector_store %arg6[%c0_68, %c0_69], %206 {strides = array<i32>} : memref<8x128xf32, #tpu.memory_space<vmem>>, vector<8x128xf32>,
    %c0_70 = arith.constant 0 : index
    %c0_71 = arith.constant 0 : index
    %214 = vector.load %arg7[%c0_70, %c0_71] : memref<8x128xf32, #tpu.memory_space<vmem>>, vector<8x128xf32>
    tpu.vector_store %arg7[%c0_70, %c0_71], %208 {strides = array<i32>} : memref<8x128xf32, #tpu.memory_space<vmem>>, vector<8x128xf32>,
    %c0_i32_72 = arith.constant 0 : i32
    %215 = arith.cmpi eq, %arg1, %c0_i32_72 : i32
    %216 = arith.extui %215 : i1 to i32
    %c0_i32_73 = arith.constant 0 : i32
    %217 = arith.cmpi ne, %216, %c0_i32_73 : i32
    scf.if %217 {
      %c0_74 = arith.constant 0 : index
      %c0_75 = arith.constant 0 : index
      %218 = vector.load %arg5[%c0_74, %c0_75] : memref<8x128xf32, #tpu.memory_space<vmem>>, vector<8x128xf32>
      tpu.vector_store %arg5[%c0_74, %c0_75], %206 {strides = array<i32>} : memref<8x128xf32, #tpu.memory_space<vmem>>, vector<8x128xf32>,
    } else {
    }
    return
  }
  func.func @transform_0(%arg0: i32, %arg1: i32) -> (i32, i32, i32) {
    %c0_i32 = arith.constant 0 : i32
    %c0_i32_0 = arith.constant 0 : i32
    return %arg1, %arg0, %c0_i32 : i32, i32, i32
  }
  func.func @transform_1(%arg0: i32, %arg1: i32) -> (i32, i32) {
    %c0_i32 = arith.constant 0 : i32
    %c0_i32_0 = arith.constant 0 : i32
    %c0_i32_1 = arith.constant 0 : i32
    return %c0_i32, %c0_i32_0 : i32, i32
  }
  func.func @transform_2(%arg0: i32, %arg1: i32) -> (i32, i32, i32) {
    %c0_i32 = arith.constant 0 : i32
    %c0_i32_0 = arith.constant 0 : i32
    return %arg1, %arg0, %c0_i32 : i32, i32, i32
  }
  func.func @transform_3(%arg0: i32, %arg1: i32) -> (i32, i32) {
    %c0_i32 = arith.constant 0 : i32
    %c0_i32_0 = arith.constant 0 : i32
    return %arg0, %c0_i32 : i32, i32
  }
}

</mosaic_0001>

<llo_original>
// kernel: tpu_custom_call.1
$region0: #{tpu_custom_call.1}
  #allocation0 [shape = 'u32[]', space=smem, size = 0x4, offset = 0x4, fixed_abs, tag = 'smem constant byte address 0x4 - core index']
  #allocation1 [shape = 'u32[144,128]{1,0:T(1,128)}', space=vmem, size = 0x12000, scoped, tag = 'internal scratch']
  #allocation2 [shape = 'f32[8,128]{1,0:T(8,128)}', space=vmem, size = 0x1000, scoped, tag = 'scratch operand']
  #allocation3 [shape = 'f32[8,128]{1,0:T(8,128)}', space=vmem, size = 0x1000, scoped, tag = 'scratch operand']
  %s0 = inlined_call_operand.hbm [shape: f32[8,8,512], index: 0, kind: input, shape index: {}]
  %s1 = inlined_call_operand.hbm [shape: f32[128,512], index: 1, kind: input, shape index: {}]
  %s2 = inlined_call_operand.hbm [shape: f32[8,8,128], index: 2, kind: output, shape index: {0}]
  %s3 = inlined_call_operand.hbm [shape: f32[8,128], index: 3, kind: output, shape index: {1}]
  %4 = xla_tuple %s2, %s3
  %s5 = sld [smem:[#allocation0]]
  $region42: #{tpu_custom_call.1} parent=0
    _
  %s7 = ssub.s32 1, %s5
  %s8 = scalar_select 0, %s7, %s5
  $region1: #{tpu_custom_call.1} parent=0
    #allocation4 [shape = 'u8[131072]{0}', space=vmem, size = 0x20000, scoped, tag = 'input window, operand 0, single buffered']
    #allocation5 [shape = 's32[1]{0}', space=sflag, size = 0x4, scoped, tag = 'scoped memory for tpu_custom_call.1']
    #allocation6 [shape = 's32[1]{0}', space=sflag, size = 0x4, scoped, tag = 'scoped memory for tpu_custom_call.1']
    #allocation7 [shape = 'u8[262144]{0}', space=vmem, size = 0x40000, scoped, tag = 'input window, operand 1, single buffered']
    #allocation8 [shape = 's32[1]{0}', space=sflag, size = 0x4, scoped, tag = 'scoped memory for tpu_custom_call.1']
    #allocation9 [shape = 'u8[32768]{0}', space=vmem, size = 0x8000, scoped, tag = 'output window, operand 0, single buffered']
    #allocation10 [shape = 'u8[4096]{0}', space=vmem, size = 0x1000, scoped, tag = 'output window, operand 1, single buffered']
    #allocation11 [shape = 's32[1]{0}', space=sflag, size = 0x4, scoped, tag = 'scoped memory for tpu_custom_call.1']
    %9 = vsyncpa [#allocation5], 0
    %10 = vsyncpa [#allocation8], 0
    %11 = vsyncpa [#allocation6], 0
    %12 = vsyncpa [#allocation11], 0
    // Predicated region
    $region2: #{tpu_custom_call.1} parent=1 // pred_check
      _
    $region3: #{tpu_custom_call.1} parent=1 // pred_check_branch
      %14 = sbr.rel (0) target = $region5
    $region4: #{tpu_custom_call.1} parent=1 // pred_region
      %s16 = ssub.s32 4096, 4096
      %17 = vsyncadd [#allocation5], %s16
      %s18 = sshll.u32 [#allocation4], 4
      %s19 = int_to_ptr.vmem [resolvable:$true] %s18
      %24 = dma.hbm_to_vmem [thread:$0]  %s0, 4096, %s19, [#allocation5], 512, 512, 32
    $region5: #{tpu_custom_call.1} parent=1 // pred_fallthru
      _
    // Predicated region
    $region6: #{tpu_custom_call.1} parent=1 // pred_check
      _
    $region7: #{tpu_custom_call.1} parent=1 // pred_check_branch
      %26 = sbr.rel (0) target = $region9
    $region8: #{tpu_custom_call.1} parent=1 // pred_region
      %s28 = ssub.s32 8192, 8192
      %29 = vsyncadd [#allocation8], %s28
      %s30 = sshll.u32 [#allocation7], 4
      %s31 = int_to_ptr.vmem [resolvable:$true] %s30
      %36 = dma.hbm_to_vmem [thread:$0]  %s1, 8192, %s31, [#allocation8], 512, 512, 32
    $region9: #{tpu_custom_call.1} parent=1 // pred_fallthru
      _
    // Predicated region
    $region10: #{tpu_custom_call.1} parent=1 // pred_check
      _
    $region11: #{tpu_custom_call.1} parent=1 // pred_check_branch
      %38 = sbr.rel (0) target = $region13
    $region12: #{tpu_custom_call.1} parent=1 // pred_region
      %39 = dma.done [#allocation5], 4096
    $region13: #{tpu_custom_call.1} parent=1 // pred_fallthru
      _
    // Predicated region
    $region14: #{tpu_custom_call.1} parent=1 // pred_check
      _
    $region15: #{tpu_custom_call.1} parent=1 // pred_check_branch
      %41 = sbr.rel (0) target = $region17
    $region16: #{tpu_custom_call.1} parent=1 // pred_region
      %42 = dma.done [#allocation8], 8192
    $region17: #{tpu_custom_call.1} parent=1 // pred_fallthru
      _
    %p43 = scmp.eq.s32.totalorder 0, 0
    // Predicated region
    $region18: #{tpu_custom_call.1} parent=1 // pred_check
      %p44 = pneg %p43
    $region19: #{tpu_custom_call.1} parent=1 // pred_check_branch
      %46 = sbr.rel (%p44) target = $region21
    $region20: #{tpu_custom_call.1} parent=1 // pred_region
      %47 = vst [vmem:[#allocation2] sm:$0xff] 0.0
      %48 = vst [vmem:[#allocation3] sm:$0xff] 0.0
    $region21: #{tpu_custom_call.1} parent=1 // pred_fallthru
      _
    %v49 = vld [vmem:[#allocation2] sm:$0xff]
    %v50 = vld [vmem:[#allocation3] sm:$0xff]
    %v51 = vld [vmem:[#allocation4] sm:$0xff]
    %v52 = vld [vmem:[#allocation4 + $0x8] sm:$0xff]
    %v53 = vld [vmem:[#allocation4 + $0x10] sm:$0xff]
    %v54 = vld [vmem:[#allocation4 + $0x18] sm:$0xff]
    %v55 = vld [vmem:[#allocation7] sm:$0xff]
    %v56 = vld [vmem:[#allocation7 + $0x8] sm:$0xff]
    %v57 = vld [vmem:[#allocation7 + $0x10] sm:$0xff]
    %v58 = vld [vmem:[#allocation7 + $0x18] sm:$0xff]
    %v59 = vld [vmem:[#allocation7 + $0x20] sm:$0xff]
    %v60 = vld [vmem:[#allocation7 + $0x28] sm:$0xff]
    %v61 = vld [vmem:[#allocation7 + $0x30] sm:$0xff]
    %v62 = vld [vmem:[#allocation7 + $0x38] sm:$0xff]
    %v63 = vld [vmem:[#allocation7 + $0x40] sm:$0xff]
    %v64 = vld [vmem:[#allocation7 + $0x48] sm:$0xff]
    %v65 = vld [vmem:[#allocation7 + $0x50] sm:$0xff]
    %v66 = vld [vmem:[#allocation7 + $0x58] sm:$0xff]
    %v67 = vld [vmem:[#allocation7 + $0x60] sm:$0xff]
    %v68 = vld [vmem:[#allocation7 + $0x68] sm:$0xff]
    %v69 = vld [vmem:[#allocation7 + $0x70] sm:$0xff]
    %v70 = vld [vmem:[#allocation7 + $0x78] sm:$0xff]
    %v71 = vld [vmem:[#allocation7 + $0x80] sm:$0xff]
    %v72 = vld [vmem:[#allocation7 + $0x88] sm:$0xff]
    %v73 = vld [vmem:[#allocation7 + $0x90] sm:$0xff]
    %v74 = vld [vmem:[#allocation7 + $0x98] sm:$0xff]
    %v75 = vld [vmem:[#allocation7 + $0xa0] sm:$0xff]
    %v76 = vld [vmem:[#allocation7 + $0xa8] sm:$0xff]
    %v77 = vld [vmem:[#allocation7 + $0xb0] sm:$0xff]
    %v78 = vld [vmem:[#allocation7 + $0xb8] sm:$0xff]
    %v79 = vld [vmem:[#allocation7 + $0xc0] sm:$0xff]
    %v80 = vld [vmem:[#allocation7 + $0xc8] sm:$0xff]
    %v81 = vld [vmem:[#allocation7 + $0xd0] sm:$0xff]
    %v82 = vld [vmem:[#allocation7 + $0xd8] sm:$0xff]
    %v83 = vld [vmem:[#allocation7 + $0xe0] sm:$0xff]
    %v84 = vld [vmem:[#allocation7 + $0xe8] sm:$0xff]
    %v85 = vld [vmem:[#allocation7 + $0xf0] sm:$0xff]
    %v86 = vld [vmem:[#allocation7 + $0xf8] sm:$0xff]
    %v87 = vld [vmem:[#allocation7 + $0x100] sm:$0xff]
    %v88 = vld [vmem:[#allocation7 + $0x108] sm:$0xff]
    %v89 = vld [vmem:[#allocation7 + $0x110] sm:$0xff]
    %v90 = vld [vmem:[#allocation7 + $0x118] sm:$0xff]
    %v91 = vld [vmem:[#allocation7 + $0x120] sm:$0xff]
    %v92 = vld [vmem:[#allocation7 + $0x128] sm:$0xff]
    %v93 = vld [vmem:[#allocation7 + $0x130] sm:$0xff]
    %v94 = vld [vmem:[#allocation7 + $0x138] sm:$0xff]
    %v95 = vld [vmem:[#allocation7 + $0x140] sm:$0xff]
    %v96 = vld [vmem:[#allocation7 + $0x148] sm:$0xff]
    %v97 = vld [vmem:[#allocation7 + $0x150] sm:$0xff]
    %v98 = vld [vmem:[#allocation7 + $0x158] sm:$0xff]
    %v99 = vld [vmem:[#allocation7 + $0x160] sm:$0xff]
    %v100 = vld [vmem:[#allocation7 + $0x168] sm:$0xff]
    %v101 = vld [vmem:[#allocation7 + $0x170] sm:$0xff]
    %v102 = vld [vmem:[#allocation7 + $0x178] sm:$0xff]
    %v103 = vld [vmem:[#allocation7 + $0x180] sm:$0xff]
    %v104 = vld [vmem:[#allocation7 + $0x188] sm:$0xff]
    %v105 = vld [vmem:[#allocation7 + $0x190] sm:$0xff]
    %v106 = vld [vmem:[#allocation7 + $0x198] sm:$0xff]
    %v107 = vld [vmem:[#allocation7 + $0x1a0] sm:$0xff]
    %v108 = vld [vmem:[#allocation7 + $0x1a8] sm:$0xff]
    %v109 = vld [vmem:[#allocation7 + $0x1b0] sm:$0xff]
    %v110 = vld [vmem:[#allocation7 + $0x1b8] sm:$0xff]
    %v111 = vld [vmem:[#allocation7 + $0x1c0] sm:$0xff]
    %v112 = vld [vmem:[#allocation7 + $0x1c8] sm:$0xff]
    %v113 = vld [vmem:[#allocation7 + $0x1d0] sm:$0xff]
    %v114 = vld [vmem:[#allocation7 + $0x1d8] sm:$0xff]
    %v115 = vld [vmem:[#allocation7 + $0x1e0] sm:$0xff]
    %v116 = vld [vmem:[#allocation7 + $0x1e8] sm:$0xff]
    %v117 = vld [vmem:[#allocation7 + $0x1f0] sm:$0xff]
    %v118 = vld [vmem:[#allocation7 + $0x1f8] sm:$0xff]
    %119 = vmatprep.subr.mxu0 %v56
    %120 = vmatpush1.msra.mxu0 %v55
    %121 = vmatprep.subr.mxu0 %v60
    %122 = vmatpush1.msra.mxu0 %v59
    %123 = vmatprep.subr.mxu0 %v64
    %124 = vmatpush1.msra.mxu0 %v63
    %125 = vmatprep.subr.mxu0 %v68
    %126 = vmatpush1.msra.mxu0 %v67
    %127 = vmatprep.subr.mxu0 %v72
    %128 = vmatpush1.msra.mxu0 %v71
    %129 = vmatprep.subr.mxu0 %v76
    %130 = vmatpush1.msra.mxu0 %v75
    %131 = vmatprep.subr.mxu0 %v80
    %132 = vmatpush1.msra.mxu0 %v79
    %133 = vmatprep.subr.mxu0 %v84
    %134 = vmatpush1.msra.mxu0 %v83
    %135 = vmatprep.subr.mxu0 %v88
    %136 = vmatpush1.msra.mxu0 %v87
    %137 = vmatprep.subr.mxu0 %v92
    %138 = vmatpush1.msra.mxu0 %v91
    %139 = vmatprep.subr.mxu0 %v96
    %140 = vmatpush1.msra.mxu0 %v95
    %141 = vmatprep.subr.mxu0 %v100
    %142 = vmatpush1.msra.mxu0 %v99
    %143 = vmatprep.subr.mxu0 %v104
    %144 = vmatpush1.msra.mxu0 %v103
    %145 = vmatprep.subr.mxu0 %v108
    %146 = vmatpush1.msra.mxu0 %v107
    %147 = vmatprep.subr.mxu0 %v112
    %148 = vmatpush1.msra.mxu0 %v111
    %149 = vmatprep.subr.mxu0 %v116
    %150 = vmatpush1.msra.mxu0 %v115
    %151 = vmatprep.subr.mxu0 0.0
    %152 = vmatpush1.msra.mxu0 0.0
    %153 = vmatprep.subr.mxu0 0.0
    %154 = vmatpush1.msra.mxu0 0.0
    %155 = vmatprep.subr.mxu0 0.0
    %156 = vmatpush1.msra.mxu0 0.0
    %157 = vmatprep.subr.mxu0 0.0
    %158 = vmatpush1.msra.mxu0 0.0
    %159 = vmatprep.subr.mxu0 0.0
    %160 = vmatpush1.msra.mxu0 0.0
    %161 = vmatprep.subr.mxu0 0.0
    %162 = vmatpush1.msra.mxu0 0.0
    %163 = vmatprep.subr.mxu0 0.0
    %164 = vmatpush1.msra.mxu0 0.0
    %165 = vmatprep.subr.mxu0 0.0
    %166 = vmatpush1.msra.mxu0 0.0
    %167 = vmatprep.subr.mxu0 0.0
    %168 = vmatpush1.msra.mxu0 0.0
    %169 = vmatprep.subr.mxu0 0.0
    %170 = vmatpush1.msra.mxu0 0.0
    %171 = vmatprep.subr.mxu0 0.0
    %172 = vmatpush1.msra.mxu0 0.0
    %173 = vmatprep.subr.mxu0 0.0
    %174 = vmatpush1.msra.mxu0 0.0
    %175 = vmatprep.subr.mxu0 0.0
    %176 = vmatpush1.msra.mxu0 0.0
    %177 = vmatprep.subr.mxu0 0.0
    %178 = vmatpush1.msra.mxu0 0.0
    %179 = vmatprep.subr.mxu0 0.0
    %180 = vmatpush1.msra.mxu0 0.0
    %181 = vmatprep.subr.mxu0 0.0
    %182 = vmatpush1.msra.mxu0 0.0
    %183 = vmatprep.mubr.f32.mxu0 0.0
    %184 = vmatmul.mubr.f32.gmra.mrb[0].mxu0 %v50
    %v185 = vpop.f32.mrb[0].mxu0
    %v186 = vadd.f32 0.0, %v185
    %v187 = vpop.f32.mrb[0].mxu0
    %v188 = vadd.f32 0.0, %v187
    %189 = vdwg.mxu0
    %190 = vmatprep.subr.mxu0 %v58
    %191 = vmatpush1.msra.mxu0 %v57
    %192 = vmatprep.subr.mxu0 %v62
    %193 = vmatpush1.msra.mxu0 %v61
    %194 = vmatprep.subr.mxu0 %v66
    %195 = vmatpush1.msra.mxu0 %v65
    %196 = vmatprep.subr.mxu0 %v70
    %197 = vmatpush1.msra.mxu0 %v69
    %198 = vmatprep.subr.mxu0 %v74
    %199 = vmatpush1.msra.mxu0 %v73
    %200 = vmatprep.subr.mxu0 %v78
    %201 = vmatpush1.msra.mxu0 %v77
    %202 = vmatprep.subr.mxu0 %v82
    %203 = vmatpush1.msra.mxu0 %v81
    %204 = vmatprep.subr.mxu0 %v86
    %205 = vmatpush1.msra.mxu0 %v85
    %206 = vmatprep.subr.mxu0 %v90
    %207 = vmatpush1.msra.mxu0 %v89
    %208 = vmatprep.subr.mxu0 %v94
    %209 = vmatpush1.msra.mxu0 %v93
    %210 = vmatprep.subr.mxu0 %v98
    %211 = vmatpush1.msra.mxu0 %v97
    %212 = vmatprep.subr.mxu0 %v102
    %213 = vmatpush1.msra.mxu0 %v101
    %214 = vmatprep.subr.mxu0 %v106
    %215 = vmatpush1.msra.mxu0 %v105
    %216 = vmatprep.subr.mxu0 %v110
    %217 = vmatpush1.msra.mxu0 %v109
    %218 = vmatprep.subr.mxu0 %v114
    %219 = vmatpush1.msra.mxu0 %v113
    %220 = vmatprep.subr.mxu0 %v118
    %221 = vmatpush1.msra.mxu0 %v117
    %222 = vmatprep.subr.mxu0 0.0
    %223 = vmatpush1.msra.mxu0 0.0
    %224 = vmatprep.subr.mxu0 0.0
    %225 = vmatpush1.msra.mxu0 0.0
    %226 = vmatprep.subr.mxu0 0.0
    %227 = vmatpush1.msra.mxu0 0.0
    %228 = vmatprep.subr.mxu0 0.0
    %229 = vmatpush1.msra.mxu0 0.0
    %230 = vmatprep.subr.mxu0 0.0
    %231 = vmatpush1.msra.mxu0 0.0
    %232 = vmatprep.subr.mxu0 0.0
    %233 = vmatpush1.msra.mxu0 0.0
    %234 = vmatprep.subr.mxu0 0.0
    %235 = vmatpush1.msra.mxu0 0.0
    %236 = vmatprep.subr.mxu0 0.0
    %237 = vmatpush1.msra.mxu0 0.0
    %238 = vmatprep.subr.mxu0 0.0
    %239 = vmatpush1.msra.mxu0 0.0
    %240 = vmatprep.subr.mxu0 0.0
    %241 = vmatpush1.msra.mxu0 0.0
    %242 = vmatprep.subr.mxu0 0.0
    %243 = vmatpush1.msra.mxu0 0.0
    %244 = vmatprep.subr.mxu0 0.0
    %245 = vmatpush1.msra.mxu0 0.0
    %246 = vmatprep.subr.mxu0 0.0
    %247 = vmatpush1.msra.mxu0 0.0
    %248 = vmatprep.subr.mxu0 0.0
    %249 = vmatpush1.msra.mxu0 0.0
    %250 = vmatprep.subr.mxu0 0.0
    %251 = vmatpush1.msra.mxu0 0.0
    %252 = vmatprep.subr.mxu0 0.0
    %253 = vmatpush1.msra.mxu0 0.0
    %254 = vmatprep.mubr.f32.mxu0 0.0
    %255 = vmatmul.mubr.f32.gmra.mrb[0].mxu0 %v50
    %v256 = vpop.f32.mrb[0].mxu0
    %v257 = vadd.f32 0.0, %v256
    %v258 = vpop.f32.mrb[0].mxu0
    %v259 = vadd.f32 0.0, %v258
    %260 = vdwg.mxu0
    %v261 = vadd.f32 %v51, %v186
    %v262 = vadd.f32 %v52, %v188
    %v263 = vadd.f32 %v53, %v257
    %v264 = vadd.f32 %v54, %v259
    %v265 = vxor.u32 %v261, 2147483648
    %v266 = vxor.u32 %v262, 2147483648
    %v267 = vxor.u32 %v263, 2147483648
    %v268 = vmul.f32 %v265, 1.442695
    %v269 = vpow.pop %v268
    %v270 = vmul.f32 %v266, 1.442695
    %v271 = vpow.pop %v270
    %v272 = vmul.f32 %v267, 1.442695
    %v273 = vpow.pop %v272
    %v274 = vadd.f32 %v269, 1.0
    %v275 = vadd.f32 %v271, 1.0
    %v276 = vadd.f32 %v273, 1.0
    %v277 = vrcp.pop %v274
    %v278 = vmul.f32 1.0, %v277
    %v279 = vrcp.pop %v275
    %v280 = vmul.f32 1.0, %v279
    %v281 = vrcp.pop %v276
    %v282 = vmul.f32 1.0, %v281
    %v283 = vtanh.pop %v264
    %v284 = vmul.f32 %v280, %v49
    %v285 = vmul.f32 %v278, %v283
    %v286 = vadd.f32 %v284, %v285
    %v287 = vtanh.pop %v286
    %v288 = vmul.f32 %v282, %v287
    %289 = vst [vmem:[#allocation9] sm:$0xff] %v288
    %s290 = scalar_lea.vmem [#allocation4], 32
    %v291 = vld [vmem:[%s290] sm:$0xff]
    %v292 = vld [vmem:[%s290 + $0x8] sm:$0xff]
    %v293 = vld [vmem:[%s290 + $0x10] sm:$0xff]
    %v294 = vld [vmem:[%s290 + $0x18] sm:$0xff]
    %v295 = vld [vmem:[#allocation7] sm:$0xff]
    %v296 = vld [vmem:[#allocation7 + $0x8] sm:$0xff]
    %v297 = vld [vmem:[#allocation7 + $0x10] sm:$0xff]
    %v298 = vld [vmem:[#allocation7 + $0x18] sm:$0xff]
    %v299 = vld [vmem:[#allocation7 + $0x20] sm:$0xff]
    %v300 = vld [vmem:[#allocation7 + $0x28] sm:$0xff]
    %v301 = vld [vmem:[#allocation7 + $0x30] sm:$0xff]
    %v302 = vld [vmem:[#allocation7 + $0x38] sm:$0xff]
    %v303 = vld [vmem:[#allocation7 + $0x40] sm:$0xff]
    %v304 = vld [vmem:[#allocation7 + $0x48] sm:$0xff]
    %v305 = vld [vmem:[#allocation7 + $0x50] sm:$0xff]
    %v306 = vld [vmem:[#allocation7 + $0x58] sm:$0xff]
    %v307 = vld [vmem:[#allocation7 + $0x60] sm:$0xff]
    %v308 = vld [vmem:[#allocation7 + $0x68] sm:$0xff]
    %v309 = vld [vmem:[#allocation7 + $0x70] sm:$0xff]
    %v310 = vld [vmem:[#allocation7 + $0x78] sm:$0xff]
    %v311 = vld [vmem:[#allocation7 + $0x80] sm:$0xff]
    %v312 = vld [vmem:[#allocation7 + $0x88] sm:$0xff]
    %v313 = vld [vmem:[#allocation7 + $0x90] sm:$0xff]
    %v314 = vld [vmem:[#allocation7 + $0x98] sm:$0xff]
    %v315 = vld [vmem:[#allocation7 + $0xa0] sm:$0xff]
    %v316 = vld [vmem:[#allocation7 + $0xa8] sm:$0xff]
    %v317 = vld [vmem:[#allocation7 + $0xb0] sm:$0xff]
    %v318 = vld [vmem:[#allocation7 + $0xb8] sm:$0xff]
    %v319 = vld [vmem:[#allocation7 + $0xc0] sm:$0xff]
    %v320 = vld [vmem:[#allocation7 + $0xc8] sm:$0xff]
    %v321 = vld [vmem:[#allocation7 + $0xd0] sm:$0xff]
    %v322 = vld [vmem:[#allocation7 + $0xd8] sm:$0xff]
    %v323 = vld [vmem:[#allocation7 + $0xe0] sm:$0xff]
    %v324 = vld [vmem:[#allocation7 + $0xe8] sm:$0xff]
    %v325 = vld [vmem:[#allocation7 + $0xf0] sm:$0xff]
    %v326 = vld [vmem:[#allocation7 + $0xf8] sm:$0xff]
    %v327 = vld [vmem:[#allocation7 + $0x100] sm:$0xff]
    %v328 = vld [vmem:[#allocation7 + $0x108] sm:$0xff]
    %v329 = vld [vmem:[#allocation7 + $0x110] sm:$0xff]
    %v330 = vld [vmem:[#allocation7 + $0x118] sm:$0xff]
    %v331 = vld [vmem:[#allocation7 + $0x120] sm:$0xff]
    %v332 = vld [vmem:[#allocation7 + $0x128] sm:$0xff]
    %v333 = vld [vmem:[#allocation7 + $0x130] sm:$0xff]
    %v334 = vld [vmem:[#allocation7 + $0x138] sm:$0xff]
    %v335 = vld [vmem:[#allocation7 + $0x140] sm:$0xff]
    %v336 = vld [vmem:[#allocation7 + $0x148] sm:$0xff]
    %v337 = vld [vmem:[#allocation7 + $0x150] sm:$0xff]
    %v338 = vld [vmem:[#allocation7 + $0x158] sm:$0xff]
    %v339 = vld [vmem:[#allocation7 + $0x160] sm:$0xff]
    %v340 = vld [vmem:[#allocation7 + $0x168] sm:$0xff]
    %v341 = vld [vmem:[#allocation7 + $0x170] sm:$0xff]
    %v342 = vld [vmem:[#allocation7 + $0x178] sm:$0xff]
    %v343 = vld [vmem:[#allocation7 + $0x180] sm:$0xff]
    %v344 = vld [vmem:[#allocation7 + $0x188] sm:$0xff]
    %v345 = vld [vmem:[#allocation7 + $0x190] sm:$0xff]
    %v346 = vld [vmem:[#allocation7 + $0x198] sm:$0xff]
    %v347 = vld [vmem:[#allocation7 + $0x1a0] sm:$0xff]
    %v348 = vld [vmem:[#allocation7 + $0x1a8] sm:$0xff]
    %v349 = vld [vmem:[#allocation7 + $0x1b0] sm:$0xff]
    %v350 = vld [vmem:[#allocation7 + $0x1b8] sm:$0xff]
    %v351 = vld [vmem:[#allocation7 + $0x1c0] sm:$0xff]
    %v352 = vld [vmem:[#allocation7 + $0x1c8] sm:$0xff]
    %v353 = vld [vmem:[#allocation7 + $0x1d0] sm:$0xff]
    %v354 = vld [vmem:[#allocation7 + $0x1d8] sm:$0xff]
    %v355 = vld [vmem:[#allocation7 + $0x1e0] sm:$0xff]
    %v356 = vld [vmem:[#allocation7 + $0x1e8] sm:$0xff]
    %v357 = vld [vmem:[#allocation7 + $0x1f0] sm:$0xff]
    %v358 = vld [vmem:[#allocation7 + $0x1f8] sm:$0xff]
    %359 = vmatprep.subr.mxu0 %v296
    %360 = vmatpush1.msra.mxu0 %v295
    %361 = vmatprep.subr.mxu0 %v300
    %362 = vmatpush1.msra.mxu0 %v299
    %363 = vmatprep.subr.mxu0 %v304
    %364 = vmatpush1.msra.mxu0 %v303
    %365 = vmatprep.subr.mxu0 %v308
    %366 = vmatpush1.msra.mxu0 %v307
    %367 = vmatprep.subr.mxu0 %v312
    %368 = vmatpush1.msra.mxu0 %v311
    %369 = vmatprep.subr.mxu0 %v316
    %370 = vmatpush1.msra.mxu0 %v315
    %371 = vmatprep.subr.mxu0 %v320
    %372 = vmatpush1.msra.mxu0 %v319
    %373 = vmatprep.subr.mxu0 %v324
    %374 = vmatpush1.msra.mxu0 %v323
    %375 = vmatprep.subr.mxu0 %v328
    %376 = vmatpush1.msra.mxu0 %v327
    %377 = vmatprep.subr.mxu0 %v332
    %378 = vmatpush1.msra.mxu0 %v331
    %379 = vmatprep.subr.mxu0 %v336
    %380 = vmatpush1.msra.mxu0 %v335
    %381 = vmatprep.subr.mxu0 %v340
    %382 = vmatpush1.msra.mxu0 %v339
    %383 = vmatprep.subr.mxu0 %v344
    %384 = vmatpush1.msra.mxu0 %v343
    %385 = vmatprep.subr.mxu0 %v348
    %386 = vmatpush1.msra.mxu0 %v347
    %387 = vmatprep.subr.mxu0 %v352
    %388 = vmatpush1.msra.mxu0 %v351
    %389 = vmatprep.subr.mxu0 %v356
    %390 = vmatpush1.msra.mxu0 %v355
    %391 = vmatprep.subr.mxu0 0.0
    %392 = vmatpush1.msra.mxu0 0.0
    %393 = vmatprep.subr.mxu0 0.0
    %394 = vmatpush1.msra.mxu0 0.0
    %395 = vmatprep.subr.mxu0 0.0
    %396 = vmatpush1.msra.mxu0 0.0
    %397 = vmatprep.subr.mxu0 0.0
    %398 = vmatpush1.msra.mxu0 0.0
    %399 = vmatprep.subr.mxu0 0.0
    %400 = vmatpush1.msra.mxu0 0.0
    %401 = vmatprep.subr.mxu0 0.0
    %402 = vmatpush1.msra.mxu0 0.0
    %403 = vmatprep.subr.mxu0 0.0
    %404 = vmatpush1.msra.mxu0 0.0
    %405 = vmatprep.subr.mxu0 0.0
    %406 = vmatpush1.msra.mxu0 0.0
    %407 = vmatprep.subr.mxu0 0.0
    %408 = vmatpush1.msra.mxu0 0.0
    %409 = vmatprep.subr.mxu0 0.0
    %410 = vmatpush1.msra.mxu0 0.0
    %411 = vmatprep.subr.mxu0 0.0
    %412 = vmatpush1.msra.mxu0 0.0
    %413 = vmatprep.subr.mxu0 0.0
    %414 = vmatpush1.msra.mxu0 0.0
    %415 = vmatprep.subr.mxu0 0.0
    %416 = vmatpush1.msra.mxu0 0.0
    %417 = vmatprep.subr.mxu0 0.0
    %418 = vmatpush1.msra.mxu0 0.0
    %419 = vmatprep.subr.mxu0 0.0
    %420 = vmatpush1.msra.mxu0 0.0
    %421 = vmatprep.subr.mxu0 0.0
    %422 = vmatpush1.msra.mxu0 0.0
    %423 = vmatprep.mubr.f32.mxu0 0.0
    %424 = vmatmul.mubr.f32.gmra.mrb[0].mxu0 %v288
    %v425 = vpop.f32.mrb[0].mxu0
    %v426 = vadd.f32 0.0, %v425
    %v427 = vpop.f32.mrb[0].mxu0
    %v428 = vadd.f32 0.0, %v427
    %429 = vdwg.mxu0
    %430 = vmatprep.subr.mxu0 %v298
    %431 = vmatpush1.msra.mxu0 %v297
    %432 = vmatprep.subr.mxu0 %v302
    %433 = vmatpush1.msra.mxu0 %v301
    %434 = vmatprep.subr.mxu0 %v306
    %435 = vmatpush1.msra.mxu0 %v305
    %436 = vmatprep.subr.mxu0 %v310
    %437 = vmatpush1.msra.mxu0 %v309
    %438 = vmatprep.subr.mxu0 %v314
    %439 = vmatpush1.msra.mxu0 %v313
    %440 = vmatprep.subr.mxu0 %v318
    %441 = vmatpush1.msra.mxu0 %v317
    %442 = vmatprep.subr.mxu0 %v322
    %443 = vmatpush1.msra.mxu0 %v321
    %444 = vmatprep.subr.mxu0 %v326
    %445 = vmatpush1.msra.mxu0 %v325
    %446 = vmatprep.subr.mxu0 %v330
    %447 = vmatpush1.msra.mxu0 %v329
    %448 = vmatprep.subr.mxu0 %v334
    %449 = vmatpush1.msra.mxu0 %v333
    %450 = vmatprep.subr.mxu0 %v338
    %451 = vmatpush1.msra.mxu0 %v337
    %452 = vmatprep.subr.mxu0 %v342
    %453 = vmatpush1.msra.mxu0 %v341
    %454 = vmatprep.subr.mxu0 %v346
    %455 = vmatpush1.msra.mxu0 %v345
    %456 = vmatprep.subr.mxu0 %v350
    %457 = vmatpush1.msra.mxu0 %v349
    %458 = vmatprep.subr.mxu0 %v354
    %459 = vmatpush1.msra.mxu0 %v353
    %460 = vmatprep.subr.mxu0 %v358
    %461 = vmatpush1.msra.mxu0 %v357
    %462 = vmatprep.subr.mxu0 0.0
    %463 = vmatpush1.msra.mxu0 0.0
    %464 = vmatprep.subr.mxu0 0.0
    %465 = vmatpush1.msra.mxu0 0.0
    %466 = vmatprep.subr.mxu0 0.0
    %467 = vmatpush1.msra.mxu0 0.0
    %468 = vmatprep.subr.mxu0 0.0
    %469 = vmatpush1.msra.mxu0 0.0
    %470 = vmatprep.subr.mxu0 0.0
    %471 = vmatpush1.msra.mxu0 0.0
    %472 = vmatprep.subr.mxu0 0.0
    %473 = vmatpush1.msra.mxu0 0.0
    %474 = vmatprep.subr.mxu0 0.0
    %475 = vmatpush1.msra.mxu0 0.0
    %476 = vmatprep.subr.mxu0 0.0
    %477 = vmatpush1.msra.mxu0 0.0
    %478 = vmatprep.subr.mxu0 0.0
    %479 = vmatpush1.msra.mxu0 0.0
    %480 = vmatprep.subr.mxu0 0.0
    %481 = vmatpush1.msra.mxu0 0.0
    %482 = vmatprep.subr.mxu0 0.0
    %483 = vmatpush1.msra.mxu0 0.0
    %484 = vmatprep.subr.mxu0 0.0
    %485 = vmatpush1.msra.mxu0 0.0
    %486 = vmatprep.subr.mxu0 0.0
    %487 = vmatpush1.msra.mxu0 0.0
    %488 = vmatprep.subr.mxu0 0.0
    %489 = vmatpush1.msra.mxu0 0.0
    %490 = vmatprep.subr.mxu0 0.0
    %491 = vmatpush1.msra.mxu0 0.0
    %492 = vmatprep.subr.mxu0 0.0
    %493 = vmatpush1.msra.mxu0 0.0
    %494 = vmatprep.mubr.f32.mxu0 0.0
    %495 = vmatmul.mubr.f32.gmra.mrb[0].mxu0 %v288
    %v496 = vpop.f32.mrb[0].mxu0
    %v497 = vadd.f32 0.0, %v496
    %v498 = vpop.f32.mrb[0].mxu0
    %v499 = vadd.f32 0.0, %v498
    %500 = vdwg.mxu0
    %v501 = vadd.f32 %v291, %v426
    %v502 = vadd.f32 %v292, %v428
    %v503 = vadd.f32 %v293, %v497
    %v504 = vadd.f32 %v294, %v499
    %v505 = vxor.u32 %v501, 2147483648
    %v506 = vxor.u32 %v502, 2147483648
    %v507 = vxor.u32 %v503, 2147483648
    %v508 = vmul.f32 %v505, 1.442695
    %v509 = vpow.pop %v508
    %v510 = vmul.f32 %v506, 1.442695
    %v511 = vpow.pop %v510
    %v512 = vmul.f32 %v507, 1.442695
    %v513 = vpow.pop %v512
    %v514 = vadd.f32 %v509, 1.0
    %v515 = vadd.f32 %v511, 1.0
    %v516 = vadd.f32 %v513, 1.0
    %v517 = vrcp.pop %v514
    %v518 = vmul.f32 1.0, %v517
    %v519 = vrcp.pop %v515
    %v520 = vmul.f32 1.0, %v519
    %v521 = vrcp.pop %v516
    %v522 = vmul.f32 1.0, %v521
    %v523 = vtanh.pop %v504
    %v524 = vmul.f32 %v520, %v286
    %v525 = vmul.f32 %v518, %v523
    %v526 = vadd.f32 %v524, %v525
    %v527 = vtanh.pop %v526
    %v528 = vmul.f32 %v522, %v527
    %s529 = scalar_lea.vmem [#allocation9], 8
    %530 = vst [vmem:[%s529] sm:$0xff] %v528
    %s531 = scalar_lea.vmem [#allocation4], 64
    %v532 = vld [vmem:[%s531] sm:$0xff]
    %v533 = vld [vmem:[%s531 + $0x8] sm:$0xff]
    %v534 = vld [vmem:[%s531 + $0x10] sm:$0xff]
    %v535 = vld [vmem:[%s531 + $0x18] sm:$0xff]
    %v536 = vld [vmem:[#allocation7] sm:$0xff]
    %v537 = vld [vmem:[#allocation7 + $0x8] sm:$0xff]
    %v538 = vld [vmem:[#allocation7 + $0x10] sm:$0xff]
    %v539 = vld [vmem:[#allocation7 + $0x18] sm:$0xff]
    %v540 = vld [vmem:[#allocation7 + $0x20] sm:$0xff]
    %v541 = vld [vmem:[#allocation7 + $0x28] sm:$0xff]
    %v542 = vld [vmem:[#allocation7 + $0x30] sm:$0xff]
    %v543 = vld [vmem:[#allocation7 + $0x38] sm:$0xff]
    %v544 = vld [vmem:[#allocation7 + $0x40] sm:$0xff]
    %v545 = vld [vmem:[#allocation7 + $0x48] sm:$0xff]
    %v546 = vld [vmem:[#allocation7 + $0x50] sm:$0xff]
    %v547 = vld [vmem:[#allocation7 + $0x58] sm:$0xff]
    %v548 = vld [vmem:[#allocation7 + $0x60] sm:$0xff]
    %v549 = vld [vmem:[#allocation7 + $0x68] sm:$0xff]
    %v550 = vld [vmem:[#allocation7 + $0x70] sm:$0xff]
    %v551 = vld [vmem:[#allocation7 + $0x78] sm:$0xff]
    %v552 = vld [vmem:[#allocation7 + $0x80] sm:$0xff]
    %v553 = vld [vmem:[#allocation7 + $0x88] sm:$0xff]
    %v554 = vld [vmem:[#allocation7 + $0x90] sm:$0xff]
    %v555 = vld [vmem:[#allocation7 + $0x98] sm:$0xff]
    %v556 = vld [vmem:[#allocation7 + $0xa0] sm:$0xff]
    %v557 = vld [vmem:[#allocation7 + $0xa8] sm:$0xff]
    %v558 = vld [vmem:[#allocation7 + $0xb0] sm:$0xff]
    %v559 = vld [vmem:[#allocation7 + $0xb8] sm:$0xff]
    %v560 = vld [vmem:[#allocation7 + $0xc0] sm:$0xff]
    %v561 = vld [vmem:[#allocation7 + $0xc8] sm:$0xff]
    %v562 = vld [vmem:[#allocation7 + $0xd0] sm:$0xff]
    %v563 = vld [vmem:[#allocation7 + $0xd8] sm:$0xff]
    %v564 = vld [vmem:[#allocation7 + $0xe0] sm:$0xff]
    %v565 = vld [vmem:[#allocation7 + $0xe8] sm:$0xff]
    %v566 = vld [vmem:[#allocation7 + $0xf0] sm:$0xff]
    %v567 = vld [vmem:[#allocation7 + $0xf8] sm:$0xff]
    %v568 = vld [vmem:[#allocation7 + $0x100] sm:$0xff]
    %v569 = vld [vmem:[#allocation7 + $0x108] sm:$0xff]
    %v570 = vld [vmem:[#allocation7 + $0x110] sm:$0xff]
    %v571 = vld [vmem:[#allocation7 + $0x118] sm:$0xff]
    %v572 = vld [vmem:[#allocation7 + $0x120] sm:$0xff]
    %v573 = vld [vmem:[#allocation7 + $0x128] sm:$0xff]
    %v574 = vld [vmem:[#allocation7 + $0x130] sm:$0xff]
    %v575 = vld [vmem:[#allocation7 + $0x138] sm:$0xff]
    %v576 = vld [vmem:[#allocation7 + $0x140] sm:$0xff]
    %v577 = vld [vmem:[#allocation7 + $0x148] sm:$0xff]
    %v578 = vld [vmem:[#allocation7 + $0x150] sm:$0xff]
    %v579 = vld [vmem:[#allocation7 + $0x158] sm:$0xff]
    %v580 = vld [vmem:[#allocation7 + $0x160] sm:$0xff]
    %v581 = vld [vmem:[#allocation7 + $0x168] sm:$0xff]
    %v582 = vld [vmem:[#allocation7 + $0x170] sm:$0xff]
    %v583 = vld [vmem:[#allocation7 + $0x178] sm:$0xff]
    %v584 = vld [vmem:[#allocation7 + $0x180] sm:$0xff]
    %v585 = vld [vmem:[#allocation7 + $0x188] sm:$0xff]
    %v586 = vld [vmem:[#allocation7 + $0x190] sm:$0xff]
    %v587 = vld [vmem:[#allocation7 + $0x198] sm:$0xff]
    %v588 = vld [vmem:[#allocation7 + $0x1a0] sm:$0xff]
    %v589 = vld [vmem:[#allocation7 + $0x1a8] sm:$0xff]
    %v590 = vld [vmem:[#allocation7 + $0x1b0] sm:$0xff]
    %v591 = vld [vmem:[#allocation7 + $0x1b8] sm:$0xff]
    %v592 = vld [vmem:[#allocation7 + $0x1c0] sm:$0xff]
    %v593 = vld [vmem:[#allocation7 + $0x1c8] sm:$0xff]
    %v594 = vld [vmem:[#allocation7 + $0x1d0] sm:$0xff]
    %v595 = vld [vmem:[#allocation7 + $0x1d8] sm:$0xff]
    %v596 = vld [vmem:[#allocation7 + $0x1e0] sm:$0xff]
    %v597 = vld [vmem:[#allocation7 + $0x1e8] sm:$0xff]
    %v598 = vld [vmem:[#allocation7 + $0x1f0] sm:$0xff]
    %v599 = vld [vmem:[#allocation7 + $0x1f8] sm:$0xff]
    %600 = vmatprep.subr.mxu0 %v537
    %601 = vmatpush1.msra.mxu0 %v536
    %602 = vmatprep.subr.mxu0 %v541
    %603 = vmatpush1.msra.mxu0 %v540
    %604 = vmatprep.subr.mxu0 %v545
    %605 = vmatpush1.msra.mxu0 %v544
    %606 = vmatprep.subr.mxu0 %v549
    %607 = vmatpush1.msra.mxu0 %v548
    %608 = vmatprep.subr.mxu0 %v553
    %609 = vmatpush1.msra.mxu0 %v552
    %610 = vmatprep.subr.mxu0 %v557
    %611 = vmatpush1.msra.mxu0 %v556
    %612 = vmatprep.subr.mxu0 %v561
    %613 = vmatpush1.msra.mxu0 %v560
    %614 = vmatprep.subr.mxu0 %v565
    %615 = vmatpush1.msra.mxu0 %v564
    %616 = vmatprep.subr.mxu0 %v569
    %617 = vmatpush1.msra.mxu0 %v568
    %618 = vmatprep.subr.mxu0 %v573
    %619 = vmatpush1.msra.mxu0 %v572
    %620 = vmatprep.subr.mxu0 %v577
    %621 = vmatpush1.msra.mxu0 %v576
    %622 = vmatprep.subr.mxu0 %v581
    %623 = vmatpush1.msra.mxu0 %v580
    %624 = vmatprep.subr.mxu0 %v585
    %625 = vmatpush1.msra.mxu0 %v584
    %626 = vmatprep.subr.mxu0 %v589
    %627 = vmatpush1.msra.mxu0 %v588
    %628 = vmatprep.subr.mxu0 %v593
    %629 = vmatpush1.msra.mxu0 %v592
    %630 = vmatprep.subr.mxu0 %v597
    %631 = vmatpush1.msra.mxu0 %v596
    %632 = vmatprep.subr.mxu0 0.0
    %633 = vmatpush1.msra.mxu0 0.0
    %634 = vmatprep.subr.mxu0 0.0
    %635 = vmatpush1.msra.mxu0 0.0
    %636 = vmatprep.subr.mxu0 0.0
    %637 = vmatpush1.msra.mxu0 0.0
    %638 = vmatprep.subr.mxu0 0.0
    %639 = vmatpush1.msra.mxu0 0.0
    %640 = vmatprep.subr.mxu0 0.0
    %641 = vmatpush1.msra.mxu0 0.0
    %642 = vmatprep.subr.mxu0 0.0
    %643 = vmatpush1.msra.mxu0 0.0
    %644 = vmatprep.subr.mxu0 0.0
    %645 = vmatpush1.msra.mxu0 0.0
    %646 = vmatprep.subr.mxu0 0.0
    %647 = vmatpush1.msra.mxu0 0.0
    %648 = vmatprep.subr.mxu0 0.0
    %649 = vmatpush1.msra.mxu0 0.0
    %650 = vmatprep.subr.mxu0 0.0
    %651 = vmatpush1.msra.mxu0 0.0
    %652 = vmatprep.subr.mxu0 0.0
    %653 = vmatpush1.msra.mxu0 0.0
    %654 = vmatprep.subr.mxu0 0.0
    %655 = vmatpush1.msra.mxu0 0.0
    %656 = vmatprep.subr.mxu0 0.0
    %657 = vmatpush1.msra.mxu0 0.0
    %658 = vmatprep.subr.mxu0 0.0
    %659 = vmatpush1.msra.mxu0 0.0
    %660 = vmatprep.subr.mxu0 0.0
    %661 = vmatpush1.msra.mxu0 0.0
    %662 = vmatprep.subr.mxu0 0.0
    %663 = vmatpush1.msra.mxu0 0.0
    %664 = vmatprep.mubr.f32.mxu0 0.0
    %665 = vmatmul.mubr.f32.gmra.mrb[0].mxu0 %v528
    %v666 = vpop.f32.mrb[0].mxu0
    %v667 = vadd.f32 0.0, %v666
    %v668 = vpop.f32.mrb[0].mxu0
    %v669 = vadd.f32 0.0, %v668
    %670 = vdwg.mxu0
    %671 = vmatprep.subr.mxu0 %v539
    %672 = vmatpush1.msra.mxu0 %v538
    %673 = vmatprep.subr.mxu0 %v543
    %674 = vmatpush1.msra.mxu0 %v542
    %675 = vmatprep.subr.mxu0 %v547
    %676 = vmatpush1.msra.mxu0 %v546
    %677 = vmatprep.subr.mxu0 %v551
    %678 = vmatpush1.msra.mxu0 %v550
    %679 = vmatprep.subr.mxu0 %v555
    %680 = vmatpush1.msra.mxu0 %v554
    %681 = vmatprep.subr.mxu0 %v559
    %682 = vmatpush1.msra.mxu0 %v558
    %683 = vmatprep.subr.mxu0 %v563
    %684 = vmatpush1.msra.mxu0 %v562
    %685 = vmatprep.subr.mxu0 %v567
    %686 = vmatpush1.msra.mxu0 %v566
    %687 = vmatprep.subr.mxu0 %v571
    %688 = vmatpush1.msra.mxu0 %v570
    %689 = vmatprep.subr.mxu0 %v575
    %690 = vmatpush1.msra.mxu0 %v574
    %691 = vmatprep.subr.mxu0 %v579
    %692 = vmatpush1.msra.mxu0 %v578
    %693 = vmatprep.subr.mxu0 %v583
    %694 = vmatpush1.msra.mxu0 %v582
    %695 = vmatprep.subr.mxu0 %v587
    %696 = vmatpush1.msra.mxu0 %v586
    %697 = vmatprep.subr.mxu0 %v591
    %698 = vmatpush1.msra.mxu0 %v590
    %699 = vmatprep.subr.mxu0 %v595
    %700 = vmatpush1.msra.mxu0 %v594
    %701 = vmatprep.subr.mxu0 %v599
    %702 = vmatpush1.msra.mxu0 %v598
    %703 = vmatprep.subr.mxu0 0.0
    %704 = vmatpush1.msra.mxu0 0.0
    %705 = vmatprep.subr.mxu0 0.0
    %706 = vmatpush1.msra.mxu0 0.0
    %707 = vmatprep.subr.mxu0 0.0
    %708 = vmatpush1.msra.mxu0 0.0
    %709 = vmatprep.subr.mxu0 0.0
    %710 = vmatpush1.msra.mxu0 0.0
    %711 = vmatprep.subr.mxu0 0.0
    %712 = vmatpush1.msra.mxu0 0.0
    %713 = vmatprep.subr.mxu0 0.0
    %714 = vmatpush1.msra.mxu0 0.0
    %715 = vmatprep.subr.mxu0 0.0
    %716 = vmatpush1.msra.mxu0 0.0
    %717 = vmatprep.subr.mxu0 0.0
    %718 = vmatpush1.msra.mxu0 0.0
    %719 = vmatprep.subr.mxu0 0.0
    %720 = vmatpush1.msra.mxu0 0.0
    %721 = vmatprep.subr.mxu0 0.0
    %722 = vmatpush1.msra.mxu0 0.0
    %723 = vmatprep.subr.mxu0 0.0
    %724 = vmatpush1.msra.mxu0 0.0
    %725 = vmatprep.subr.mxu0 0.0
    %726 = vmatpush1.msra.mxu0 0.0
    %727 = vmatprep.subr.mxu0 0.0
    %728 = vmatpush1.msra.mxu0 0.0
    %729 = vmatprep.subr.mxu0 0.0
    %730 = vmatpush1.msra.mxu0 0.0
    %731 = vmatprep.subr.mxu0 0.0
    %732 = vmatpush1.msra.mxu0 0.0
    %733 = vmatprep.subr.mxu0 0.0
    %734 = vmatpush1.msra.mxu0 0.0
    %735 = vmatprep.mubr.f32.mxu0 0.0
    %736 = vmatmul.mubr.f32.gmra.mrb[0].mxu0 %v528
    %v737 = vpop.f32.mrb[0].mxu0
    %v738 = vadd.f32 0.0, %v737
    %v739 = vpop.f32.mrb[0].mxu0
    %v740 = vadd.f32 0.0, %v739
    %741 = vdwg.mxu0
    %v742 = vadd.f32 %v532, %v667
    %v743 = vadd.f32 %v533, %v669
    %v744 = vadd.f32 %v534, %v738
    %v745 = vadd.f32 %v535, %v740
    %v746 = vxor.u32 %v742, 2147483648
    %v747 = vxor.u32 %v743, 2147483648
    %v748 = vxor.u32 %v744, 2147483648
    %v749 = vmul.f32 %v746, 1.442695
    %v750 = vpow.pop %v749
    %v751 = vmul.f32 %v747, 1.442695
    %v752 = vpow.pop %v751
    %v753 = vmul.f32 %v748, 1.442695
    %v754 = vpow.pop %v753
    %v755 = vadd.f32 %v750, 1.0
    %v756 = vadd.f32 %v752, 1.0
    %v757 = vadd.f32 %v754, 1.0
    %v758 = vrcp.pop %v755
    %v759 = vmul.f32 1.0, %v758
    %v760 = vrcp.pop %v756
    %v761 = vmul.f32 1.0, %v760
    %v762 = vrcp.pop %v757
    %v763 = vmul.f32 1.0, %v762
    %v764 = vtanh.pop %v745
    %v765 = vmul.f32 %v761, %v526
    %v766 = vmul.f32 %v759, %v764
    %v767 = vadd.f32 %v765, %v766
    %v768 = vtanh.pop %v767
    %v769 = vmul.f32 %v763, %v768
    %s770 = scalar_lea.vmem [#allocation9], 16
    %771 = vst [vmem:[%s770] sm:$0xff] %v769
    %s772 = scalar_lea.vmem [#allocation4], 96
    %v773 = vld [vmem:[%s772] sm:$0xff]
    %v774 = vld [vmem:[%s772 + $0x8] sm:$0xff]
    %v775 = vld [vmem:[%s772 + $0x10] sm:$0xff]
    %v776 = vld [vmem:[%s772 + $0x18] sm:$0xff]
    %v777 = vld [vmem:[#allocation7] sm:$0xff]
    %v778 = vld [vmem:[#allocation7 + $0x8] sm:$0xff]
    %v779 = vld [vmem:[#allocation7 + $0x10] sm:$0xff]
    %v780 = vld [vmem:[#allocation7 + $0x18] sm:$0xff]
    %v781 = vld [vmem:[#allocation7 + $0x20] sm:$0xff]
    %v782 = vld [vmem:[#allocation7 + $0x28] sm:$0xff]
    %v783 = vld [vmem:[#allocation7 + $0x30] sm:$0xff]
    %v784 = vld [vmem:[#allocation7 + $0x38] sm:$0xff]
    %v785 = vld [vmem:[#allocation7 + $0x40] sm:$0xff]
    %v786 = vld [vmem:[#allocation7 + $0x48] sm:$0xff]
    %v787 = vld [vmem:[#allocation7 + $0x50] sm:$0xff]
    %v788 = vld [vmem:[#allocation7 + $0x58] sm:$0xff]
    %v789 = vld [vmem:[#allocation7 + $0x60] sm:$0xff]
    %v790 = vld [vmem:[#allocation7 + $0x68] sm:$0xff]
    %v791 = vld [vmem:[#allocation7 + $0x70] sm:$0xff]
    %v792 = vld [vmem:[#allocation7 + $0x78] sm:$0xff]
    %v793 = vld [vmem:[#allocation7 + $0x80] sm:$0xff]
    %v794 = vld [vmem:[#allocation7 + $0x88] sm:$0xff]
    %v795 = vld [vmem:[#allocation7 + $0x90] sm:$0xff]
    %v796 = vld [vmem:[#allocation7 + $0x98] sm:$0xff]
    %v797 = vld [vmem:[#allocation7 + $0xa0] sm:$0xff]
    %v798 = vld [vmem:[#allocation7 + $0xa8] sm:$0xff]
    %v799 = vld [vmem:[#allocation7 + $0xb0] sm:$0xff]
    %v800 = vld [vmem:[#allocation7 + $0xb8] sm:$0xff]
    %v801 = vld [vmem:[#allocation7 + $0xc0] sm:$0xff]
    %v802 = vld [vmem:[#allocation7 + $0xc8] sm:$0xff]
    %v803 = vld [vmem:[#allocation7 + $0xd0] sm:$0xff]
    %v804 = vld [vmem:[#allocation7 + $0xd8] sm:$0xff]
    %v805 = vld [vmem:[#allocation7 + $0xe0] sm:$0xff]
    %v806 = vld [vmem:[#allocation7 + $0xe8] sm:$0xff]
    %v807 = vld [vmem:[#allocation7 + $0xf0] sm:$0xff]
    %v808 = vld [vmem:[#allocation7 + $0xf8] sm:$0xff]
    %v809 = vld [vmem:[#allocation7 + $0x100] sm:$0xff]
    %v810 = vld [vmem:[#allocation7 + $0x108] sm:$0xff]
    %v811 = vld [vmem:[#allocation7 + $0x110] sm:$0xff]
    %v812 = vld [vmem:[#allocation7 + $0x118] sm:$0xff]
    %v813 = vld [vmem:[#allocation7 + $0x120] sm:$0xff]
    %v814 = vld [vmem:[#allocation7 + $0x128] sm:$0xff]
    %v815 = vld [vmem:[#allocation7 + $0x130] sm:$0xff]
    %v816 = vld [vmem:[#allocation7 + $0x138] sm:$0xff]
    %v817 = vld [vmem:[#allocation7 + $0x140] sm:$0xff]
    %v818 = vld [vmem:[#allocation7 + $0x148] sm:$0xff]
    %v819 = vld [vmem:[#allocation7 + $0x150] sm:$0xff]
    %v820 = vld [vmem:[#allocation7 + $0x158] sm:$0xff]
    %v821 = vld [vmem:[#allocation7 + $0x160] sm:$0xff]
    %v822 = vld [vmem:[#allocation7 + $0x168] sm:$0xff]
    %v823 = vld [vmem:[#allocation7 + $0x170] sm:$0xff]
    %v824 = vld [vmem:[#allocation7 + $0x178] sm:$0xff]
    %v825 = vld [vmem:[#allocation7 + $0x180] sm:$0xff]
    %v826 = vld [vmem:[#allocation7 + $0x188] sm:$0xff]
    %v827 = vld [vmem:[#allocation7 + $0x190] sm:$0xff]
    %v828 = vld [vmem:[#allocation7 + $0x198] sm:$0xff]
    %v829 = vld [vmem:[#allocation7 + $0x1a0] sm:$0xff]
    %v830 = vld [vmem:[#allocation7 + $0x1a8] sm:$0xff]
    %v831 = vld [vmem:[#allocation7 + $0x1b0] sm:$0xff]
    %v832 = vld [vmem:[#allocation7 + $0x1b8] sm:$0xff]
    %v833 = vld [vmem:[#allocation7 + $0x1c0] sm:$0xff]
    %v834 = vld [vmem:[#allocation7 + $0x1c8] sm:$0xff]
    %v835 = vld [vmem:[#allocation7 + $0x1d0] sm:$0xff]
    %v836 = vld [vmem:[#allocation7 + $0x1d8] sm:$0xff]
    %v837 = vld [vmem:[#allocation7 + $0x1e0] sm:$0xff]
    %v838 = vld [vmem:[#allocation7 + $0x1e8] sm:$0xff]
    %v839 = vld [vmem:[#allocation7 + $0x1f0] sm:$0xff]
    %v840 = vld [vmem:[#allocation7 + $0x1f8] sm:$0xff]
    %841 = vmatprep.subr.mxu0 %v778
    %842 = vmatpush1.msra.mxu0 %v777
    %843 = vmatprep.subr.mxu0 %v782
    %844 = vmatpush1.msra.mxu0 %v781
    %845 = vmatprep.subr.mxu0 %v786
    %846 = vmatpush1.msra.mxu0 %v785
    %847 = vmatprep.subr.mxu0 %v790
    %848 = vmatpush1.msra.mxu0 %v789
    %849 = vmatprep.subr.mxu0 %v794
    %850 = vmatpush1.msra.mxu0 %v793
    %851 = vmatprep.subr.mxu0 %v798
    %852 = vmatpush1.msra.mxu0 %v797
    %853 = vmatprep.subr.mxu0 %v802
    %854 = vmatpush1.msra.mxu0 %v801
    %855 = vmatprep.subr.mxu0 %v806
    %856 = vmatpush1.msra.mxu0 %v805
    %857 = vmatprep.subr.mxu0 %v810
    %858 = vmatpush1.msra.mxu0 %v809
    %859 = vmatprep.subr.mxu0 %v814
    %860 = vmatpush1.msra.mxu0 %v813
    %861 = vmatprep.subr.mxu0 %v818
    %862 = vmatpush1.msra.mxu0 %v817
    %863 = vmatprep.subr.mxu0 %v822
    %864 = vmatpush1.msra.mxu0 %v821
    %865 = vmatprep.subr.mxu0 %v826
    %866 = vmatpush1.msra.mxu0 %v825
    %867 = vmatprep.subr.mxu0 %v830
    %868 = vmatpush1.msra.mxu0 %v829
    %869 = vmatprep.subr.mxu0 %v834
    %870 = vmatpush1.msra.mxu0 %v833
    %871 = vmatprep.subr.mxu0 %v838
    %872 = vmatpush1.msra.mxu0 %v837
    %873 = vmatprep.subr.mxu0 0.0
    %874 = vmatpush1.msra.mxu0 0.0
    %875 = vmatprep.subr.mxu0 0.0
    %876 = vmatpush1.msra.mxu0 0.0
    %877 = vmatprep.subr.mxu0 0.0
    %878 = vmatpush1.msra.mxu0 0.0
    %879 = vmatprep.subr.mxu0 0.0
    %880 = vmatpush1.msra.mxu0 0.0
    %881 = vmatprep.subr.mxu0 0.0
    %882 = vmatpush1.msra.mxu0 0.0
    %883 = vmatprep.subr.mxu0 0.0
    %884 = vmatpush1.msra.mxu0 0.0
    %885 = vmatprep.subr.mxu0 0.0
    %886 = vmatpush1.msra.mxu0 0.0
    %887 = vmatprep.subr.mxu0 0.0
    %888 = vmatpush1.msra.mxu0 0.0
    %889 = vmatprep.subr.mxu0 0.0
    %890 = vmatpush1.msra.mxu0 0.0
    %891 = vmatprep.subr.mxu0 0.0
    %892 = vmatpush1.msra.mxu0 0.0
    %893 = vmatprep.subr.mxu0 0.0
    %894 = vmatpush1.msra.mxu0 0.0
    %895 = vmatprep.subr.mxu0 0.0
    %896 = vmatpush1.msra.mxu0 0.0
    %897 = vmatprep.subr.mxu0 0.0
    %898 = vmatpush1.msra.mxu0 0.0
    %899 = vmatprep.subr.mxu0 0.0
    %900 = vmatpush1.msra.mxu0 0.0
    %901 = vmatprep.subr.mxu0 0.0
    %902 = vmatpush1.msra.mxu0 0.0
    %903 = vmatprep.subr.mxu0 0.0
    %904 = vmatpush1.msra.mxu0 0.0
    %905 = vmatprep.mubr.f32.mxu0 0.0
    %906 = vmatmul.mubr.f32.gmra.mrb[0].mxu0 %v769
    %v907 = vpop.f32.mrb[0].mxu0
    %v908 = vadd.f32 0.0, %v907
    %v909 = vpop.f32.mrb[0].mxu0
    %v910 = vadd.f32 0.0, %v909
    %911 = vdwg.mxu0
    %912 = vmatprep.subr.mxu0 %v780
    %913 = vmatpush1.msra.mxu0 %v779
    %914 = vmatprep.subr.mxu0 %v784
    %915 = vmatpush1.msra.mxu0 %v783
    %916 = vmatprep.subr.mxu0 %v788
    %917 = vmatpush1.msra.mxu0 %v787
    %918 = vmatprep.subr.mxu0 %v792
    %919 = vmatpush1.msra.mxu0 %v791
    %920 = vmatprep.subr.mxu0 %v796
    %921 = vmatpush1.msra.mxu0 %v795
    %922 = vmatprep.subr.mxu0 %v800
    %923 = vmatpush1.msra.mxu0 %v799
    %924 = vmatprep.subr.mxu0 %v804
    %925 = vmatpush1.msra.mxu0 %v803
    %926 = vmatprep.subr.mxu0 %v808
    %927 = vmatpush1.msra.mxu0 %v807
    %928 = vmatprep.subr.mxu0 %v812
    %929 = vmatpush1.msra.mxu0 %v811
    %930 = vmatprep.subr.mxu0 %v816
    %931 = vmatpush1.msra.mxu0 %v815
    %932 = vmatprep.subr.mxu0 %v820
    %933 = vmatpush1.msra.mxu0 %v819
    %934 = vmatprep.subr.mxu0 %v824
    %935 = vmatpush1.msra.mxu0 %v823
    %936 = vmatprep.subr.mxu0 %v828
    %937 = vmatpush1.msra.mxu0 %v827
    %938 = vmatprep.subr.mxu0 %v832
    %939 = vmatpush1.msra.mxu0 %v831
    %940 = vmatprep.subr.mxu0 %v836
    %941 = vmatpush1.msra.mxu0 %v835
    %942 = vmatprep.subr.mxu0 %v840
    %943 = vmatpush1.msra.mxu0 %v839
    %944 = vmatprep.subr.mxu0 0.0
    %945 = vmatpush1.msra.mxu0 0.0
    %946 = vmatprep.subr.mxu0 0.0
    %947 = vmatpush1.msra.mxu0 0.0
    %948 = vmatprep.subr.mxu0 0.0
    %949 = vmatpush1.msra.mxu0 0.0
    %950 = vmatprep.subr.mxu0 0.0
    %951 = vmatpush1.msra.mxu0 0.0
    %952 = vmatprep.subr.mxu0 0.0
    %953 = vmatpush1.msra.mxu0 0.0
    %954 = vmatprep.subr.mxu0 0.0
    %955 = vmatpush1.msra.mxu0 0.0
    %956 = vmatprep.subr.mxu0 0.0
    %957 = vmatpush1.msra.mxu0 0.0
    %958 = vmatprep.subr.mxu0 0.0
    %959 = vmatpush1.msra.mxu0 0.0
    %960 = vmatprep.subr.mxu0 0.0
    %961 = vmatpush1.msra.mxu0 0.0
    %962 = vmatprep.subr.mxu0 0.0
    %963 = vmatpush1.msra.mxu0 0.0
    %964 = vmatprep.subr.mxu0 0.0
    %965 = vmatpush1.msra.mxu0 0.0
    %966 = vmatprep.subr.mxu0 0.0
    %967 = vmatpush1.msra.mxu0 0.0
    %968 = vmatprep.subr.mxu0 0.0
    %969 = vmatpush1.msra.mxu0 0.0
    %970 = vmatprep.subr.mxu0 0.0
    %971 = vmatpush1.msra.mxu0 0.0
    %972 = vmatprep.subr.mxu0 0.0
    %973 = vmatpush1.msra.mxu0 0.0
    %974 = vmatprep.subr.mxu0 0.0
    %975 = vmatpush1.msra.mxu0 0.0
    %976 = vmatprep.mubr.f32.mxu0 0.0
    %977 = vmatmul.mubr.f32.gmra.mrb[0].mxu0 %v769
    %v978 = vpop.f32.mrb[0].mxu0
    %v979 = vadd.f32 0.0, %v978
    %v980 = vpop.f32.mrb[0].mxu0
    %v981 = vadd.f32 0.0, %v980
    %982 = vdwg.mxu0
    %v983 = vadd.f32 %v773, %v908
    %v984 = vadd.f32 %v774, %v910
    %v985 = vadd.f32 %v775, %v979
    %v986 = vadd.f32 %v776, %v981
    %v987 = vxor.u32 %v983, 2147483648
    %v988 = vxor.u32 %v984, 2147483648
    %v989 = vxor.u32 %v985, 2147483648
    %v990 = vmul.f32 %v987, 1.442695
    %v991 = vpow.pop %v990
    %v992 = vmul.f32 %v988, 1.442695
    %v993 = vpow.pop %v992
    %v994 = vmul.f32 %v989, 1.442695
    %v995 = vpow.pop %v994
    %v996 = vadd.f32 %v991, 1.0
    %v997 = vadd.f32 %v993, 1.0
    %v998 = vadd.f32 %v995, 1.0
    %v999 = vrcp.pop %v996
    %v1000 = vmul.f32 1.0, %v999
    %v1001 = vrcp.pop %v997
    %v1002 = vmul.f32 1.0, %v1001
    %v1003 = vrcp.pop %v998
    %v1004 = vmul.f32 1.0, %v1003
    %v1005 = vtanh.pop %v986
    %v1006 = vmul.f32 %v1002, %v767
    %v1007 = vmul.f32 %v1000, %v1005
    %v1008 = vadd.f32 %v1006, %v1007
    %v1009 = vtanh.pop %v1008
    %v1010 = vmul.f32 %v1004, %v1009
    %s1011 = scalar_lea.vmem [#allocation9], 24
    %1012 = vst [vmem:[%s1011] sm:$0xff] %v1010
    %s1013 = scalar_lea.vmem [#allocation4], 128
    %v1014 = vld [vmem:[%s1013] sm:$0xff]
    %v1015 = vld [vmem:[%s1013 + $0x8] sm:$0xff]
    %v1016 = vld [vmem:[%s1013 + $0x10] sm:$0xff]
    %v1017 = vld [vmem:[%s1013 + $0x18] sm:$0xff]
    %v1018 = vld [vmem:[#allocation7] sm:$0xff]
    %v1019 = vld [vmem:[#allocation7 + $0x8] sm:$0xff]
    %v1020 = vld [vmem:[#allocation7 + $0x10] sm:$0xff]
    %v1021 = vld [vmem:[#allocation7 + $0x18] sm:$0xff]
    %v1022 = vld [vmem:[#allocation7 + $0x20] sm:$0xff]
    %v1023 = vld [vmem:[#allocation7 + $0x28] sm:$0xff]
    %v1024 = vld [vmem:[#allocation7 + $0x30] sm:$0xff]
    %v1025 = vld [vmem:[#allocation7 + $0x38] sm:$0xff]
    %v1026 = vld [vmem:[#allocation7 + $0x40] sm:$0xff]
    %v1027 = vld [vmem:[#allocation7 + $0x48] sm:$0xff]
    %v1028 = vld [vmem:[#allocation7 + $0x50] sm:$0xff]
    %v1029 = vld [vmem:[#allocation7 + $0x58] sm:$0xff]
    %v1030 = vld [vmem:[#allocation7 + $0x60] sm:$0xff]
    %v1031 = vld [vmem:[#allocation7 + $0x68] sm:$0xff]
    %v1032 = vld [vmem:[#allocation7 + $0x70] sm:$0xff]
    %v1033 = vld [vmem:[#allocation7 + $0x78] sm:$0xff]
    %v1034 = vld [vmem:[#allocation7 + $0x80] sm:$0xff]
    %v1035 = vld [vmem:[#allocation7 + $0x88] sm:$0xff]
    %v1036 = vld [vmem:[#allocation7 + $0x90] sm:$0xff]
    %v1037 = vld [vmem:[#allocation7 + $0x98] sm:$0xff]
    %v1038 = vld [vmem:[#allocation7 + $0xa0] sm:$0xff]
    %v1039 = vld [vmem:[#allocation7 + $0xa8] sm:$0xff]
    %v1040 = vld [vmem:[#allocation7 + $0xb0] sm:$0xff]
    %v1041 = vld [vmem:[#allocation7 + $0xb8] sm:$0xff]
    %v1042 = vld [vmem:[#allocation7 + $0xc0] sm:$0xff]
    %v1043 = vld [vmem:[#allocation7 + $0xc8] sm:$0xff]
    %v1044 = vld [vmem:[#allocation7 + $0xd0] sm:$0xff]
    %v1045 = vld [vmem:[#allocation7 + $0xd8] sm:$0xff]
    %v1046 = vld [vmem:[#allocation7 + $0xe0] sm:$0xff]
    %v1047 = vld [vmem:[#allocation7 + $0xe8] sm:$0xff]
    %v1048 = vld [vmem:[#allocation7 + $0xf0] sm:$0xff]
    %v1049 = vld [vmem:[#allocation7 + $0xf8] sm:$0xff]
    %v1050 = vld [vmem:[#allocation7 + $0x100] sm:$0xff]
    %v1051 = vld [vmem:[#allocation7 + $0x108] sm:$0xff]
    %v1052 = vld [vmem:[#allocation7 + $0x110] sm:$0xff]
    %v1053 = vld [vmem:[#allocation7 + $0x118] sm:$0xff]
    %v1054 = vld [vmem:[#allocation7 + $0x120] sm:$0xff]
    %v1055 = vld [vmem:[#allocation7 + $0x128] sm:$0xff]
    %v1056 = vld [vmem:[#allocation7 + $0x130] sm:$0xff]
    %v1057 = vld [vmem:[#allocation7 + $0x138] sm:$0xff]
    %v1058 = vld [vmem:[#allocation7 + $0x140] sm:$0xff]
    %v1059 = vld [vmem:[#allocation7 + $0x148] sm:$0xff]
    %v1060 = vld [vmem:[#allocation7 + $0x150] sm:$0xff]
    %v1061 = vld [vmem:[#allocation7 + $0x158] sm:$0xff]
    %v1062 = vld [vmem:[#allocation7 + $0x160] sm:$0xff]
    %v1063 = vld [vmem:[#allocation7 + $0x168] sm:$0xff]
    %v1064 = vld [vmem:[#allocation7 + $0x170] sm:$0xff]
    %v1065 = vld [vmem:[#allocation7 + $0x178] sm:$0xff]
    %v1066 = vld [vmem:[#allocation7 + $0x180] sm:$0xff]
    %v1067 = vld [vmem:[#allocation7 + $0x188] sm:$0xff]
    %v1068 = vld [vmem:[#allocation7 + $0x190] sm:$0xff]
    %v1069 = vld [vmem:[#allocation7 + $0x198] sm:$0xff]
    %v1070 = vld [vmem:[#allocation7 + $0x1a0] sm:$0xff]
    %v1071 = vld [vmem:[#allocation7 + $0x1a8] sm:$0xff]
    %v1072 = vld [vmem:[#allocation7 + $0x1b0] sm:$0xff]
    %v1073 = vld [vmem:[#allocation7 + $0x1b8] sm:$0xff]
    %v1074 = vld [vmem:[#allocation7 + $0x1c0] sm:$0xff]
    %v1075 = vld [vmem:[#allocation7 + $0x1c8] sm:$0xff]
    %v1076 = vld [vmem:[#allocation7 + $0x1d0] sm:$0xff]
    %v1077 = vld [vmem:[#allocation7 + $0x1d8] sm:$0xff]
    %v1078 = vld [vmem:[#allocation7 + $0x1e0] sm:$0xff]
    %v1079 = vld [vmem:[#allocation7 + $0x1e8] sm:$0xff]
    %v1080 = vld [vmem:[#allocation7 + $0x1f0] sm:$0xff]
    %v1081 = vld [vmem:[#allocation7 + $0x1f8] sm:$0xff]
    %1082 = vmatprep.subr.mxu0 %v1019
    %1083 = vmatpush1.msra.mxu0 %v1018
    %1084 = vmatprep.subr.mxu0 %v1023
    %1085 = vmatpush1.msra.mxu0 %v1022
    %1086 = vmatprep.subr.mxu0 %v1027
    %1087 = vmatpush1.msra.mxu0 %v1026
    %1088 = vmatprep.subr.mxu0 %v1031
    %1089 = vmatpush1.msra.mxu0 %v1030
    %1090 = vmatprep.subr.mxu0 %v1035
    %1091 = vmatpush1.msra.mxu0 %v1034
    %1092 = vmatprep.subr.mxu0 %v1039
    %1093 = vmatpush1.msra.mxu0 %v1038
    %1094 = vmatprep.subr.mxu0 %v1043
    %1095 = vmatpush1.msra.mxu0 %v1042
    %1096 = vmatprep.subr.mxu0 %v1047
    %1097 = vmatpush1.msra.mxu0 %v1046
    %1098 = vmatprep.subr.mxu0 %v1051
    %1099 = vmatpush1.msra.mxu0 %v1050
    %1100 = vmatprep.subr.mxu0 %v1055
    %1101 = vmatpush1.msra.mxu0 %v1054
    %1102 = vmatprep.subr.mxu0 %v1059
    %1103 = vmatpush1.msra.mxu0 %v1058
    %1104 = vmatprep.subr.mxu0 %v1063
    %1105 = vmatpush1.msra.mxu0 %v1062
    %1106 = vmatprep.subr.mxu0 %v1067
    %1107 = vmatpush1.msra.mxu0 %v1066
    %1108 = vmatprep.subr.mxu0 %v1071
    %1109 = vmatpush1.msra.mxu0 %v1070
    %1110 = vmatprep.subr.mxu0 %v1075
    %1111 = vmatpush1.msra.mxu0 %v1074
    %1112 = vmatprep.subr.mxu0 %v1079
    %1113 = vmatpush1.msra.mxu0 %v1078
    %1114 = vmatprep.subr.mxu0 0.0
    %1115 = vmatpush1.msra.mxu0 0.0
    %1116 = vmatprep.subr.mxu0 0.0
    %1117 = vmatpush1.msra.mxu0 0.0
    %1118 = vmatprep.subr.mxu0 0.0
    %1119 = vmatpush1.msra.mxu0 0.0
    %1120 = vmatprep.subr.mxu0 0.0
    %1121 = vmatpush1.msra.mxu0 0.0
    %1122 = vmatprep.subr.mxu0 0.0
    %1123 = vmatpush1.msra.mxu0 0.0
    %1124 = vmatprep.subr.mxu0 0.0
    %1125 = vmatpush1.msra.mxu0 0.0
    %1126 = vmatprep.subr.mxu0 0.0
    %1127 = vmatpush1.msra.mxu0 0.0
    %1128 = vmatprep.subr.mxu0 0.0
    %1129 = vmatpush1.msra.mxu0 0.0
    %1130 = vmatprep.subr.mxu0 0.0
    %1131 = vmatpush1.msra.mxu0 0.0
    %1132 = vmatprep.subr.mxu0 0.0
    %1133 = vmatpush1.msra.mxu0 0.0
    %1134 = vmatprep.subr.mxu0 0.0
    %1135 = vmatpush1.msra.mxu0 0.0
    %1136 = vmatprep.subr.mxu0 0.0
    %1137 = vmatpush1.msra.mxu0 0.0
    %1138 = vmatprep.subr.mxu0 0.0
    %1139 = vmatpush1.msra.mxu0 0.0
    %1140 = vmatprep.subr.mxu0 0.0
    %1141 = vmatpush1.msra.mxu0 0.0
    %1142 = vmatprep.subr.mxu0 0.0
    %1143 = vmatpush1.msra.mxu0 0.0
    %1144 = vmatprep.subr.mxu0 0.0
    %1145 = vmatpush1.msra.mxu0 0.0
    %1146 = vmatprep.mubr.f32.mxu0 0.0
    %1147 = vmatmul.mubr.f32.gmra.mrb[0].mxu0 %v1010
    %v1148 = vpop.f32.mrb[0].mxu0
    %v1149 = vadd.f32 0.0, %v1148
    %v1150 = vpop.f32.mrb[0].mxu0
    %v1151 = vadd.f32 0.0, %v1150
    %1152 = vdwg.mxu0
    %1153 = vmatprep.subr.mxu0 %v1021
    %1154 = vmatpush1.msra.mxu0 %v1020
    %1155 = vmatprep.subr.mxu0 %v1025
    %1156 = vmatpush1.msra.mxu0 %v1024
    %1157 = vmatprep.subr.mxu0 %v1029
    %1158 = vmatpush1.msra.mxu0 %v1028
    %1159 = vmatprep.subr.mxu0 %v1033
    %1160 = vmatpush1.msra.mxu0 %v1032
    %1161 = vmatprep.subr.mxu0 %v1037
    %1162 = vmatpush1.msra.mxu0 %v1036
    %1163 = vmatprep.subr.mxu0 %v1041
    %1164 = vmatpush1.msra.mxu0 %v1040
    %1165 = vmatprep.subr.mxu0 %v1045
    %1166 = vmatpush1.msra.mxu0 %v1044
    %1167 = vmatprep.subr.mxu0 %v1049
    %1168 = vmatpush1.msra.mxu0 %v1048
    %1169 = vmatprep.subr.mxu0 %v1053
    %1170 = vmatpush1.msra.mxu0 %v1052
    %1171 = vmatprep.subr.mxu0 %v1057
    %1172 = vmatpush1.msra.mxu0 %v1056
    %1173 = vmatprep.subr.mxu0 %v1061
    %1174 = vmatpush1.msra.mxu0 %v1060
    %1175 = vmatprep.subr.mxu0 %v1065
    %1176 = vmatpush1.msra.mxu0 %v1064
    %1177 = vmatprep.subr.mxu0 %v1069
    %1178 = vmatpush1.msra.mxu0 %v1068
    %1179 = vmatprep.subr.mxu0 %v1073
    %1180 = vmatpush1.msra.mxu0 %v1072
    %1181 = vmatprep.subr.mxu0 %v1077
    %1182 = vmatpush1.msra.mxu0 %v1076
    %1183 = vmatprep.subr.mxu0 %v1081
    %1184 = vmatpush1.msra.mxu0 %v1080
    %1185 = vmatprep.subr.mxu0 0.0
    %1186 = vmatpush1.msra.mxu0 0.0
    %1187 = vmatprep.subr.mxu0 0.0
    %1188 = vmatpush1.msra.mxu0 0.0
    %1189 = vmatprep.subr.mxu0 0.0
    %1190 = vmatpush1.msra.mxu0 0.0
    %1191 = vmatprep.subr.mxu0 0.0
    %1192 = vmatpush1.msra.mxu0 0.0
    %1193 = vmatprep.subr.mxu0 0.0
    %1194 = vmatpush1.msra.mxu0 0.0
    %1195 = vmatprep.subr.mxu0 0.0
    %1196 = vmatpush1.msra.mxu0 0.0
    %1197 = vmatprep.subr.mxu0 0.0
    %1198 = vmatpush1.msra.mxu0 0.0
    %1199 = vmatprep.subr.mxu0 0.0
    %1200 = vmatpush1.msra.mxu0 0.0
    %1201 = vmatprep.subr.mxu0 0.0
    %1202 = vmatpush1.msra.mxu0 0.0
    %1203 = vmatprep.subr.mxu0 0.0
    %1204 = vmatpush1.msra.mxu0 0.0
    %1205 = vmatprep.subr.mxu0 0.0
    %1206 = vmatpush1.msra.mxu0 0.0
    %1207 = vmatprep.subr.mxu0 0.0
    %1208 = vmatpush1.msra.mxu0 0.0
    %1209 = vmatprep.subr.mxu0 0.0
    %1210 = vmatpush1.msra.mxu0 0.0
    %1211 = vmatprep.subr.mxu0 0.0
    %1212 = vmatpush1.msra.mxu0 0.0
    %1213 = vmatprep.subr.mxu0 0.0
    %1214 = vmatpush1.msra.mxu0 0.0
    %1215 = vmatprep.subr.mxu0 0.0
    %1216 = vmatpush1.msra.mxu0 0.0
    %1217 = vmatprep.mubr.f32.mxu0 0.0
    %1218 = vmatmul.mubr.f32.gmra.mrb[0].mxu0 %v1010
    %v1219 = vpop.f32.mrb[0].mxu0
    %v1220 = vadd.f32 0.0, %v1219
    %v1221 = vpop.f32.mrb[0].mxu0
    %v1222 = vadd.f32 0.0, %v1221
    %1223 = vdwg.mxu0
    %v1224 = vadd.f32 %v1014, %v1149
    %v1225 = vadd.f32 %v1015, %v1151
    %v1226 = vadd.f32 %v1016, %v1220
    %v1227 = vadd.f32 %v1017, %v1222
    %v1228 = vxor.u32 %v1224, 2147483648
    %v1229 = vxor.u32 %v1225, 2147483648
    %v1230 = vxor.u32 %v1226, 2147483648
    %v1231 = vmul.f32 %v1228, 1.442695
    %v1232 = vpow.pop %v1231
    %v1233 = vmul.f32 %v1229, 1.442695
    %v1234 = vpow.pop %v1233
    %v1235 = vmul.f32 %v1230, 1.442695
    %v1236 = vpow.pop %v1235
    %v1237 = vadd.f32 %v1232, 1.0
    %v1238 = vadd.f32 %v1234, 1.0
    %v1239 = vadd.f32 %v1236, 1.0
    %v1240 = vrcp.pop %v1237
    %v1241 = vmul.f32 1.0, %v1240
    %v1242 = vrcp.pop %v1238
    %v1243 = vmul.f32 1.0, %v1242
    %v1244 = vrcp.pop %v1239
    %v1245 = vmul.f32 1.0, %v1244
    %v1246 = vtanh.pop %v1227
    %v1247 = vmul.f32 %v1243, %v1008
    %v1248 = vmul.f32 %v1241, %v1246
    %v1249 = vadd.f32 %v1247, %v1248
    %v1250 = vtanh.pop %v1249
    %v1251 = vmul.f32 %v1245, %v1250
    %s1252 = scalar_lea.vmem [#allocation9], 32
    %1253 = vst [vmem:[%s1252] sm:$0xff] %v1251
    %s1254 = scalar_lea.vmem [#allocation4], 160
    %v1255 = vld [vmem:[%s1254] sm:$0xff]
    %v1256 = vld [vmem:[%s1254 + $0x8] sm:$0xff]
    %v1257 = vld [vmem:[%s1254 + $0x10] sm:$0xff]
    %v1258 = vld [vmem:[%s1254 + $0x18] sm:$0xff]
    %v1259 = vld [vmem:[#allocation7] sm:$0xff]
    %v1260 = vld [vmem:[#allocation7 + $0x8] sm:$0xff]
    %v1261 = vld [vmem:[#allocation7 + $0x10] sm:$0xff]
    %v1262 = vld [vmem:[#allocation7 + $0x18] sm:$0xff]
    %v1263 = vld [vmem:[#allocation7 + $0x20] sm:$0xff]
    %v1264 = vld [vmem:[#allocation7 + $0x28] sm:$0xff]
    %v1265 = vld [vmem:[#allocation7 + $0x30] sm:$0xff]
    %v1266 = vld [vmem:[#allocation7 + $0x38] sm:$0xff]
    %v1267 = vld [vmem:[#allocation7 + $0x40] sm:$0xff]
    %v1268 = vld [vmem:[#allocation7 + $0x48] sm:$0xff]
    %v1269 = vld [vmem:[#allocation7 + $0x50] sm:$0xff]
    %v1270 = vld [vmem:[#allocation7 + $0x58] sm:$0xff]
    %v1271 = vld [vmem:[#allocation7 + $0x60] sm:$0xff]
    %v1272 = vld [vmem:[#allocation7 + $0x68] sm:$0xff]
    %v1273 = vld [vmem:[#allocation7 + $0x70] sm:$0xff]
    %v1274 = vld [vmem:[#allocation7 + $0x78] sm:$0xff]
    %v1275 = vld [vmem:[#allocation7 + $0x80] sm:$0xff]
    %v1276 = vld [vmem:[#allocation7 + $0x88] sm:$0xff]
    %v1277 = vld [vmem:[#allocation7 + $0x90] sm:$0xff]
    %v1278 = vld [vmem:[#allocation7 + $0x98] sm:$0xff]
    %v1279 = vld [vmem:[#allocation7 + $0xa0] sm:$0xff]
    %v1280 = vld [vmem:[#allocation7 + $0xa8] sm:$0xff]
    %v1281 = vld [vmem:[#allocation7 + $0xb0] sm:$0xff]
    %v1282 = vld [vmem:[#allocation7 + $0xb8] sm:$0xff]
    %v1283 = vld [vmem:[#allocation7 + $0xc0] sm:$0xff]
    %v1284 = vld [vmem:[#allocation7 + $0xc8] sm:$0xff]
    %v1285 = vld [vmem:[#allocation7 + $0xd0] sm:$0xff]
    %v1286 = vld [vmem:[#allocation7 + $0xd8] sm:$0xff]
    %v1287 = vld [vmem:[#allocation7 + $0xe0] sm:$0xff]
    %v1288 = vld [vmem:[#allocation7 + $0xe8] sm:$0xff]
    %v1289 = vld [vmem:[#allocation7 + $0xf0] sm:$0xff]
    %v1290 = vld [vmem:[#allocation7 + $0xf8] sm:$0xff]
    %v1291 = vld [vmem:[#allocation7 + $0x100] sm:$0xff]
    %v1292 = vld [vmem:[#allocation7 + $0x108] sm:$0xff]
    %v1293 = vld [vmem:[#allocation7 + $0x110] sm:$0xff]
    %v1294 = vld [vmem:[#allocation7 + $0x118] sm:$0xff]
    %v1295 = vld [vmem:[#allocation7 + $0x120] sm:$0xff]
    %v1296 = vld [vmem:[#allocation7 + $0x128] sm:$0xff]
    %v1297 = vld [vmem:[#allocation7 + $0x130] sm:$0xff]
    %v1298 = vld [vmem:[#allocation7 + $0x138] sm:$0xff]
    %v1299 = vld [vmem:[#allocation7 + $0x140] sm:$0xff]
    %v1300 = vld [vmem:[#allocation7 + $0x148] sm:$0xff]
    %v1301 = vld [vmem:[#allocation7 + $0x150] sm:$0xff]
    %v1302 = vld [vmem:[#allocation7 + $0x158] sm:$0xff]
    %v1303 = vld [vmem:[#allocation7 + $0x160] sm:$0xff]
    %v1304 = vld [vmem:[#allocation7 + $0x168] sm:$0xff]
    %v1305 = vld [vmem:[#allocation7 + $0x170] sm:$0xff]
    %v1306 = vld [vmem:[#allocation7 + $0x178] sm:$0xff]
    %v1307 = vld [vmem:[#allocation7 + $0x180] sm:$0xff]
    %v1308 = vld [vmem:[#allocation7 + $0x188] sm:$0xff]
    %v1309 = vld [vmem:[#allocation7 + $0x190] sm:$0xff]
    %v1310 = vld [vmem:[#allocation7 + $0x198] sm:$0xff]
    %v1311 = vld [vmem:[#allocation7 + $0x1a0] sm:$0xff]
    %v1312 = vld [vmem:[#allocation7 + $0x1a8] sm:$0xff]
    %v1313 = vld [vmem:[#allocation7 + $0x1b0] sm:$0xff]
    %v1314 = vld [vmem:[#allocation7 + $0x1b8] sm:$0xff]
    %v1315 = vld [vmem:[#allocation7 + $0x1c0] sm:$0xff]
    %v1316 = vld [vmem:[#allocation7 + $0x1c8] sm:$0xff]
    %v1317 = vld [vmem:[#allocation7 + $0x1d0] sm:$0xff]
    %v1318 = vld [vmem:[#allocation7 + $0x1d8] sm:$0xff]
    %v1319 = vld [vmem:[#allocation7 + $0x1e0] sm:$0xff]
    %v1320 = vld [vmem:[#allocation7 + $0x1e8] sm:$0xff]
    %v1321 = vld [vmem:[#allocation7 + $0x1f0] sm:$0xff]
    %v1322 = vld [vmem:[#allocation7 + $0x1f8] sm:$0xff]
    %1323 = vmatprep.subr.mxu0 %v1260
    %1324 = vmatpush1.msra.mxu0 %v1259
    %1325 = vmatprep.subr.mxu0 %v1264
    %1326 = vmatpush1.msra.mxu0 %v1263
    %1327 = vmatprep.subr.mxu0 %v1268
    %1328 = vmatpush1.msra.mxu0 %v1267
    %1329 = vmatprep.subr.mxu0 %v1272
    %1330 = vmatpush1.msra.mxu0 %v1271
    %1331 = vmatprep.subr.mxu0 %v1276
    %1332 = vmatpush1.msra.mxu0 %v1275
    %1333 = vmatprep.subr.mxu0 %v1280
    %1334 = vmatpush1.msra.mxu0 %v1279
    %1335 = vmatprep.subr.mxu0 %v1284
    %1336 = vmatpush1.msra.mxu0 %v1283
    %1337 = vmatprep.subr.mxu0 %v1288
    %1338 = vmatpush1.msra.mxu0 %v1287
    %1339 = vmatprep.subr.mxu0 %v1292
    %1340 = vmatpush1.msra.mxu0 %v1291
    %1341 = vmatprep.subr.mxu0 %v1296
    %1342 = vmatpush1.msra.mxu0 %v1295
    %1343 = vmatprep.subr.mxu0 %v1300
    %1344 = vmatpush1.msra.mxu0 %v1299
    %1345 = vmatprep.subr.mxu0 %v1304
    %1346 = vmatpush1.msra.mxu0 %v1303
    %1347 = vmatprep.subr.mxu0 %v1308
    %1348 = vmatpush1.msra.mxu0 %v1307
    %1349 = vmatprep.subr.mxu0 %v1312
    %1350 = vmatpush1.msra.mxu0 %v1311
    %1351 = vmatprep.subr.mxu0 %v1316
    %1352 = vmatpush1.msra.mxu0 %v1315
    %1353 = vmatprep.subr.mxu0 %v1320
    %1354 = vmatpush1.msra.mxu0 %v1319
    %1355 = vmatprep.subr.mxu0 0.0
    %1356 = vmatpush1.msra.mxu0 0.0
    %1357 = vmatprep.subr.mxu0 0.0
    %1358 = vmatpush1.msra.mxu0 0.0
    %1359 = vmatprep.subr.mxu0 0.0
    %1360 = vmatpush1.msra.mxu0 0.0
    %1361 = vmatprep.subr.mxu0 0.0
    %1362 = vmatpush1.msra.mxu0 0.0
    %1363 = vmatprep.subr.mxu0 0.0
    %1364 = vmatpush1.msra.mxu0 0.0
    %1365 = vmatprep.subr.mxu0 0.0
    %1366 = vmatpush1.msra.mxu0 0.0
    %1367 = vmatprep.subr.mxu0 0.0
    %1368 = vmatpush1.msra.mxu0 0.0
    %1369 = vmatprep.subr.mxu0 0.0
    %1370 = vmatpush1.msra.mxu0 0.0
    %1371 = vmatprep.subr.mxu0 0.0
    %1372 = vmatpush1.msra.mxu0 0.0
    %1373 = vmatprep.subr.mxu0 0.0
    %1374 = vmatpush1.msra.mxu0 0.0
    %1375 = vmatprep.subr.mxu0 0.0
    %1376 = vmatpush1.msra.mxu0 0.0
    %1377 = vmatprep.subr.mxu0 0.0
    %1378 = vmatpush1.msra.mxu0 0.0
    %1379 = vmatprep.subr.mxu0 0.0
    %1380 = vmatpush1.msra.mxu0 0.0
    %1381 = vmatprep.subr.mxu0 0.0
    %1382 = vmatpush1.msra.mxu0 0.0
    %1383 = vmatprep.subr.mxu0 0.0
    %1384 = vmatpush1.msra.mxu0 0.0
    %1385 = vmatprep.subr.mxu0 0.0
    %1386 = vmatpush1.msra.mxu0 0.0
    %1387 = vmatprep.mubr.f32.mxu0 0.0
    %1388 = vmatmul.mubr.f32.gmra.mrb[0].mxu0 %v1251
    %v1389 = vpop.f32.mrb[0].mxu0
    %v1390 = vadd.f32 0.0, %v1389
    %v1391 = vpop.f32.mrb[0].mxu0
    %v1392 = vadd.f32 0.0, %v1391
    %1393 = vdwg.mxu0
    %1394 = vmatprep.subr.mxu0 %v1262
    %1395 = vmatpush1.msra.mxu0 %v1261
    %1396 = vmatprep.subr.mxu0 %v1266
    %1397 = vmatpush1.msra.mxu0 %v1265
    %1398 = vmatprep.subr.mxu0 %v1270
    %1399 = vmatpush1.msra.mxu0 %v1269
    %1400 = vmatprep.subr.mxu0 %v1274
    %1401 = vmatpush1.msra.mxu0 %v1273
    %1402 = vmatprep.subr.mxu0 %v1278
    %1403 = vmatpush1.msra.mxu0 %v1277
    %1404 = vmatprep.subr.mxu0 %v1282
    %1405 = vmatpush1.msra.mxu0 %v1281
    %1406 = vmatprep.subr.mxu0 %v1286
    %1407 = vmatpush1.msra.mxu0 %v1285
    %1408 = vmatprep.subr.mxu0 %v1290
    %1409 = vmatpush1.msra.mxu0 %v1289
    %1410 = vmatprep.subr.mxu0 %v1294
    %1411 = vmatpush1.msra.mxu0 %v1293
    %1412 = vmatprep.subr.mxu0 %v1298
    %1413 = vmatpush1.msra.mxu0 %v1297
    %1414 = vmatprep.subr.mxu0 %v1302
    %1415 = vmatpush1.msra.mxu0 %v1301
    %1416 = vmatprep.subr.mxu0 %v1306
    %1417 = vmatpush1.msra.mxu0 %v1305
    %1418 = vmatprep.subr.mxu0 %v1310
    %1419 = vmatpush1.msra.mxu0 %v1309
    %1420 = vmatprep.subr.mxu0 %v1314
    %1421 = vmatpush1.msra.mxu0 %v1313
    %1422 = vmatprep.subr.mxu0 %v1318
    %1423 = vmatpush1.msra.mxu0 %v1317
    %1424 = vmatprep.subr.mxu0 %v1322
    %1425 = vmatpush1.msra.mxu0 %v1321
    %1426 = vmatprep.subr.mxu0 0.0
    %1427 = vmatpush1.msra.mxu0 0.0
    %1428 = vmatprep.subr.mxu0 0.0
    %1429 = vmatpush1.msra.mxu0 0.0
    %1430 = vmatprep.subr.mxu0 0.0
    %1431 = vmatpush1.msra.mxu0 0.0
    %1432 = vmatprep.subr.mxu0 0.0
    %1433 = vmatpush1.msra.mxu0 0.0
    %1434 = vmatprep.subr.mxu0 0.0
    %1435 = vmatpush1.msra.mxu0 0.0
    %1436 = vmatprep.subr.mxu0 0.0
    %1437 = vmatpush1.msra.mxu0 0.0
    %1438 = vmatprep.subr.mxu0 0.0
    %1439 = vmatpush1.msra.mxu0 0.0
    %1440 = vmatprep.subr.mxu0 0.0
    %1441 = vmatpush1.msra.mxu0 0.0
    %1442 = vmatprep.subr.mxu0 0.0
    %1443 = vmatpush1.msra.mxu0 0.0
    %1444 = vmatprep.subr.mxu0 0.0
    %1445 = vmatpush1.msra.mxu0 0.0
    %1446 = vmatprep.subr.mxu0 0.0
    %1447 = vmatpush1.msra.mxu0 0.0
    %1448 = vmatprep.subr.mxu0 0.0
    %1449 = vmatpush1.msra.mxu0 0.0
    %1450 = vmatprep.subr.mxu0 0.0
    %1451 = vmatpush1.msra.mxu0 0.0
    %1452 = vmatprep.subr.mxu0 0.0
    %1453 = vmatpush1.msra.mxu0 0.0
    %1454 = vmatprep.subr.mxu0 0.0
    %1455 = vmatpush1.msra.mxu0 0.0
    %1456 = vmatprep.subr.mxu0 0.0
    %1457 = vmatpush1.msra.mxu0 0.0
    %1458 = vmatprep.mubr.f32.mxu0 0.0
    %1459 = vmatmul.mubr.f32.gmra.mrb[0].mxu0 %v1251
    %v1460 = vpop.f32.mrb[0].mxu0
    %v1461 = vadd.f32 0.0, %v1460
    %v1462 = vpop.f32.mrb[0].mxu0
    %v1463 = vadd.f32 0.0, %v1462
    %1464 = vdwg.mxu0
    %v1465 = vadd.f32 %v1255, %v1390
    %v1466 = vadd.f32 %v1256, %v1392
    %v1467 = vadd.f32 %v1257, %v1461
    %v1468 = vadd.f32 %v1258, %v1463
    %v1469 = vxor.u32 %v1465, 2147483648
    %v1470 = vxor.u32 %v1466, 2147483648
    %v1471 = vxor.u32 %v1467, 2147483648
    %v1472 = vmul.f32 %v1469, 1.442695
    %v1473 = vpow.pop %v1472
    %v1474 = vmul.f32 %v1470, 1.442695
    %v1475 = vpow.pop %v1474
    %v1476 = vmul.f32 %v1471, 1.442695
    %v1477 = vpow.pop %v1476
    %v1478 = vadd.f32 %v1473, 1.0
    %v1479 = vadd.f32 %v1475, 1.0
    %v1480 = vadd.f32 %v1477, 1.0
    %v1481 = vrcp.pop %v1478
    %v1482 = vmul.f32 1.0, %v1481
    %v1483 = vrcp.pop %v1479
    %v1484 = vmul.f32 1.0, %v1483
    %v1485 = vrcp.pop %v1480
    %v1486 = vmul.f32 1.0, %v1485
    %v1487 = vtanh.pop %v1468
    %v1488 = vmul.f32 %v1484, %v1249
    %v1489 = vmul.f32 %v1482, %v1487
    %v1490 = vadd.f32 %v1488, %v1489
    %v1491 = vtanh.pop %v1490
    %v1492 = vmul.f32 %v1486, %v1491
    %s1493 = scalar_lea.vmem [#allocation9], 40
    %1494 = vst [vmem:[%s1493] sm:$0xff] %v1492
    %s1495 = scalar_lea.vmem [#allocation4], 192
    %v1496 = vld [vmem:[%s1495] sm:$0xff]
    %v1497 = vld [vmem:[%s1495 + $0x8] sm:$0xff]
    %v1498 = vld [vmem:[%s1495 + $0x10] sm:$0xff]
    %v1499 = vld [vmem:[%s1495 + $0x18] sm:$0xff]
    %v1500 = vld [vmem:[#allocation7] sm:$0xff]
    %v1501 = vld [vmem:[#allocation7 + $0x8] sm:$0xff]
    %v1502 = vld [vmem:[#allocation7 + $0x10] sm:$0xff]
    %v1503 = vld [vmem:[#allocation7 + $0x18] sm:$0xff]
    %v1504 = vld [vmem:[#allocation7 + $0x20] sm:$0xff]
    %v1505 = vld [vmem:[#allocation7 + $0x28] sm:$0xff]
    %v1506 = vld [vmem:[#allocation7 + $0x30] sm:$0xff]
    %v1507 = vld [vmem:[#allocation7 + $0x38] sm:$0xff]
    %v1508 = vld [vmem:[#allocation7 + $0x40] sm:$0xff]
    %v1509 = vld [vmem:[#allocation7 + $0x48] sm:$0xff]
    %v1510 = vld [vmem:[#allocation7 + $0x50] sm:$0xff]
    %v1511 = vld [vmem:[#allocation7 + $0x58] sm:$0xff]
    %v1512 = vld [vmem:[#allocation7 + $0x60] sm:$0xff]
    %v1513 = vld [vmem:[#allocation7 + $0x68] sm:$0xff]
    %v1514 = vld [vmem:[#allocation7 + $0x70] sm:$0xff]
    %v1515 = vld [vmem:[#allocation7 + $0x78] sm:$0xff]
    %v1516 = vld [vmem:[#allocation7 + $0x80] sm:$0xff]
    %v1517 = vld [vmem:[#allocation7 + $0x88] sm:$0xff]
    %v1518 = vld [vmem:[#allocation7 + $0x90] sm:$0xff]
    %v1519 = vld [vmem:[#allocation7 + $0x98] sm:$0xff]
    %v1520 = vld [vmem:[#allocation7 + $0xa0] sm:$0xff]
    %v1521 = vld [vmem:[#allocation7 + $0xa8] sm:$0xff]
    %v1522 = vld [vmem:[#allocation7 + $0xb0] sm:$0xff]
    %v1523 = vld [vmem:[#allocation7 + $0xb8] sm:$0xff]
    %v1524 = vld [vmem:[#allocation7 + $0xc0] sm:$0xff]
    %v1525 = vld [vmem:[#allocation7 + $0xc8] sm:$0xff]
    %v1526 = vld [vmem:[#allocation7 + $0xd0] sm:$0xff]
    %v1527 = vld [vmem:[#allocation7 + $0xd8] sm:$0xff]
    %v1528 = vld [vmem:[#allocation7 + $0xe0] sm:$0xff]
    %v1529 = vld [vmem:[#allocation7 + $0xe8] sm:$0xff]
    %v1530 = vld [vmem:[#allocation7 + $0xf0] sm:$0xff]
    %v1531 = vld [vmem:[#allocation7 + $0xf8] sm:$0xff]
    %v1532 = vld [vmem:[#allocation7 + $0x100] sm:$0xff]
    %v1533 = vld [vmem:[#allocation7 + $0x108] sm:$0xff]
    %v1534 = vld [vmem:[#allocation7 + $0x110] sm:$0xff]
    %v1535 = vld [vmem:[#allocation7 + $0x118] sm:$0xff]
    %v1536 = vld [vmem:[#allocation7 + $0x120] sm:$0xff]
    %v1537 = vld [vmem:[#allocation7 + $0x128] sm:$0xff]
    %v1538 = vld [vmem:[#allocation7 + $0x130] sm:$0xff]
    %v1539 = vld [vmem:[#allocation7 + $0x138] sm:$0xff]
    %v1540 = vld [vmem:[#allocation7 + $0x140] sm:$0xff]
    %v1541 = vld [vmem:[#allocation7 + $0x148] sm:$0xff]
    %v1542 = vld [vmem:[#allocation7 + $0x150] sm:$0xff]
    %v1543 = vld [vmem:[#allocation7 + $0x158] sm:$0xff]
    %v1544 = vld [vmem:[#allocation7 + $0x160] sm:$0xff]
    %v1545 = vld [vmem:[#allocation7 + $0x168] sm:$0xff]
    %v1546 = vld [vmem:[#allocation7 + $0x170] sm:$0xff]
    %v1547 = vld [vmem:[#allocation7 + $0x178] sm:$0xff]
    %v1548 = vld [vmem:[#allocation7 + $0x180] sm:$0xff]
    %v1549 = vld [vmem:[#allocation7 + $0x188] sm:$0xff]
    %v1550 = vld [vmem:[#allocation7 + $0x190] sm:$0xff]
    %v1551 = vld [vmem:[#allocation7 + $0x198] sm:$0xff]
    %v1552 = vld [vmem:[#allocation7 + $0x1a0] sm:$0xff]
    %v1553 = vld [vmem:[#allocation7 + $0x1a8] sm:$0xff]
    %v1554 = vld [vmem:[#allocation7 + $0x1b0] sm:$0xff]
    %v1555 = vld [vmem:[#allocation7 + $0x1b8] sm:$0xff]
    %v1556 = vld [vmem:[#allocation7 + $0x1c0] sm:$0xff]
    %v1557 = vld [vmem:[#allocation7 + $0x1c8] sm:$0xff]
    %v1558 = vld [vmem:[#allocation7 + $0x1d0] sm:$0xff]
    %v1559 = vld [vmem:[#allocation7 + $0x1d8] sm:$0xff]
    %v1560 = vld [vmem:[#allocation7 + $0x1e0] sm:$0xff]
    %v1561 = vld [vmem:[#allocation7 + $0x1e8] sm:$0xff]
    %v1562 = vld [vmem:[#allocation7 + $0x1f0] sm:$0xff]
    %v1563 = vld [vmem:[#allocation7 + $0x1f8] sm:$0xff]
    %1564 = vmatprep.subr.mxu0 %v1501
    %1565 = vmatpush1.msra.mxu0 %v1500
    %1566 = vmatprep.subr.mxu0 %v1505
    %1567 = vmatpush1.msra.mxu0 %v1504
    %1568 = vmatprep.subr.mxu0 %v1509
    %1569 = vmatpush1.msra.mxu0 %v1508
    %1570 = vmatprep.subr.mxu0 %v1513
    %1571 = vmatpush1.msra.mxu0 %v1512
    %1572 = vmatprep.subr.mxu0 %v1517
    %1573 = vmatpush1.msra.mxu0 %v1516
    %1574 = vmatprep.subr.mxu0 %v1521
    %1575 = vmatpush1.msra.mxu0 %v1520
    %1576 = vmatprep.subr.mxu0 %v1525
    %1577 = vmatpush1.msra.mxu0 %v1524
    %1578 = vmatprep.subr.mxu0 %v1529
    %1579 = vmatpush1.msra.mxu0 %v1528
    %1580 = vmatprep.subr.mxu0 %v1533
    %1581 = vmatpush1.msra.mxu0 %v1532
    %1582 = vmatprep.subr.mxu0 %v1537
    %1583 = vmatpush1.msra.mxu0 %v1536
    %1584 = vmatprep.subr.mxu0 %v1541
    %1585 = vmatpush1.msra.mxu0 %v1540
    %1586 = vmatprep.subr.mxu0 %v1545
    %1587 = vmatpush1.msra.mxu0 %v1544
    %1588 = vmatprep.subr.mxu0 %v1549
    %1589 = vmatpush1.msra.mxu0 %v1548
    %1590 = vmatprep.subr.mxu0 %v1553
    %1591 = vmatpush1.msra.mxu0 %v1552
    %1592 = vmatprep.subr.mxu0 %v1557
    %1593 = vmatpush1.msra.mxu0 %v1556
    %1594 = vmatprep.subr.mxu0 %v1561
    %1595 = vmatpush1.msra.mxu0 %v1560
    %1596 = vmatprep.subr.mxu0 0.0
    %1597 = vmatpush1.msra.mxu0 0.0
    %1598 = vmatprep.subr.mxu0 0.0
    %1599 = vmatpush1.msra.mxu0 0.0
    %1600 = vmatprep.subr.mxu0 0.0
    %1601 = vmatpush1.msra.mxu0 0.0
    %1602 = vmatprep.subr.mxu0 0.0
    %1603 = vmatpush1.msra.mxu0 0.0
    %1604 = vmatprep.subr.mxu0 0.0
    %1605 = vmatpush1.msra.mxu0 0.0
    %1606 = vmatprep.subr.mxu0 0.0
    %1607 = vmatpush1.msra.mxu0 0.0
    %1608 = vmatprep.subr.mxu0 0.0
    %1609 = vmatpush1.msra.mxu0 0.0
    %1610 = vmatprep.subr.mxu0 0.0
    %1611 = vmatpush1.msra.mxu0 0.0
    %1612 = vmatprep.subr.mxu0 0.0
    %1613 = vmatpush1.msra.mxu0 0.0
    %1614 = vmatprep.subr.mxu0 0.0
    %1615 = vmatpush1.msra.mxu0 0.0
    %1616 = vmatprep.subr.mxu0 0.0
    %1617 = vmatpush1.msra.mxu0 0.0
    %1618 = vmatprep.subr.mxu0 0.0
    %1619 = vmatpush1.msra.mxu0 0.0
    %1620 = vmatprep.subr.mxu0 0.0
    %1621 = vmatpush1.msra.mxu0 0.0
    %1622 = vmatprep.subr.mxu0 0.0
    %1623 = vmatpush1.msra.mxu0 0.0
    %1624 = vmatprep.subr.mxu0 0.0
    %1625 = vmatpush1.msra.mxu0 0.0
    %1626 = vmatprep.subr.mxu0 0.0
    %1627 = vmatpush1.msra.mxu0 0.0
    %1628 = vmatprep.mubr.f32.mxu0 0.0
    %1629 = vmatmul.mubr.f32.gmra.mrb[0].mxu0 %v1492
    %v1630 = vpop.f32.mrb[0].mxu0
    %v1631 = vadd.f32 0.0, %v1630
    %v1632 = vpop.f32.mrb[0].mxu0
    %v1633 = vadd.f32 0.0, %v1632
    %1634 = vdwg.mxu0
    %1635 = vmatprep.subr.mxu0 %v1503
    %1636 = vmatpush1.msra.mxu0 %v1502
    %1637 = vmatprep.subr.mxu0 %v1507
    %1638 = vmatpush1.msra.mxu0 %v1506
    %1639 = vmatprep.subr.mxu0 %v1511
    %1640 = vmatpush1.msra.mxu0 %v1510
    %1641 = vmatprep.subr.mxu0 %v1515
    %1642 = vmatpush1.msra.mxu0 %v1514
    %1643 = vmatprep.subr.mxu0 %v1519
    %1644 = vmatpush1.msra.mxu0 %v1518
    %1645 = vmatprep.subr.mxu0 %v1523
    %1646 = vmatpush1.msra.mxu0 %v1522
    %1647 = vmatprep.subr.mxu0 %v1527
    %1648 = vmatpush1.msra.mxu0 %v1526
    %1649 = vmatprep.subr.mxu0 %v1531
    %1650 = vmatpush1.msra.mxu0 %v1530
    %1651 = vmatprep.subr.mxu0 %v1535
    %1652 = vmatpush1.msra.mxu0 %v1534
    %1653 = vmatprep.subr.mxu0 %v1539
    %1654 = vmatpush1.msra.mxu0 %v1538
    %1655 = vmatprep.subr.mxu0 %v1543
    %1656 = vmatpush1.msra.mxu0 %v1542
    %1657 = vmatprep.subr.mxu0 %v1547
    %1658 = vmatpush1.msra.mxu0 %v1546
    %1659 = vmatprep.subr.mxu0 %v1551
    %1660 = vmatpush1.msra.mxu0 %v1550
    %1661 = vmatprep.subr.mxu0 %v1555
    %1662 = vmatpush1.msra.mxu0 %v1554
    %1663 = vmatprep.subr.mxu0 %v1559
    %1664 = vmatpush1.msra.mxu0 %v1558
    %1665 = vmatprep.subr.mxu0 %v1563
    %1666 = vmatpush1.msra.mxu0 %v1562
    %1667 = vmatprep.subr.mxu0 0.0
    %1668 = vmatpush1.msra.mxu0 0.0
    %1669 = vmatprep.subr.mxu0 0.0
    %1670 = vmatpush1.msra.mxu0 0.0
    %1671 = vmatprep.subr.mxu0 0.0
    %1672 = vmatpush1.msra.mxu0 0.0
    %1673 = vmatprep.subr.mxu0 0.0
    %1674 = vmatpush1.msra.mxu0 0.0
    %1675 = vmatprep.subr.mxu0 0.0
    %1676 = vmatpush1.msra.mxu0 0.0
    %1677 = vmatprep.subr.mxu0 0.0
    %1678 = vmatpush1.msra.mxu0 0.0
    %1679 = vmatprep.subr.mxu0 0.0
    %1680 = vmatpush1.msra.mxu0 0.0
    %1681 = vmatprep.subr.mxu0 0.0
    %1682 = vmatpush1.msra.mxu0 0.0
    %1683 = vmatprep.subr.mxu0 0.0
    %1684 = vmatpush1.msra.mxu0 0.0
    %1685 = vmatprep.subr.mxu0 0.0
    %1686 = vmatpush1.msra.mxu0 0.0
    %1687 = vmatprep.subr.mxu0 0.0
    %1688 = vmatpush1.msra.mxu0 0.0
    %1689 = vmatprep.subr.mxu0 0.0
    %1690 = vmatpush1.msra.mxu0 0.0
    %1691 = vmatprep.subr.mxu0 0.0
    %1692 = vmatpush1.msra.mxu0 0.0
    %1693 = vmatprep.subr.mxu0 0.0
    %1694 = vmatpush1.msra.mxu0 0.0
    %1695 = vmatprep.subr.mxu0 0.0
    %1696 = vmatpush1.msra.mxu0 0.0
    %1697 = vmatprep.subr.mxu0 0.0
    %1698 = vmatpush1.msra.mxu0 0.0
    %1699 = vmatprep.mubr.f32.mxu0 0.0
    %1700 = vmatmul.mubr.f32.gmra.mrb[0].mxu0 %v1492
    %v1701 = vpop.f32.mrb[0].mxu0
    %v1702 = vadd.f32 0.0, %v1701
    %v1703 = vpop.f32.mrb[0].mxu0
    %v1704 = vadd.f32 0.0, %v1703
    %1705 = vdwg.mxu0
    %v1706 = vadd.f32 %v1496, %v1631
    %v1707 = vadd.f32 %v1497, %v1633
    %v1708 = vadd.f32 %v1498, %v1702
    %v1709 = vadd.f32 %v1499, %v1704
    %v1710 = vxor.u32 %v1706, 2147483648
    %v1711 = vxor.u32 %v1707, 2147483648
    %v1712 = vxor.u32 %v1708, 2147483648
    %v1713 = vmul.f32 %v1710, 1.442695
    %v1714 = vpow.pop %v1713
    %v1715 = vmul.f32 %v1711, 1.442695
    %v1716 = vpow.pop %v1715
    %v1717 = vmul.f32 %v1712, 1.442695
    %v1718 = vpow.pop %v1717
    %v1719 = vadd.f32 %v1714, 1.0
    %v1720 = vadd.f32 %v1716, 1.0
    %v1721 = vadd.f32 %v1718, 1.0
    %v1722 = vrcp.pop %v1719
    %v1723 = vmul.f32 1.0, %v1722
    %v1724 = vrcp.pop %v1720
    %v1725 = vmul.f32 1.0, %v1724
    %v1726 = vrcp.pop %v1721
    %v1727 = vmul.f32 1.0, %v1726
    %v1728 = vtanh.pop %v1709
    %v1729 = vmul.f32 %v1725, %v1490
    %v1730 = vmul.f32 %v1723, %v1728
    %v1731 = vadd.f32 %v1729, %v1730
    %v1732 = vtanh.pop %v1731
    %v1733 = vmul.f32 %v1727, %v1732
    %s1734 = scalar_lea.vmem [#allocation9], 48
    %1735 = vst [vmem:[%s1734] sm:$0xff] %v1733
    %s1736 = scalar_lea.vmem [#allocation4], 224
    %v1737 = vld [vmem:[%s1736] sm:$0xff]
    %v1738 = vld [vmem:[%s1736 + $0x8] sm:$0xff]
    %v1739 = vld [vmem:[%s1736 + $0x10] sm:$0xff]
    %v1740 = vld [vmem:[%s1736 + $0x18] sm:$0xff]
    %v1741 = vld [vmem:[#allocation7] sm:$0xff]
    %v1742 = vld [vmem:[#allocation7 + $0x8] sm:$0xff]
    %v1743 = vld [vmem:[#allocation7 + $0x10] sm:$0xff]
    %v1744 = vld [vmem:[#allocation7 + $0x18] sm:$0xff]
    %v1745 = vld [vmem:[#allocation7 + $0x20] sm:$0xff]
    %v1746 = vld [vmem:[#allocation7 + $0x28] sm:$0xff]
    %v1747 = vld [vmem:[#allocation7 + $0x30] sm:$0xff]
    %v1748 = vld [vmem:[#allocation7 + $0x38] sm:$0xff]
    %v1749 = vld [vmem:[#allocation7 + $0x40] sm:$0xff]
    %v1750 = vld [vmem:[#allocation7 + $0x48] sm:$0xff]
    %v1751 = vld [vmem:[#allocation7 + $0x50] sm:$0xff]
    %v1752 = vld [vmem:[#allocation7 + $0x58] sm:$0xff]
    %v1753 = vld [vmem:[#allocation7 + $0x60] sm:$0xff]
    %v1754 = vld [vmem:[#allocation7 + $0x68] sm:$0xff]
    %v1755 = vld [vmem:[#allocation7 + $0x70] sm:$0xff]
    %v1756 = vld [vmem:[#allocation7 + $0x78] sm:$0xff]
    %v1757 = vld [vmem:[#allocation7 + $0x80] sm:$0xff]
    %v1758 = vld [vmem:[#allocation7 + $0x88] sm:$0xff]
    %v1759 = vld [vmem:[#allocation7 + $0x90] sm:$0xff]
    %v1760 = vld [vmem:[#allocation7 + $0x98] sm:$0xff]
    %v1761 = vld [vmem:[#allocation7 + $0xa0] sm:$0xff]
    %v1762 = vld [vmem:[#allocation7 + $0xa8] sm:$0xff]
    %v1763 = vld [vmem:[#allocation7 + $0xb0] sm:$0xff]
    %v1764 = vld [vmem:[#allocation7 + $0xb8] sm:$0xff]
    %v1765 = vld [vmem:[#allocation7 + $0xc0] sm:$0xff]
    %v1766 = vld [vmem:[#allocation7 + $0xc8] sm:$0xff]
    %v1767 = vld [vmem:[#allocation7 + $0xd0] sm:$0xff]
    %v1768 = vld [vmem:[#allocation7 + $0xd8] sm:$0xff]
    %v1769 = vld [vmem:[#allocation7 + $0xe0] sm:$0xff]
    %v1770 = vld [vmem:[#allocation7 + $0xe8] sm:$0xff]
    %v1771 = vld [vmem:[#allocation7 + $0xf0] sm:$0xff]
    %v1772 = vld [vmem:[#allocation7 + $0xf8] sm:$0xff]
    %v1773 = vld [vmem:[#allocation7 + $0x100] sm:$0xff]
    %v1774 = vld [vmem:[#allocation7 + $0x108] sm:$0xff]
    %v1775 = vld [vmem:[#allocation7 + $0x110] sm:$0xff]
    %v1776 = vld [vmem:[#allocation7 + $0x118] sm:$0xff]
    %v1777 = vld [vmem:[#allocation7 + $0x120] sm:$0xff]
    %v1778 = vld [vmem:[#allocation7 + $0x128] sm:$0xff]
    %v1779 = vld [vmem:[#allocation7 + $0x130] sm:$0xff]
    %v1780 = vld [vmem:[#allocation7 + $0x138] sm:$0xff]
    %v1781 = vld [vmem:[#allocation7 + $0x140] sm:$0xff]
    %v1782 = vld [vmem:[#allocation7 + $0x148] sm:$0xff]
    %v1783 = vld [vmem:[#allocation7 + $0x150] sm:$0xff]
    %v1784 = vld [vmem:[#allocation7 + $0x158] sm:$0xff]
    %v1785 = vld [vmem:[#allocation7 + $0x160] sm:$0xff]
    %v1786 = vld [vmem:[#allocation7 + $0x168] sm:$0xff]
    %v1787 = vld [vmem:[#allocation7 + $0x170] sm:$0xff]
    %v1788 = vld [vmem:[#allocation7 + $0x178] sm:$0xff]
    %v1789 = vld [vmem:[#allocation7 + $0x180] sm:$0xff]
    %v1790 = vld [vmem:[#allocation7 + $0x188] sm:$0xff]
    %v1791 = vld [vmem:[#allocation7 + $0x190] sm:$0xff]
    %v1792 = vld [vmem:[#allocation7 + $0x198] sm:$0xff]
    %v1793 = vld [vmem:[#allocation7 + $0x1a0] sm:$0xff]
    %v1794 = vld [vmem:[#allocation7 + $0x1a8] sm:$0xff]
    %v1795 = vld [vmem:[#allocation7 + $0x1b0] sm:$0xff]
    %v1796 = vld [vmem:[#allocation7 + $0x1b8] sm:$0xff]
    %v1797 = vld [vmem:[#allocation7 + $0x1c0] sm:$0xff]
    %v1798 = vld [vmem:[#allocation7 + $0x1c8] sm:$0xff]
    %v1799 = vld [vmem:[#allocation7 + $0x1d0] sm:$0xff]
    %v1800 = vld [vmem:[#allocation7 + $0x1d8] sm:$0xff]
    %v1801 = vld [vmem:[#allocation7 + $0x1e0] sm:$0xff]
    %v1802 = vld [vmem:[#allocation7 + $0x1e8] sm:$0xff]
    %v1803 = vld [vmem:[#allocation7 + $0x1f0] sm:$0xff]
    %v1804 = vld [vmem:[#allocation7 + $0x1f8] sm:$0xff]
    %1805 = vmatprep.subr.mxu0 %v1742
    %1806 = vmatpush1.msra.mxu0 %v1741
    %1807 = vmatprep.subr.mxu0 %v1746
    %1808 = vmatpush1.msra.mxu0 %v1745
    %1809 = vmatprep.subr.mxu0 %v1750
    %1810 = vmatpush1.msra.mxu0 %v1749
    %1811 = vmatprep.subr.mxu0 %v1754
    %1812 = vmatpush1.msra.mxu0 %v1753
    %1813 = vmatprep.subr.mxu0 %v1758
    %1814 = vmatpush1.msra.mxu0 %v1757
    %1815 = vmatprep.subr.mxu0 %v1762
    %1816 = vmatpush1.msra.mxu0 %v1761
    %1817 = vmatprep.subr.mxu0 %v1766
    %1818 = vmatpush1.msra.mxu0 %v1765
    %1819 = vmatprep.subr.mxu0 %v1770
    %1820 = vmatpush1.msra.mxu0 %v1769
    %1821 = vmatprep.subr.mxu0 %v1774
    %1822 = vmatpush1.msra.mxu0 %v1773
    %1823 = vmatprep.subr.mxu0 %v1778
    %1824 = vmatpush1.msra.mxu0 %v1777
    %1825 = vmatprep.subr.mxu0 %v1782
    %1826 = vmatpush1.msra.mxu0 %v1781
    %1827 = vmatprep.subr.mxu0 %v1786
    %1828 = vmatpush1.msra.mxu0 %v1785
    %1829 = vmatprep.subr.mxu0 %v1790
    %1830 = vmatpush1.msra.mxu0 %v1789
    %1831 = vmatprep.subr.mxu0 %v1794
    %1832 = vmatpush1.msra.mxu0 %v1793
    %1833 = vmatprep.subr.mxu0 %v1798
    %1834 = vmatpush1.msra.mxu0 %v1797
    %1835 = vmatprep.subr.mxu0 %v1802
    %1836 = vmatpush1.msra.mxu0 %v1801
    %1837 = vmatprep.subr.mxu0 0.0
    %1838 = vmatpush1.msra.mxu0 0.0
    %1839 = vmatprep.subr.mxu0 0.0
    %1840 = vmatpush1.msra.mxu0 0.0
    %1841 = vmatprep.subr.mxu0 0.0
    %1842 = vmatpush1.msra.mxu0 0.0
    %1843 = vmatprep.subr.mxu0 0.0
    %1844 = vmatpush1.msra.mxu0 0.0
    %1845 = vmatprep.subr.mxu0 0.0
    %1846 = vmatpush1.msra.mxu0 0.0
    %1847 = vmatprep.subr.mxu0 0.0
    %1848 = vmatpush1.msra.mxu0 0.0
    %1849 = vmatprep.subr.mxu0 0.0
    %1850 = vmatpush1.msra.mxu0 0.0
    %1851 = vmatprep.subr.mxu0 0.0
    %1852 = vmatpush1.msra.mxu0 0.0
    %1853 = vmatprep.subr.mxu0 0.0
    %1854 = vmatpush1.msra.mxu0 0.0
    %1855 = vmatprep.subr.mxu0 0.0
    %1856 = vmatpush1.msra.mxu0 0.0
    %1857 = vmatprep.subr.mxu0 0.0
    %1858 = vmatpush1.msra.mxu0 0.0
    %1859 = vmatprep.subr.mxu0 0.0
    %1860 = vmatpush1.msra.mxu0 0.0
    %1861 = vmatprep.subr.mxu0 0.0
    %1862 = vmatpush1.msra.mxu0 0.0
    %1863 = vmatprep.subr.mxu0 0.0
    %1864 = vmatpush1.msra.mxu0 0.0
    %1865 = vmatprep.subr.mxu0 0.0
    %1866 = vmatpush1.msra.mxu0 0.0
    %1867 = vmatprep.subr.mxu0 0.0
    %1868 = vmatpush1.msra.mxu0 0.0
    %1869 = vmatprep.mubr.f32.mxu0 0.0
    %1870 = vmatmul.mubr.f32.gmra.mrb[0].mxu0 %v1733
    %v1871 = vpop.f32.mrb[0].mxu0
    %v1872 = vadd.f32 0.0, %v1871
    %v1873 = vpop.f32.mrb[0].mxu0
    %v1874 = vadd.f32 0.0, %v1873
    %1875 = vdwg.mxu0
    %1876 = vmatprep.subr.mxu0 %v1744
    %1877 = vmatpush1.msra.mxu0 %v1743
    %1878 = vmatprep.subr.mxu0 %v1748
    %1879 = vmatpush1.msra.mxu0 %v1747
    %1880 = vmatprep.subr.mxu0 %v1752
    %1881 = vmatpush1.msra.mxu0 %v1751
    %1882 = vmatprep.subr.mxu0 %v1756
    %1883 = vmatpush1.msra.mxu0 %v1755
    %1884 = vmatprep.subr.mxu0 %v1760
    %1885 = vmatpush1.msra.mxu0 %v1759
    %1886 = vmatprep.subr.mxu0 %v1764
    %1887 = vmatpush1.msra.mxu0 %v1763
    %1888 = vmatprep.subr.mxu0 %v1768
    %1889 = vmatpush1.msra.mxu0 %v1767
    %1890 = vmatprep.subr.mxu0 %v1772
    %1891 = vmatpush1.msra.mxu0 %v1771
    %1892 = vmatprep.subr.mxu0 %v1776
    %1893 = vmatpush1.msra.mxu0 %v1775
    %1894 = vmatprep.subr.mxu0 %v1780
    %1895 = vmatpush1.msra.mxu0 %v1779
    %1896 = vmatprep.subr.mxu0 %v1784
    %1897 = vmatpush1.msra.mxu0 %v1783
    %1898 = vmatprep.subr.mxu0 %v1788
    %1899 = vmatpush1.msra.mxu0 %v1787
    %1900 = vmatprep.subr.mxu0 %v1792
    %1901 = vmatpush1.msra.mxu0 %v1791
    %1902 = vmatprep.subr.mxu0 %v1796
    %1903 = vmatpush1.msra.mxu0 %v1795
    %1904 = vmatprep.subr.mxu0 %v1800
    %1905 = vmatpush1.msra.mxu0 %v1799
    %1906 = vmatprep.subr.mxu0 %v1804
    %1907 = vmatpush1.msra.mxu0 %v1803
    %1908 = vmatprep.subr.mxu0 0.0
    %1909 = vmatpush1.msra.mxu0 0.0
    %1910 = vmatprep.subr.mxu0 0.0
    %1911 = vmatpush1.msra.mxu0 0.0
    %1912 = vmatprep.subr.mxu0 0.0
    %1913 = vmatpush1.msra.mxu0 0.0
    %1914 = vmatprep.subr.mxu0 0.0
    %1915 = vmatpush1.msra.mxu0 0.0
    %1916 = vmatprep.subr.mxu0 0.0
    %1917 = vmatpush1.msra.mxu0 0.0
    %1918 = vmatprep.subr.mxu0 0.0
    %1919 = vmatpush1.msra.mxu0 0.0
    %1920 = vmatprep.subr.mxu0 0.0
    %1921 = vmatpush1.msra.mxu0 0.0
    %1922 = vmatprep.subr.mxu0 0.0
    %1923 = vmatpush1.msra.mxu0 0.0
    %1924 = vmatprep.subr.mxu0 0.0
    %1925 = vmatpush1.msra.mxu0 0.0
    %1926 = vmatprep.subr.mxu0 0.0
    %1927 = vmatpush1.msra.mxu0 0.0
    %1928 = vmatprep.subr.mxu0 0.0
    %1929 = vmatpush1.msra.mxu0 0.0
    %1930 = vmatprep.subr.mxu0 0.0
    %1931 = vmatpush1.msra.mxu0 0.0
    %1932 = vmatprep.subr.mxu0 0.0
    %1933 = vmatpush1.msra.mxu0 0.0
    %1934 = vmatprep.subr.mxu0 0.0
    %1935 = vmatpush1.msra.mxu0 0.0
    %1936 = vmatprep.subr.mxu0 0.0
    %1937 = vmatpush1.msra.mxu0 0.0
    %1938 = vmatprep.subr.mxu0 0.0
    %1939 = vmatpush1.msra.mxu0 0.0
    %1940 = vmatprep.mubr.f32.mxu0 0.0
    %1941 = vmatmul.mubr.f32.gmra.mrb[0].mxu0 %v1733
    %v1942 = vpop.f32.mrb[0].mxu0
    %v1943 = vadd.f32 0.0, %v1942
    %v1944 = vpop.f32.mrb[0].mxu0
    %v1945 = vadd.f32 0.0, %v1944
    %1946 = vdwg.mxu0
    %v1947 = vadd.f32 %v1737, %v1872
    %v1948 = vadd.f32 %v1738, %v1874
    %v1949 = vadd.f32 %v1739, %v1943
    %v1950 = vadd.f32 %v1740, %v1945
    %v1951 = vxor.u32 %v1947, 2147483648
    %v1952 = vxor.u32 %v1948, 2147483648
    %v1953 = vxor.u32 %v1949, 2147483648
    %v1954 = vmul.f32 %v1951, 1.442695
    %v1955 = vpow.pop %v1954
    %v1956 = vmul.f32 %v1952, 1.442695
    %v1957 = vpow.pop %v1956
    %v1958 = vmul.f32 %v1953, 1.442695
    %v1959 = vpow.pop %v1958
    %v1960 = vadd.f32 %v1955, 1.0
    %v1961 = vadd.f32 %v1957, 1.0
    %v1962 = vadd.f32 %v1959, 1.0
    %v1963 = vrcp.pop %v1960
    %v1964 = vmul.f32 1.0, %v1963
    %v1965 = vrcp.pop %v1961
    %v1966 = vmul.f32 1.0, %v1965
    %v1967 = vrcp.pop %v1962
    %v1968 = vmul.f32 1.0, %v1967
    %v1969 = vtanh.pop %v1950
    %v1970 = vmul.f32 %v1966, %v1731
    %v1971 = vmul.f32 %v1964, %v1969
    %v1972 = vadd.f32 %v1970, %v1971
    %v1973 = vtanh.pop %v1972
    %v1974 = vmul.f32 %v1968, %v1973
    %s1975 = scalar_lea.vmem [#allocation9], 56
    %1976 = vst [vmem:[%s1975] sm:$0xff] %v1974
    %1977 = vst [vmem:[#allocation2] sm:$0xff] %v1972
    %1978 = vst [vmem:[#allocation3] sm:$0xff] %v1974
    // Predicated region
    $region22: #{tpu_custom_call.1} parent=1 // pred_check
      %p1979 = pneg %p43
    $region23: #{tpu_custom_call.1} parent=1 // pred_check_branch
      %1981 = sbr.rel (%p1979) target = $region25
    $region24: #{tpu_custom_call.1} parent=1 // pred_region
      %1982 = vst [vmem:[#allocation10] sm:$0xff] %v1972
    $region25: #{tpu_custom_call.1} parent=1 // pred_fallthru
      _
    // Predicated region
    $region26: #{tpu_custom_call.1} parent=1 // pred_check
      _
    $region27: #{tpu_custom_call.1} parent=1 // pred_check_branch
      %1984 = sbr.rel (0) target = $region29
    $region28: #{tpu_custom_call.1} parent=1 // pred_region
      %s1986 = ssub.s32 1024, 1024
      %1987 = vsyncadd [#allocation6], %s1986
      %s1988 = sshll.u32 [#allocation9], 4
      %s1989 = int_to_ptr.vmem [resolvable:$true] %s1988
      %1994 = dma.vmem_to_hbm [thread:$0]  %s1989, 1024, %s2, [#allocation6], 128, 128, 8
    $region29: #{tpu_custom_call.1} parent=1 // pred_fallthru
      _
    // Predicated region
    $region30: #{tpu_custom_call.1} parent=1 // pred_check
      _
    $region31: #{tpu_custom_call.1} parent=1 // pred_check_branch
      %1996 = sbr.rel (0) target = $region33
    $region32: #{tpu_custom_call.1} parent=1 // pred_region
      %s1998 = ssub.s32 128, 128
      %1999 = vsyncadd [#allocation11], %s1998
      %s2001 = sshll.u32 [#allocation10], 4
      %s2002 = int_to_ptr.vmem [resolvable:$true] %s2001
      %2004 = dma.vmem_to_hbm [thread:$0]  %s2002, 128, %s3, [#allocation11]
    $region33: #{tpu_custom_call.1} parent=1 // pred_fallthru
      _
    // Predicated region
    $region34: #{tpu_custom_call.1} parent=1 // pred_check
      _
    $region35: #{tpu_custom_call.1} parent=1 // pred_check_branch
      %2006 = sbr.rel (0) target = $region37
    $region36: #{tpu_custom_call.1} parent=1 // pred_region
      %2007 = dma.done [#allocation6], 1024
    $region37: #{tpu_custom_call.1} parent=1 // pred_fallthru
      _
    // Predicated region
    $region38: #{tpu_custom_call.1} parent=1 // pred_check
      _
    $region39: #{tpu_custom_call.1} parent=1 // pred_check_branch
      %2009 = sbr.rel (0) target = $region41
    $region40: #{tpu_custom_call.1} parent=1 // pred_region
      %2010 = dma.done [#allocation11], 128
    $region41: #{tpu_custom_call.1} parent=1 // pred_fallthru
      _
    %2011 = vsyncpa [#allocation5], 1
    %2012 = vsyncpa [#allocation8], 1
    %2013 = vsyncpa [#allocation6], 1
    %2014 = vsyncpa [#allocation11], 1

// kernel: tpu_custom_call.1
$region0: #{tpu_custom_call.1}
  #allocation0 [shape = 'u32[]', space=smem, size = 0x4, offset = 0x4, fixed_abs, tag = 'smem constant byte address 0x4 - core index']
  #allocation1 [shape = 'u32[144,128]{1,0:T(1,128)}', space=vmem, size = 0x12000, scoped, tag = 'internal scratch']
  #allocation2 [shape = 'f32[8,128]{1,0:T(8,128)}', space=vmem, size = 0x1000, scoped, tag = 'scratch operand']
  #allocation3 [shape = 'f32[8,128]{1,0:T(8,128)}', space=vmem, size = 0x1000, scoped, tag = 'scratch operand']
  %s0 = inlined_call_operand.hbm [shape: f32[8,8,512], index: 0, kind: input, shape index: {}]
  %s1 = inlined_call_operand.hbm [shape: f32[128,512], index: 1, kind: input, shape index: {}]
  %s2 = inlined_call_operand.hbm [shape: f32[8,8,128], index: 2, kind: output, shape index: {0}]
  %s3 = inlined_call_operand.hbm [shape: f32[8,128], index: 3, kind: output, shape index: {1}]
  %4 = xla_tuple %s2, %s3
  %s5 = sld [smem:[#allocation0]]
  $region42: #{tpu_custom_call.1} parent=0
    _
  %s7 = ssub.s32 1, %s5
  %s8 = scalar_select 0, %s7, %s5
  $region1: #{tpu_custom_call.1} parent=0
    #allocation4 [shape = 'u8[131072]{0}', space=vmem, size = 0x20000, scoped, tag = 'input window, operand 0, single buffered']
    #allocation5 [shape = 's32[1]{0}', space=sflag, size = 0x4, scoped, tag = 'scoped memory for tpu_custom_call.1']
    #allocation6 [shape = 's32[1]{0}', space=sflag, size = 0x4, scoped, tag = 'scoped memory for tpu_custom_call.1']
    #allocation7 [shape = 'u8[262144]{0}', space=vmem, size = 0x40000, scoped, tag = 'input window, operand 1, single buffered']
    #allocation8 [shape = 's32[1]{0}', space=sflag, size = 0x4, scoped, tag = 'scoped memory for tpu_custom_call.1']
    #allocation9 [shape = 'u8[32768]{0}', space=vmem, size = 0x8000, scoped, tag = 'output window, operand 0, single buffered']
    #allocation10 [shape = 'u8[4096]{0}', space=vmem, size = 0x1000, scoped, tag = 'output window, operand 1, single buffered']
    #allocation11 [shape = 's32[1]{0}', space=sflag, size = 0x4, scoped, tag = 'scoped memory for tpu_custom_call.1']
    %9 = vsyncpa [#allocation5], 0
    %10 = vsyncpa [#allocation8], 0
    %11 = vsyncpa [#allocation6], 0
    %12 = vsyncpa [#allocation11], 0
    // Predicated region
    $region2: #{tpu_custom_call.1} parent=1 // pred_check
      _
    $region3: #{tpu_custom_call.1} parent=1 // pred_check_branch
      %14 = sbr.rel (0) target = $region5
    $region4: #{tpu_custom_call.1} parent=1 // pred_region
      %s16 = ssub.s32 4096, 4096
      %17 = vsyncadd [#allocation5], %s16
      %s18 = sshll.u32 [#allocation4], 4
      %s19 = int_to_ptr.vmem [resolvable:$true] %s18
      %24 = dma.hbm_to_vmem [thread:$0]  %s0, 4096, %s19, [#allocation5], 512, 512, 32
    $region5: #{tpu_custom_call.1} parent=1 // pred_fallthru
      _
    // Predicated region
    $region6: #{tpu_custom_call.1} parent=1 // pred_check
      _
    $region7: #{tpu_custom_call.1} parent=1 // pred_check_branch
      %26 = sbr.rel (0) target = $region9
    $region8: #{tpu_custom_call.1} parent=1 // pred_region
      %s28 = ssub.s32 8192, 8192
      %29 = vsyncadd [#allocation8], %s28
      %s30 = sshll.u32 [#allocation7], 4
      %s31 = int_to_ptr.vmem [resolvable:$true] %s30
      %36 = dma.hbm_to_vmem [thread:$0]  %s1, 8192, %s31, [#allocation8], 512, 512, 32
    $region9: #{tpu_custom_call.1} parent=1 // pred_fallthru
      _
    // Predicated region
    $region10: #{tpu_custom_call.1} parent=1 // pred_check
      _
    $region11: #{tpu_custom_call.1} parent=1 // pred_check_branch
      %38 = sbr.rel (0) target = $region13
    $region12: #{tpu_custom_call.1} parent=1 // pred_region
      %39 = dma.done [#allocation5], 4096
    $region13: #{tpu_custom_call.1} parent=1 // pred_fallthru
      _
    // Predicated region
    $region14: #{tpu_custom_call.1} parent=1 // pred_check
      _
    $region15: #{tpu_custom_call.1} parent=1 // pred_check_branch
      %41 = sbr.rel (0) target = $region17
    $region16: #{tpu_custom_call.1} parent=1 // pred_region
      %42 = dma.done [#allocation8], 8192
    $region17: #{tpu_custom_call.1} parent=1 // pred_fallthru
      _
    %p43 = scmp.eq.s32.totalorder 0, 0
    // Predicated region
    $region18: #{tpu_custom_call.1} parent=1 // pred_check
      %p44 = pneg %p43
    $region19: #{tpu_custom_call.1} parent=1 // pred_check_branch
      %46 = sbr.rel (%p44) target = $region21
    $region20: #{tpu_custom_call.1} parent=1 // pred_region
      %47 = vst [vmem:[#allocation2] sm:$0xff] 0.0
      %48 = vst [vmem:[#allocation3] sm:$0xff] 0.0
    $region21: #{tpu_custom_call.1} parent=1 // pred_fallthru
      _
    %v49 = vld [vmem:[#allocation2] sm:$0xff]
    %v50 = vld [vmem:[#allocation3] sm:$0xff]
    %v51 = vld [vmem:[#allocation4] sm:$0xff]
    %v52 = vld [vmem:[#allocation4 + $0x8] sm:$0xff]
    %v53 = vld [vmem:[#allocation4 + $0x10] sm:$0xff]
    %v54 = vld [vmem:[#allocation4 + $0x18] sm:$0xff]
    %v55 = vld [vmem:[#allocation7] sm:$0xff]
    %v56 = vld [vmem:[#allocation7 + $0x8] sm:$0xff]
    %v57 = vld [vmem:[#allocation7 + $0x10] sm:$0xff]
    %v58 = vld [vmem:[#allocation7 + $0x18] sm:$0xff]
    %v59 = vld [vmem:[#allocation7 + $0x20] sm:$0xff]
    %v60 = vld [vmem:[#allocation7 + $0x28] sm:$0xff]
    %v61 = vld [vmem:[#allocation7 + $0x30] sm:$0xff]
    %v62 = vld [vmem:[#allocation7 + $0x38] sm:$0xff]
    %v63 = vld [vmem:[#allocation7 + $0x40] sm:$0xff]
    %v64 = vld [vmem:[#allocation7 + $0x48] sm:$0xff]
    %v65 = vld [vmem:[#allocation7 + $0x50] sm:$0xff]
    %v66 = vld [vmem:[#allocation7 + $0x58] sm:$0xff]
    %v67 = vld [vmem:[#allocation7 + $0x60] sm:$0xff]
    %v68 = vld [vmem:[#allocation7 + $0x68] sm:$0xff]
    %v69 = vld [vmem:[#allocation7 + $0x70] sm:$0xff]
    %v70 = vld [vmem:[#allocation7 + $0x78] sm:$0xff]
    %v71 = vld [vmem:[#allocation7 + $0x80] sm:$0xff]
    %v72 = vld [vmem:[#allocation7 + $0x88] sm:$0xff]
    %v73 = vld [vmem:[#allocation7 + $0x90] sm:$0xff]
    %v74 = vld [vmem:[#allocation7 + $0x98] sm:$0xff]
    %v75 = vld [vmem:[#allocation7 + $0xa0] sm:$0xff]
    %v76 = vld [vmem:[#allocation7 + $0xa8] sm:$0xff]
    %v77 = vld [vmem:[#allocation7 + $0xb0] sm:$0xff]
    %v78 = vld [vmem:[#allocation7 + $0xb8] sm:$0xff]
    %v79 = vld [vmem:[#allocation7 + $0xc0] sm:$0xff]
    %v80 = vld [vmem:[#allocation7 + $0xc8] sm:$0xff]
    %v81 = vld [vmem:[#allocation7 + $0xd0] sm:$0xff]
    %v82 = vld [vmem:[#allocation7 + $0xd8] sm:$0xff]
    %v83 = vld [vmem:[#allocation7 + $0xe0] sm:$0xff]
    %v84 = vld [vmem:[#allocation7 + $0xe8] sm:$0xff]
    %v85 = vld [vmem:[#allocation7 + $0xf0] sm:$0xff]
    %v86 = vld [vmem:[#allocation7 + $0xf8] sm:$0xff]
    %v87 = vld [vmem:[#allocation7 + $0x100] sm:$0xff]
    %v88 = vld [vmem:[#allocation7 + $0x108] sm:$0xff]
    %v89 = vld [vmem:[#allocation7 + $0x110] sm:$0xff]
    %v90 = vld [vmem:[#allocation7 + $0x118] sm:$0xff]
    %v91 = vld [vmem:[#allocation7 + $0x120] sm:$0xff]
    %v92 = vld [vmem:[#allocation7 + $0x128] sm:$0xff]
    %v93 = vld [vmem:[#allocation7 + $0x130] sm:$0xff]
    %v94 = vld [vmem:[#allocation7 + $0x138] sm:$0xff]
    %v95 = vld [vmem:[#allocation7 + $0x140] sm:$0xff]
    %v96 = vld [vmem:[#allocation7 + $0x148] sm:$0xff]
    %v97 = vld [vmem:[#allocation7 + $0x150] sm:$0xff]
    %v98 = vld [vmem:[#allocation7 + $0x158] sm:$0xff]
    %v99 = vld [vmem:[#allocation7 + $0x160] sm:$0xff]
    %v100 = vld [vmem:[#allocation7 + $0x168] sm:$0xff]
    %v101 = vld [vmem:[#allocation7 + $0x170] sm:$0xff]
    %v102 = vld [vmem:[#allocation7 + $0x178] sm:$0xff]
    %v103 = vld [vmem:[#allocation7 + $0x180] sm:$0xff]
    %v104 = vld [vmem:[#allocation7 + $0x188] sm:$0xff]
    %v105 = vld [vmem:[#allocation7 + $0x190] sm:$0xff]
    %v106 = vld [vmem:[#allocation7 + $0x198] sm:$0xff]
    %v107 = vld [vmem:[#allocation7 + $0x1a0] sm:$0xff]
    %v108 = vld [vmem:[#allocation7 + $0x1a8] sm:$0xff]
    %v109 = vld [vmem:[#allocation7 + $0x1b0] sm:$0xff]
    %v110 = vld [vmem:[#allocation7 + $0x1b8] sm:$0xff]
    %v111 = vld [vmem:[#allocation7 + $0x1c0] sm:$0xff]
    %v112 = vld [vmem:[#allocation7 + $0x1c8] sm:$0xff]
    %v113 = vld [vmem:[#allocation7 + $0x1d0] sm:$0xff]
    %v114 = vld [vmem:[#allocation7 + $0x1d8] sm:$0xff]
    %v115 = vld [vmem:[#allocation7 + $0x1e0] sm:$0xff]
    %v116 = vld [vmem:[#allocation7 + $0x1e8] sm:$0xff]
    %v117 = vld [vmem:[#allocation7 + $0x1f0] sm:$0xff]
    %v118 = vld [vmem:[#allocation7 + $0x1f8] sm:$0xff]
    %119 = vmatprep.subr.mxu0 %v56
    %120 = vmatpush1.msra.mxu0 %v55
    %121 = vmatprep.subr.mxu0 %v60
    %122 = vmatpush1.msra.mxu0 %v59
    %123 = vmatprep.subr.mxu0 %v64
    %124 = vmatpush1.msra.mxu0 %v63
    %125 = vmatprep.subr.mxu0 %v68
    %126 = vmatpush1.msra.mxu0 %v67
    %127 = vmatprep.subr.mxu0 %v72
    %128 = vmatpush1.msra.mxu0 %v71
    %129 = vmatprep.subr.mxu0 %v76
    %130 = vmatpush1.msra.mxu0 %v75
    %131 = vmatprep.subr.mxu0 %v80
    %132 = vmatpush1.msra.mxu0 %v79
    %133 = vmatprep.subr.mxu0 %v84
    %134 = vmatpush1.msra.mxu0 %v83
    %135 = vmatprep.subr.mxu0 %v88
    %136 = vmatpush1.msra.mxu0 %v87
    %137 = vmatprep.subr.mxu0 %v92
    %138 = vmatpush1.msra.mxu0 %v91
    %139 = vmatprep.subr.mxu0 %v96
    %140 = vmatpush1.msra.mxu0 %v95
    %141 = vmatprep.subr.mxu0 %v100
    %142 = vmatpush1.msra.mxu0 %v99
    %143 = vmatprep.subr.mxu0 %v104
    %144 = vmatpush1.msra.mxu0 %v103
    %145 = vmatprep.subr.mxu0 %v108
    %146 = vmatpush1.msra.mxu0 %v107
    %147 = vmatprep.subr.mxu0 %v112
    %148 = vmatpush1.msra.mxu0 %v111
    %149 = vmatprep.subr.mxu0 %v116
    %150 = vmatpush1.msra.mxu0 %v115
    %151 = vmatprep.subr.mxu0 0.0
    %152 = vmatpush1.msra.mxu0 0.0
    %153 = vmatprep.subr.mxu0 0.0
    %154 = vmatpush1.msra.mxu0 0.0
    %155 = vmatprep.subr.mxu0 0.0
    %156 = vmatpush1.msra.mxu0 0.0
    %157 = vmatprep.subr.mxu0 0.0
    %158 = vmatpush1.msra.mxu0 0.0
    %159 = vmatprep.subr.mxu0 0.0
    %160 = vmatpush1.msra.mxu0 0.0
    %161 = vmatprep.subr.mxu0 0.0
    %162 = vmatpush1.msra.mxu0 0.0
    %163 = vmatprep.subr.mxu0 0.0
    %164 = vmatpush1.msra.mxu0 0.0
    %165 = vmatprep.subr.mxu0 0.0
    %166 = vmatpush1.msra.mxu0 0.0
    %167 = vmatprep.subr.mxu0 0.0
    %168 = vmatpush1.msra.mxu0 0.0
    %169 = vmatprep.subr.mxu0 0.0
    %170 = vmatpush1.msra.mxu0 0.0
    %171 = vmatprep.subr.mxu0 0.0
    %172 = vmatpush1.msra.mxu0 0.0
    %173 = vmatprep.subr.mxu0 0.0
    %174 = vmatpush1.msra.mxu0 0.0
    %175 = vmatprep.subr.mxu0 0.0
    %176 = vmatpush1.msra.mxu0 0.0
    %177 = vmatprep.subr.mxu0 0.0
    %178 = vmatpush1.msra.mxu0 0.0
    %179 = vmatprep.subr.mxu0 0.0
    %180 = vmatpush1.msra.mxu0 0.0
    %181 = vmatprep.subr.mxu0 0.0
    %182 = vmatpush1.msra.mxu0 0.0
    %183 = vmatprep.mubr.f32.mxu0 0.0
    %184 = vmatmul.mubr.f32.gmra.mrb[0].mxu0 %v50
    %v185 = vpop.f32.mrb[0].mxu0
    %v186 = vadd.f32 0.0, %v185
    %v187 = vpop.f32.mrb[0].mxu0
    %v188 = vadd.f32 0.0, %v187
    %189 = vdwg.mxu0
    %190 = vmatprep.subr.mxu0 %v58
    %191 = vmatpush1.msra.mxu0 %v57
    %192 = vmatprep.subr.mxu0 %v62
    %193 = vmatpush1.msra.mxu0 %v61
    %194 = vmatprep.subr.mxu0 %v66
    %195 = vmatpush1.msra.mxu0 %v65
    %196 = vmatprep.subr.mxu0 %v70
    %197 = vmatpush1.msra.mxu0 %v69
    %198 = vmatprep.subr.mxu0 %v74
    %199 = vmatpush1.msra.mxu0 %v73
    %200 = vmatprep.subr.mxu0 %v78
    %201 = vmatpush1.msra.mxu0 %v77
    %202 = vmatprep.subr.mxu0 %v82
    %203 = vmatpush1.msra.mxu0 %v81
    %204 = vmatprep.subr.mxu0 %v86
    %205 = vmatpush1.msra.mxu0 %v85
    %206 = vmatprep.subr.mxu0 %v90
    %207 = vmatpush1.msra.mxu0 %v89
    %208 = vmatprep.subr.mxu0 %v94
    %209 = vmatpush1.msra.mxu0 %v93
    %210 = vmatprep.subr.mxu0 %v98
    %211 = vmatpush1.msra.mxu0 %v97
    %212 = vmatprep.subr.mxu0 %v102
    %213 = vmatpush1.msra.mxu0 %v101
    %214 = vmatprep.subr.mxu0 %v106
    %215 = vmatpush1.msra.mxu0 %v105
    %216 = vmatprep.subr.mxu0 %v110
    %217 = vmatpush1.msra.mxu0 %v109
    %218 = vmatprep.subr.mxu0 %v114
    %219 = vmatpush1.msra.mxu0 %v113
    %220 = vmatprep.subr.mxu0 %v118
    %221 = vmatpush1.msra.mxu0 %v117
    %222 = vmatprep.subr.mxu0 0.0
    %223 = vmatpush1.msra.mxu0 0.0
    %224 = vmatprep.subr.mxu0 0.0
    %225 = vmatpush1.msra.mxu0 0.0
    %226 = vmatprep.subr.mxu0 0.0
    %227 = vmatpush1.msra.mxu0 0.0
    %228 = vmatprep.subr.mxu0 0.0
    %229 = vmatpush1.msra.mxu0 0.0
    %230 = vmatprep.subr.mxu0 0.0
    %231 = vmatpush1.msra.mxu0 0.0
    %232 = vmatprep.subr.mxu0 0.0
    %233 = vmatpush1.msra.mxu0 0.0
    %234 = vmatprep.subr.mxu0 0.0
    %235 = vmatpush1.msra.mxu0 0.0
    %236 = vmatprep.subr.mxu0 0.0
    %237 = vmatpush1.msra.mxu0 0.0
    %238 = vmatprep.subr.mxu0 0.0
    %239 = vmatpush1.msra.mxu0 0.0
    %240 = vmatprep.subr.mxu0 0.0
    %241 = vmatpush1.msra.mxu0 0.0
    %242 = vmatprep.subr.mxu0 0.0
    %243 = vmatpush1.msra.mxu0 0.0
    %244 = vmatprep.subr.mxu0 0.0
    %245 = vmatpush1.msra.mxu0 0.0
    %246 = vmatprep.subr.mxu0 0.0
    %247 = vmatpush1.msra.mxu0 0.0
    %248 = vmatprep.subr.mxu0 0.0
    %249 = vmatpush1.msra.mxu0 0.0
    %250 = vmatprep.subr.mxu0 0.0
    %251 = vmatpush1.msra.mxu0 0.0
    %252 = vmatprep.subr.mxu0 0.0
    %253 = vmatpush1.msra.mxu0 0.0
    %254 = vmatprep.mubr.f32.mxu0 0.0
    %255 = vmatmul.mubr.f32.gmra.mrb[0].mxu0 %v50
    %v256 = vpop.f32.mrb[0].mxu0
    %v257 = vadd.f32 0.0, %v256
    %v258 = vpop.f32.mrb[0].mxu0
    %v259 = vadd.f32 0.0, %v258
    %260 = vdwg.mxu0
    %v261 = vadd.f32 %v51, %v186
    %v262 = vadd.f32 %v52, %v188
    %v263 = vadd.f32 %v53, %v257
    %v264 = vadd.f32 %v54, %v259
    %v265 = vxor.u32 %v261, 2147483648
    %v266 = vxor.u32 %v262, 2147483648
    %v267 = vxor.u32 %v263, 2147483648
    %v268 = vmul.f32 %v265, 1.442695
    %v269 = vpow.pop %v268
    %v270 = vmul.f32 %v266, 1.442695
    %v271 = vpow.pop %v270
    %v272 = vmul.f32 %v267, 1.442695
    %v273 = vpow.pop %v272
    %v274 = vadd.f32 %v269, 1.0
    %v275 = vadd.f32 %v271, 1.0
    %v276 = vadd.f32 %v273, 1.0
    %v277 = vrcp.pop %v274
    %v278 = vmul.f32 1.0, %v277
    %v279 = vrcp.pop %v275
    %v280 = vmul.f32 1.0, %v279
    %v281 = vrcp.pop %v276
    %v282 = vmul.f32 1.0, %v281
    %v283 = vtanh.pop %v264
    %v284 = vmul.f32 %v280, %v49
    %v285 = vmul.f32 %v278, %v283
    %v286 = vadd.f32 %v284, %v285
    %v287 = vtanh.pop %v286
    %v288 = vmul.f32 %v282, %v287
    %289 = vst [vmem:[#allocation9] sm:$0xff] %v288
    %s290 = scalar_lea.vmem [#allocation4], 32
    %v291 = vld [vmem:[%s290] sm:$0xff]
    %v292 = vld [vmem:[%s290 + $0x8] sm:$0xff]
    %v293 = vld [vmem:[%s290 + $0x10] sm:$0xff]
    %v294 = vld [vmem:[%s290 + $0x18] sm:$0xff]
    %v295 = vld [vmem:[#allocation7] sm:$0xff]
    %v296 = vld [vmem:[#allocation7 + $0x8] sm:$0xff]
    %v297 = vld [vmem:[#allocation7 + $0x10] sm:$0xff]
    %v298 = vld [vmem:[#allocation7 + $0x18] sm:$0xff]
    %v299 = vld [vmem:[#allocation7 + $0x20] sm:$0xff]
    %v300 = vld [vmem:[#allocation7 + $0x28] sm:$0xff]
    %v301 = vld [vmem:[#allocation7 + $0x30] sm:$0xff]
    %v302 = vld [vmem:[#allocation7 + $0x38] sm:$0xff]
    %v303 = vld [vmem:[#allocation7 + $0x40] sm:$0xff]
    %v304 = vld [vmem:[#allocation7 + $0x48] sm:$0xff]
    %v305 = vld [vmem:[#allocation7 + $0x50] sm:$0xff]
    %v306 = vld [vmem:[#allocation7 + $0x58] sm:$0xff]
    %v307 = vld [vmem:[#allocation7 + $0x60] sm:$0xff]
    %v308 = vld [vmem:[#allocation7 + $0x68] sm:$0xff]
    %v309 = vld [vmem:[#allocation7 + $0x70] sm:$0xff]
    %v310 = vld [vmem:[#allocation7 + $0x78] sm:$0xff]
    %v311 = vld [vmem:[#allocation7 + $0x80] sm:$0xff]
    %v312 = vld [vmem:[#allocation7 + $0x88] sm:$0xff]
    %v313 = vld [vmem:[#allocation7 + $0x90] sm:$0xff]
    %v314 = vld [vmem:[#allocation7 + $0x98] sm:$0xff]
    %v315 = vld [vmem:[#allocation7 + $0xa0] sm:$0xff]
    %v316 = vld [vmem:[#allocation7 + $0xa8] sm:$0xff]
    %v317 = vld [vmem:[#allocation7 + $0xb0] sm:$0xff]
    %v318 = vld [vmem:[#allocation7 + $0xb8] sm:$0xff]
    %v319 = vld [vmem:[#allocation7 + $0xc0] sm:$0xff]
    %v320 = vld [vmem:[#allocation7 + $0xc8] sm:$0xff]
    %v321 = vld [vmem:[#allocation7 + $0xd0] sm:$0xff]
    %v322 = vld [vmem:[#allocation7 + $0xd8] sm:$0xff]
    %v323 = vld [vmem:[#allocation7 + $0xe0] sm:$0xff]
    %v324 = vld [vmem:[#allocation7 + $0xe8] sm:$0xff]
    %v325 = vld [vmem:[#allocation7 + $0xf0] sm:$0xff]
    %v326 = vld [vmem:[#allocation7 + $0xf8] sm:$0xff]
    %v327 = vld [vmem:[#allocation7 + $0x100] sm:$0xff]
    %v328 = vld [vmem:[#allocation7 + $0x108] sm:$0xff]
    %v329 = vld [vmem:[#allocation7 + $0x110] sm:$0xff]
    %v330 = vld [vmem:[#allocation7 + $0x118] sm:$0xff]
    %v331 = vld [vmem:[#allocation7 + $0x120] sm:$0xff]
    %v332 = vld [vmem:[#allocation7 + $0x128] sm:$0xff]
    %v333 = vld [vmem:[#allocation7 + $0x130] sm:$0xff]
    %v334 = vld [vmem:[#allocation7 + $0x138] sm:$0xff]
    %v335 = vld [vmem:[#allocation7 + $0x140] sm:$0xff]
    %v336 = vld [vmem:[#allocation7 + $0x148] sm:$0xff]
    %v337 = vld [vmem:[#allocation7 + $0x150] sm:$0xff]
    %v338 = vld [vmem:[#allocation7 + $0x158] sm:$0xff]
    %v339 = vld [vmem:[#allocation7 + $0x160] sm:$0xff]
    %v340 = vld [vmem:[#allocation7 + $0x168] sm:$0xff]
    %v341 = vld [vmem:[#allocation7 + $0x170] sm:$0xff]
    %v342 = vld [vmem:[#allocation7 + $0x178] sm:$0xff]
    %v343 = vld [vmem:[#allocation7 + $0x180] sm:$0xff]
    %v344 = vld [vmem:[#allocation7 + $0x188] sm:$0xff]
    %v345 = vld [vmem:[#allocation7 + $0x190] sm:$0xff]
    %v346 = vld [vmem:[#allocation7 + $0x198] sm:$0xff]
    %v347 = vld [vmem:[#allocation7 + $0x1a0] sm:$0xff]
    %v348 = vld [vmem:[#allocation7 + $0x1a8] sm:$0xff]
    %v349 = vld [vmem:[#allocation7 + $0x1b0] sm:$0xff]
    %v350 = vld [vmem:[#allocation7 + $0x1b8] sm:$0xff]
    %v351 = vld [vmem:[#allocation7 + $0x1c0] sm:$0xff]
    %v352 = vld [vmem:[#allocation7 + $0x1c8] sm:$0xff]
    %v353 = vld [vmem:[#allocation7 + $0x1d0] sm:$0xff]
    %v354 = vld [vmem:[#allocation7 + $0x1d8] sm:$0xff]
    %v355 = vld [vmem:[#allocation7 + $0x1e0] sm:$0xff]
    %v356 = vld [vmem:[#allocation7 + $0x1e8] sm:$0xff]
    %v357 = vld [vmem:[#allocation7 + $0x1f0] sm:$0xff]
    %v358 = vld [vmem:[#allocation7 + $0x1f8] sm:$0xff]
    %359 = vmatprep.subr.mxu0 %v296
    %360 = vmatpush1.msra.mxu0 %v295
    %361 = vmatprep.subr.mxu0 %v300
    %362 = vmatpush1.msra.mxu0 %v299
    %363 = vmatprep.subr.mxu0 %v304
    %364 = vmatpush1.msra.mxu0 %v303
    %365 = vmatprep.subr.mxu0 %v308
    %366 = vmatpush1.msra.mxu0 %v307
    %367 = vmatprep.subr.mxu0 %v312
    %368 = vmatpush1.msra.mxu0 %v311
    %369 = vmatprep.subr.mxu0 %v316
    %370 = vmatpush1.msra.mxu0 %v315
    %371 = vmatprep.subr.mxu0 %v320
    %372 = vmatpush1.msra.mxu0 %v319
    %373 = vmatprep.subr.mxu0 %v324
    %374 = vmatpush1.msra.mxu0 %v323
    %375 = vmatprep.subr.mxu0 %v328
    %376 = vmatpush1.msra.mxu0 %v327
    %377 = vmatprep.subr.mxu0 %v332
    %378 = vmatpush1.msra.mxu0 %v331
    %379 = vmatprep.subr.mxu0 %v336
    %380 = vmatpush1.msra.mxu0 %v335
    %381 = vmatprep.subr.mxu0 %v340
    %382 = vmatpush1.msra.mxu0 %v339
    %383 = vmatprep.subr.mxu0 %v344
    %384 = vmatpush1.msra.mxu0 %v343
    %385 = vmatprep.subr.mxu0 %v348
    %386 = vmatpush1.msra.mxu0 %v347
    %387 = vmatprep.subr.mxu0 %v352
    %388 = vmatpush1.msra.mxu0 %v351
    %389 = vmatprep.subr.mxu0 %v356
    %390 = vmatpush1.msra.mxu0 %v355
    %391 = vmatprep.subr.mxu0 0.0
    %392 = vmatpush1.msra.mxu0 0.0
    %393 = vmatprep.subr.mxu0 0.0
    %394 = vmatpush1.msra.mxu0 0.0
    %395 = vmatprep.subr.mxu0 0.0
    %396 = vmatpush1.msra.mxu0 0.0
    %397 = vmatprep.subr.mxu0 0.0
    %398 = vmatpush1.msra.mxu0 0.0
    %399 = vmatprep.subr.mxu0 0.0
    %400 = vmatpush1.msra.mxu0 0.0
    %401 = vmatprep.subr.mxu0 0.0
    %402 = vmatpush1.msra.mxu0 0.0
    %403 = vmatprep.subr.mxu0 0.0
    %404 = vmatpush1.msra.mxu0 0.0
    %405 = vmatprep.subr.mxu0 0.0
    %406 = vmatpush1.msra.mxu0 0.0
    %407 = vmatprep.subr.mxu0 0.0
    %408 = vmatpush1.msra.mxu0 0.0
    %409 = vmatprep.subr.mxu0 0.0
    %410 = vmatpush1.msra.mxu0 0.0
    %411 = vmatprep.subr.mxu0 0.0
    %412 = vmatpush1.msra.mxu0 0.0
    %413 = vmatprep.subr.mxu0 0.0
    %414 = vmatpush1.msra.mxu0 0.0
    %415 = vmatprep.subr.mxu0 0.0
    %416 = vmatpush1.msra.mxu0 0.0
    %417 = vmatprep.subr.mxu0 0.0
    %418 = vmatpush1.msra.mxu0 0.0
    %419 = vmatprep.subr.mxu0 0.0
    %420 = vmatpush1.msra.mxu0 0.0
    %421 = vmatprep.subr.mxu0 0.0
    %422 = vmatpush1.msra.mxu0 0.0
    %423 = vmatprep.mubr.f32.mxu0 0.0
    %424 = vmatmul.mubr.f32.gmra.mrb[0].mxu0 %v288
    %v425 = vpop.f32.mrb[0].mxu0
    %v426 = vadd.f32 0.0, %v425
    %v427 = vpop.f32.mrb[0].mxu0
    %v428 = vadd.f32 0.0, %v427
    %429 = vdwg.mxu0
    %430 = vmatprep.subr.mxu0 %v298
    %431 = vmatpush1.msra.mxu0 %v297
    %432 = vmatprep.subr.mxu0 %v302
    %433 = vmatpush1.msra.mxu0 %v301
    %434 = vmatprep.subr.mxu0 %v306
    %435 = vmatpush1.msra.mxu0 %v305
    %436 = vmatprep.subr.mxu0 %v310
    %437 = vmatpush1.msra.mxu0 %v309
    %438 = vmatprep.subr.mxu0 %v314
    %439 = vmatpush1.msra.mxu0 %v313
    %440 = vmatprep.subr.mxu0 %v318
    %441 = vmatpush1.msra.mxu0 %v317
    %442 = vmatprep.subr.mxu0 %v322
    %443 = vmatpush1.msra.mxu0 %v321
    %444 = vmatprep.subr.mxu0 %v326
    %445 = vmatpush1.msra.mxu0 %v325
    %446 = vmatprep.subr.mxu0 %v330
    %447 = vmatpush1.msra.mxu0 %v329
    %448 = vmatprep.subr.mxu0 %v334
    %449 = vmatpush1.msra.mxu0 %v333
    %450 = vmatprep.subr.mxu0 %v338
    %451 = vmatpush1.msra.mxu0 %v337
    %452 = vmatprep.subr.mxu0 %v342
    %453 = vmatpush1.msra.mxu0 %v341
    %454 = vmatprep.subr.mxu0 %v346
    %455 = vmatpush1.msra.mxu0 %v345
    %456 = vmatprep.subr.mxu0 %v350
    %457 = vmatpush1.msra.mxu0 %v349
    %458 = vmatprep.subr.mxu0 %v354
    %459 = vmatpush1.msra.mxu0 %v353
    %460 = vmatprep.subr.mxu0 %v358
    %461 = vmatpush1.msra.mxu0 %v357
    %462 = vmatprep.subr.mxu0 0.0
    %463 = vmatpush1.msra.mxu0 0.0
    %464 = vmatprep.subr.mxu0 0.0
    %465 = vmatpush1.msra.mxu0 0.0
    %466 = vmatprep.subr.mxu0 0.0
    %467 = vmatpush1.msra.mxu0 0.0
    %468 = vmatprep.subr.mxu0 0.0
    %469 = vmatpush1.msra.mxu0 0.0
    %470 = vmatprep.subr.mxu0 0.0
    %471 = vmatpush1.msra.mxu0 0.0
    %472 = vmatprep.subr.mxu0 0.0
    %473 = vmatpush1.msra.mxu0 0.0
    %474 = vmatprep.subr.mxu0 0.0
    %475 = vmatpush1.msra.mxu0 0.0
    %476 = vmatprep.subr.mxu0 0.0
    %477 = vmatpush1.msra.mxu0 0.0
    %478 = vmatprep.subr.mxu0 0.0
    %479 = vmatpush1.msra.mxu0 0.0
    %480 = vmatprep.subr.mxu0 0.0
    %481 = vmatpush1.msra.mxu0 0.0
    %482 = vmatprep.subr.mxu0 0.0
    %483 = vmatpush1.msra.mxu0 0.0
    %484 = vmatprep.subr.mxu0 0.0
    %485 = vmatpush1.msra.mxu0 0.0
    %486 = vmatprep.subr.mxu0 0.0
    %487 = vmatpush1.msra.mxu0 0.0
    %488 = vmatprep.subr.mxu0 0.0
    %489 = vmatpush1.msra.mxu0 0.0
    %490 = vmatprep.subr.mxu0 0.0
    %491 = vmatpush1.msra.mxu0 0.0
    %492 = vmatprep.subr.mxu0 0.0
    %493 = vmatpush1.msra.mxu0 0.0
    %494 = vmatprep.mubr.f32.mxu0 0.0
    %495 = vmatmul.mubr.f32.gmra.mrb[0].mxu0 %v288
    %v496 = vpop.f32.mrb[0].mxu0
    %v497 = vadd.f32 0.0, %v496
    %v498 = vpop.f32.mrb[0].mxu0
    %v499 = vadd.f32 0.0, %v498
    %500 = vdwg.mxu0
    %v501 = vadd.f32 %v291, %v426
    %v502 = vadd.f32 %v292, %v428
    %v503 = vadd.f32 %v293, %v497
    %v504 = vadd.f32 %v294, %v499
    %v505 = vxor.u32 %v501, 2147483648
    %v506 = vxor.u32 %v502, 2147483648
    %v507 = vxor.u32 %v503, 2147483648
    %v508 = vmul.f32 %v505, 1.442695
    %v509 = vpow.pop %v508
    %v510 = vmul.f32 %v506, 1.442695
    %v511 = vpow.pop %v510
    %v512 = vmul.f32 %v507, 1.442695
    %v513 = vpow.pop %v512
    %v514 = vadd.f32 %v509, 1.0
    %v515 = vadd.f32 %v511, 1.0
    %v516 = vadd.f32 %v513, 1.0
    %v517 = vrcp.pop %v514
    %v518 = vmul.f32 1.0, %v517
    %v519 = vrcp.pop %v515
    %v520 = vmul.f32 1.0, %v519
    %v521 = vrcp.pop %v516
    %v522 = vmul.f32 1.0, %v521
    %v523 = vtanh.pop %v504
    %v524 = vmul.f32 %v520, %v286
    %v525 = vmul.f32 %v518, %v523
    %v526 = vadd.f32 %v524, %v525
    %v527 = vtanh.pop %v526
    %v528 = vmul.f32 %v522, %v527
    %s529 = scalar_lea.vmem [#allocation9], 8
    %530 = vst [vmem:[%s529] sm:$0xff] %v528
    %s531 = scalar_lea.vmem [#allocation4], 64
    %v532 = vld [vmem:[%s531] sm:$0xff]
    %v533 = vld [vmem:[%s531 + $0x8] sm:$0xff]
    %v534 = vld [vmem:[%s531 + $0x10] sm:$0xff]
    %v535 = vld [vmem:[%s531 + $0x18] sm:$0xff]
    %v536 = vld [vmem:[#allocation7] sm:$0xff]
    %v537 = vld [vmem:[#allocation7 + $0x8] sm:$0xff]
    %v538 = vld [vmem:[#allocation7 + $0x10] sm:$0xff]
    %v539 = vld [vmem:[#allocation7 + $0x18] sm:$0xff]
    %v540 = vld [vmem:[#allocation7 + $0x20] sm:$0xff]
    %v541 = vld [vmem:[#allocation7 + $0x28] sm:$0xff]
    %v542 = vld [vmem:[#allocation7 + $0x30] sm:$0xff]
    %v543 = vld [vmem:[#allocation7 + $0x38] sm:$0xff]
    %v544 = vld [vmem:[#allocation7 + $0x40] sm:$0xff]
    %v545 = vld [vmem:[#allocation7 + $0x48] sm:$0xff]
    %v546 = vld [vmem:[#allocation7 + $0x50] sm:$0xff]
    %v547 = vld [vmem:[#allocation7 + $0x58] sm:$0xff]
    %v548 = vld [vmem:[#allocation7 + $0x60] sm:$0xff]
    %v549 = vld [vmem:[#allocation7 + $0x68] sm:$0xff]
    %v550 = vld [vmem:[#allocation7 + $0x70] sm:$0xff]
    %v551 = vld [vmem:[#allocation7 + $0x78] sm:$0xff]
    %v552 = vld [vmem:[#allocation7 + $0x80] sm:$0xff]
    %v553 = vld [vmem:[#allocation7 + $0x88] sm:$0xff]
    %v554 = vld [vmem:[#allocation7 + $0x90] sm:$0xff]
    %v555 = vld [vmem:[#allocation7 + $0x98] sm:$0xff]
    %v556 = vld [vmem:[#allocation7 + $0xa0] sm:$0xff]
    %v557 = vld [vmem:[#allocation7 + $0xa8] sm:$0xff]
    %v558 = vld [vmem:[#allocation7 + $0xb0] sm:$0xff]
    %v559 = vld [vmem:[#allocation7 + $0xb8] sm:$0xff]
    %v560 = vld [vmem:[#allocation7 + $0xc0] sm:$0xff]
    %v561 = vld [vmem:[#allocation7 + $0xc8] sm:$0xff]
    %v562 = vld [vmem:[#allocation7 + $0xd0] sm:$0xff]
    %v563 = vld [vmem:[#allocation7 + $0xd8] sm:$0xff]
    %v564 = vld [vmem:[#allocation7 + $0xe0] sm:$0xff]
    %v565 = vld [vmem:[#allocation7 + $0xe8] sm:$0xff]
    %v566 = vld [vmem:[#allocation7 + $0xf0] sm:$0xff]
    %v567 = vld [vmem:[#allocation7 + $0xf8] sm:$0xff]
    %v568 = vld [vmem:[#allocation7 + $0x100] sm:$0xff]
    %v569 = vld [vmem:[#allocation7 + $0x108] sm:$0xff]
    %v570 = vld [vmem:[#allocation7 + $0x110] sm:$0xff]
    %v571 = vld [vmem:[#allocation7 + $0x118] sm:$0xff]
    %v572 = vld [vmem:[#allocation7 + $0x120] sm:$0xff]
    %v573 = vld [vmem:[#allocation7 + $0x128] sm:$0xff]
    %v574 = vld [vmem:[#allocation7 + $0x130] sm:$0xff]
    %v575 = vld [vmem:[#allocation7 + $0x138] sm:$0xff]
    %v576 = vld [vmem:[#allocation7 + $0x140] sm:$0xff]
    %v577 = vld [vmem:[#allocation7 + $0x148] sm:$0xff]
    %v578 = vld [vmem:[#allocation7 + $0x150] sm:$0xff]
    %v579 = vld [vmem:[#allocation7 + $0x158] sm:$0xff]
    %v580 = vld [vmem:[#allocation7 + $0x160] sm:$0xff]
    %v581 = vld [vmem:[#allocation7 + $0x168] sm:$0xff]
    %v582 = vld [vmem:[#allocation7 + $0x170] sm:$0xff]
    %v583 = vld [vmem:[#allocation7 + $0x178] sm:$0xff]
    %v584 = vld [vmem:[#allocation7 + $0x180] sm:$0xff]
    %v585 = vld [vmem:[#allocation7 + $0x188] sm:$0xff]
    %v586 = vld [vmem:[#allocation7 + $0x190] sm:$0xff]
    %v587 = vld [vmem:[#allocation7 + $0x198] sm:$0xff]
    %v588 = vld [vmem:[#allocation7 + $0x1a0] sm:$0xff]
    %v589 = vld [vmem:[#allocation7 + $0x1a8] sm:$0xff]
    %v590 = vld [vmem:[#allocation7 + $0x1b0] sm:$0xff]
    %v591 = vld [vmem:[#allocation7 + $0x1b8] sm:$0xff]
    %v592 = vld [vmem:[#allocation7 + $0x1c0] sm:$0xff]
    %v593 = vld [vmem:[#allocation7 + $0x1c8] sm:$0xff]
    %v594 = vld [vmem:[#allocation7 + $0x1d0] sm:$0xff]
    %v595 = vld [vmem:[#allocation7 + $0x1d8] sm:$0xff]
    %v596 = vld [vmem:[#allocation7 + $0x1e0] sm:$0xff]
    %v597 = vld [vmem:[#allocation7 + $0x1e8] sm:$0xff]
    %v598 = vld [vmem:[#allocation7 + $0x1f0] sm:$0xff]
    %v599 = vld [vmem:[#allocation7 + $0x1f8] sm:$0xff]
    %600 = vmatprep.subr.mxu0 %v537
    %601 = vmatpush1.msra.mxu0 %v536
    %602 = vmatprep.subr.mxu0 %v541
    %603 = vmatpush1.msra.mxu0 %v540
    %604 = vmatprep.subr.mxu0 %v545
    %605 = vmatpush1.msra.mxu0 %v544
    %606 = vmatprep.subr.mxu0 %v549
    %607 = vmatpush1.msra.mxu0 %v548
    %608 = vmatprep.subr.mxu0 %v553
    %609 = vmatpush1.msra.mxu0 %v552
    %610 = vmatprep.subr.mxu0 %v557
    %611 = vmatpush1.msra.mxu0 %v556
    %612 = vmatprep.subr.mxu0 %v561
    %613 = vmatpush1.msra.mxu0 %v560
    %614 = vmatprep.subr.mxu0 %v565
    %615 = vmatpush1.msra.mxu0 %v564
    %616 = vmatprep.subr.mxu0 %v569
    %617 = vmatpush1.msra.mxu0 %v568
    %618 = vmatprep.subr.mxu0 %v573
    %619 = vmatpush1.msra.mxu0 %v572
    %620 = vmatprep.subr.mxu0 %v577
    %621 = vmatpush1.msra.mxu0 %v576
    %622 = vmatprep.subr.mxu0 %v581
    %623 = vmatpush1.msra.mxu0 %v580
    %624 = vmatprep.subr.mxu0 %v585
    %625 = vmatpush1.msra.mxu0 %v584
    %626 = vmatprep.subr.mxu0 %v589
    %627 = vmatpush1.msra.mxu0 %v588
    %628 = vmatprep.subr.mxu0 %v593
    %629 = vmatpush1.msra.mxu0 %v592
    %630 = vmatprep.subr.mxu0 %v597
    %631 = vmatpush1.msra.mxu0 %v596
    %632 = vmatprep.subr.mxu0 0.0
    %633 = vmatpush1.msra.mxu0 0.0
    %634 = vmatprep.subr.mxu0 0.0
    %635 = vmatpush1.msra.mxu0 0.0
    %636 = vmatprep.subr.mxu0 0.0
    %637 = vmatpush1.msra.mxu0 0.0
    %638 = vmatprep.subr.mxu0 0.0
    %639 = vmatpush1.msra.mxu0 0.0
    %640 = vmatprep.subr.mxu0 0.0
    %641 = vmatpush1.msra.mxu0 0.0
    %642 = vmatprep.subr.mxu0 0.0
    %643 = vmatpush1.msra.mxu0 0.0
    %644 = vmatprep.subr.mxu0 0.0
    %645 = vmatpush1.msra.mxu0 0.0
    %646 = vmatprep.subr.mxu0 0.0
    %647 = vmatpush1.msra.mxu0 0.0
    %648 = vmatprep.subr.mxu0 0.0
    %649 = vmatpush1.msra.mxu0 0.0
    %650 = vmatprep.subr.mxu0 0.0
    %651 = vmatpush1.msra.mxu0 0.0
    %652 = vmatprep.subr.mxu0 0.0
    %653 = vmatpush1.msra.mxu0 0.0
    %654 = vmatprep.subr.mxu0 0.0
    %655 = vmatpush1.msra.mxu0 0.0
    %656 = vmatprep.subr.mxu0 0.0
    %657 = vmatpush1.msra.mxu0 0.0
    %658 = vmatprep.subr.mxu0 0.0
    %659 = vmatpush1.msra.mxu0 0.0
    %660 = vmatprep.subr.mxu0 0.0
    %661 = vmatpush1.msra.mxu0 0.0
    %662 = vmatprep.subr.mxu0 0.0
    %663 = vmatpush1.msra.mxu0 0.0
    %664 = vmatprep.mubr.f32.mxu0 0.0
    %665 = vmatmul.mubr.f32.gmra.mrb[0].mxu0 %v528
    %v666 = vpop.f32.mrb[0].mxu0
    %v667 = vadd.f32 0.0, %v666
    %v668 = vpop.f32.mrb[0].mxu0
    %v669 = vadd.f32 0.0, %v668
    %670 = vdwg.mxu0
    %671 = vmatprep.subr.mxu0 %v539
    %672 = vmatpush1.msra.mxu0 %v538
    %673 = vmatprep.subr.mxu0 %v543
    %674 = vmatpush1.msra.mxu0 %v542
    %675 = vmatprep.subr.mxu0 %v547
    %676 = vmatpush1.msra.mxu0 %v546
    %677 = vmatprep.subr.mxu0 %v551
    %678 = vmatpush1.msra.mxu0 %v550
    %679 = vmatprep.subr.mxu0 %v555
    %680 = vmatpush1.msra.mxu0 %v554
    %681 = vmatprep.subr.mxu0 %v559
    %682 = vmatpush1.msra.mxu0 %v558
    %683 = vmatprep.subr.mxu0 %v563
    %684 = vmatpush1.msra.mxu0 %v562
    %685 = vmatprep.subr.mxu0 %v567
    %686 = vmatpush1.msra.mxu0 %v566
    %687 = vmatprep.subr.mxu0 %v571
    %688 = vmatpush1.msra.mxu0 %v570
    %689 = vmatprep.subr.mxu0 %v575
    %690 = vmatpush1.msra.mxu0 %v574
    %691 = vmatprep.subr.mxu0 %v579
    %692 = vmatpush1.msra.mxu0 %v578
    %693 = vmatprep.subr.mxu0 %v583
    %694 = vmatpush1.msra.mxu0 %v582
    %695 = vmatprep.subr.mxu0 %v587
    %696 = vmatpush1.msra.mxu0 %v586
    %697 = vmatprep.subr.mxu0 %v591
    %698 = vmatpush1.msra.mxu0 %v590
    %699 = vmatprep.subr.mxu0 %v595
    %700 = vmatpush1.msra.mxu0 %v594
    %701 = vmatprep.subr.mxu0 %v599
    %702 = vmatpush1.msra.mxu0 %v598
    %703 = vmatprep.subr.mxu0 0.0
    %704 = vmatpush1.msra.mxu0 0.0
    %705 = vmatprep.subr.mxu0 0.0
    %706 = vmatpush1.msra.mxu0 0.0
    %707 = vmatprep.subr.mxu0 0.0
    %708 = vmatpush1.msra.mxu0 0.0
    %709 = vmatprep.subr.mxu0 0.0
    %710 = vmatpush1.msra.mxu0 0.0
    %711 = vmatprep.subr.mxu0 0.0
    %712 = vmatpush1.msra.mxu0 0.0
    %713 = vmatprep.subr.mxu0 0.0
    %714 = vmatpush1.msra.mxu0 0.0
    %715 = vmatprep.subr.mxu0 0.0
    %716 = vmatpush1.msra.mxu0 0.0
    %717 = vmatprep.subr.mxu0 0.0
    %718 = vmatpush1.msra.mxu0 0.0
    %719 = vmatprep.subr.mxu0 0.0
    %720 = vmatpush1.msra.mxu0 0.0
    %721 = vmatprep.subr.mxu0 0.0
    %722 = vmatpush1.msra.mxu0 0.0
    %723 = vmatprep.subr.mxu0 0.0
    %724 = vmatpush1.msra.mxu0 0.0
    %725 = vmatprep.subr.mxu0 0.0
    %726 = vmatpush1.msra.mxu0 0.0
    %727 = vmatprep.subr.mxu0 0.0
    %728 = vmatpush1.msra.mxu0 0.0
    %729 = vmatprep.subr.mxu0 0.0
    %730 = vmatpush1.msra.mxu0 0.0
    %731 = vmatprep.subr.mxu0 0.0
    %732 = vmatpush1.msra.mxu0 0.0
    %733 = vmatprep.subr.mxu0 0.0
    %734 = vmatpush1.msra.mxu0 0.0
    %735 = vmatprep.mubr.f32.mxu0 0.0
    %736 = vmatmul.mubr.f32.gmra.mrb[0].mxu0 %v528
    %v737 = vpop.f32.mrb[0].mxu0
    %v738 = vadd.f32 0.0, %v737
    %v739 = vpop.f32.mrb[0].mxu0
    %v740 = vadd.f32 0.0, %v739
    %741 = vdwg.mxu0
    %v742 = vadd.f32 %v532, %v667
    %v743 = vadd.f32 %v533, %v669
    %v744 = vadd.f32 %v534, %v738
    %v745 = vadd.f32 %v535, %v740
    %v746 = vxor.u32 %v742, 2147483648
    %v747 = vxor.u32 %v743, 2147483648
    %v748 = vxor.u32 %v744, 2147483648
    %v749 = vmul.f32 %v746, 1.442695
    %v750 = vpow.pop %v749
    %v751 = vmul.f32 %v747, 1.442695
    %v752 = vpow.pop %v751
    %v753 = vmul.f32 %v748, 1.442695
    %v754 = vpow.pop %v753
    %v755 = vadd.f32 %v750, 1.0
    %v756 = vadd.f32 %v752, 1.0
    %v757 = vadd.f32 %v754, 1.0
    %v758 = vrcp.pop %v755
    %v759 = vmul.f32 1.0, %v758
    %v760 = vrcp.pop %v756
    %v761 = vmul.f32 1.0, %v760
    %v762 = vrcp.pop %v757
    %v763 = vmul.f32 1.0, %v762
    %v764 = vtanh.pop %v745
    %v765 = vmul.f32 %v761, %v526
    %v766 = vmul.f32 %v759, %v764
    %v767 = vadd.f32 %v765, %v766
    %v768 = vtanh.pop %v767
    %v769 = vmul.f32 %v763, %v768
    %s770 = scalar_lea.vmem [#allocation9], 16
    %771 = vst [vmem:[%s770] sm:$0xff] %v769
    %s772 = scalar_lea.vmem [#allocation4], 96
    %v773 = vld [vmem:[%s772] sm:$0xff]
    %v774 = vld [vmem:[%s772 + $0x8] sm:$0xff]
    %v775 = vld [vmem:[%s772 + $0x10] sm:$0xff]
    %v776 = vld [vmem:[%s772 + $0x18] sm:$0xff]
    %v777 = vld [vmem:[#allocation7] sm:$0xff]
    %v778 = vld [vmem:[#allocation7 + $0x8] sm:$0xff]
    %v779 = vld [vmem:[#allocation7 + $0x10] sm:$0xff]
    %v780 = vld [vmem:[#allocation7 + $0x18] sm:$0xff]
    %v781 = vld [vmem:[#allocation7 + $0x20] sm:$0xff]
    %v782 = vld [vmem:[#allocation7 + $0x28] sm:$0xff]
    %v783 = vld [vmem:[#allocation7 + $0x30] sm:$0xff]
    %v784 = vld [vmem:[#allocation7 + $0x38] sm:$0xff]
    %v785 = vld [vmem:[#allocation7 + $0x40] sm:$0xff]
    %v786 = vld [vmem:[#allocation7 + $0x48] sm:$0xff]
    %v787 = vld [vmem:[#allocation7 + $0x50] sm:$0xff]
    %v788 = vld [vmem:[#allocation7 + $0x58] sm:$0xff]
    %v789 = vld [vmem:[#allocation7 + $0x60] sm:$0xff]
    %v790 = vld [vmem:[#allocation7 + $0x68] sm:$0xff]
    %v791 = vld [vmem:[#allocation7 + $0x70] sm:$0xff]
    %v792 = vld [vmem:[#allocation7 + $0x78] sm:$0xff]
    %v793 = vld [vmem:[#allocation7 + $0x80] sm:$0xff]
    %v794 = vld [vmem:[#allocation7 + $0x88] sm:$0xff]
    %v795 = vld [vmem:[#allocation7 + $0x90] sm:$0xff]
    %v796 = vld [vmem:[#allocation7 + $0x98] sm:$0xff]
    %v797 = vld [vmem:[#allocation7 + $0xa0] sm:$0xff]
    %v798 = vld [vmem:[#allocation7 + $0xa8] sm:$0xff]
    %v799 = vld [vmem:[#allocation7 + $0xb0] sm:$0xff]
    %v800 = vld [vmem:[#allocation7 + $0xb8] sm:$0xff]
    %v801 = vld [vmem:[#allocation7 + $0xc0] sm:$0xff]
    %v802 = vld [vmem:[#allocation7 + $0xc8] sm:$0xff]
    %v803 = vld [vmem:[#allocation7 + $0xd0] sm:$0xff]
    %v804 = vld [vmem:[#allocation7 + $0xd8] sm:$0xff]
    %v805 = vld [vmem:[#allocation7 + $0xe0] sm:$0xff]
    %v806 = vld [vmem:[#allocation7 + $0xe8] sm:$0xff]
    %v807 = vld [vmem:[#allocation7 + $0xf0] sm:$0xff]
    %v808 = vld [vmem:[#allocation7 + $0xf8] sm:$0xff]
    %v809 = vld [vmem:[#allocation7 + $0x100] sm:$0xff]
    %v810 = vld [vmem:[#allocation7 + $0x108] sm:$0xff]
    %v811 = vld [vmem:[#allocation7 + $0x110] sm:$0xff]
    %v812 = vld [vmem:[#allocation7 + $0x118] sm:$0xff]
    %v813 = vld [vmem:[#allocation7 + $0x120] sm:$0xff]
    %v814 = vld [vmem:[#allocation7 + $0x128] sm:$0xff]
    %v815 = vld [vmem:[#allocation7 + $0x130] sm:$0xff]
    %v816 = vld [vmem:[#allocation7 + $0x138] sm:$0xff]
    %v817 = vld [vmem:[#allocation7 + $0x140] sm:$0xff]
    %v818 = vld [vmem:[#allocation7 + $0x148] sm:$0xff]
    %v819 = vld [vmem:[#allocation7 + $0x150] sm:$0xff]
    %v820 = vld [vmem:[#allocation7 + $0x158] sm:$0xff]
    %v821 = vld [vmem:[#allocation7 + $0x160] sm:$0xff]
    %v822 = vld [vmem:[#allocation7 + $0x168] sm:$0xff]
    %v823 = vld [vmem:[#allocation7 + $0x170] sm:$0xff]
    %v824 = vld [vmem:[#allocation7 + $0x178] sm:$0xff]
    %v825 = vld [vmem:[#allocation7 + $0x180] sm:$0xff]
    %v826 = vld [vmem:[#allocation7 + $0x188] sm:$0xff]
    %v827 = vld [vmem:[#allocation7 + $0x190] sm:$0xff]
    %v828 = vld [vmem:[#allocation7 + $0x198] sm:$0xff]
    %v829 = vld [vmem:[#allocation7 + $0x1a0] sm:$0xff]
    %v830 = vld [vmem:[#allocation7 + $0x1a8] sm:$0xff]
    %v831 = vld [vmem:[#allocation7 + $0x1b0] sm:$0xff]
    %v832 = vld [vmem:[#allocation7 + $0x1b8] sm:$0xff]
    %v833 = vld [vmem:[#allocation7 + $0x1c0] sm:$0xff]
    %v834 = vld [vmem:[#allocation7 + $0x1c8] sm:$0xff]
    %v835 = vld [vmem:[#allocation7 + $0x1d0] sm:$0xff]
    %v836 = vld [vmem:[#allocation7 + $0x1d8] sm:$0xff]
    %v837 = vld [vmem:[#allocation7 + $0x1e0] sm:$0xff]
    %v838 = vld [vmem:[#allocation7 + $0x1e8] sm:$0xff]
    %v839 = vld [vmem:[#allocation7 + $0x1f0] sm:$0xff]
    %v840 = vld [vmem:[#allocation7 + $0x1f8] sm:$0xff]
    %841 = vmatprep.subr.mxu0 %v778
    %842 = vmatpush1.msra.mxu0 %v777
    %843 = vmatprep.subr.mxu0 %v782
    %844 = vmatpush1.msra.mxu0 %v781
    %845 = vmatprep.subr.mxu0 %v786
    %846 = vmatpush1.msra.mxu0 %v785
    %847 = vmatprep.subr.mxu0 %v790
    %848 = vmatpush1.msra.mxu0 %v789
    %849 = vmatprep.subr.mxu0 %v794
    %850 = vmatpush1.msra.mxu0 %v793
    %851 = vmatprep.subr.mxu0 %v798
    %852 = vmatpush1.msra.mxu0 %v797
    %853 = vmatprep.subr.mxu0 %v802
    %854 = vmatpush1.msra.mxu0 %v801
    %855 = vmatprep.subr.mxu0 %v806
    %856 = vmatpush1.msra.mxu0 %v805
    %857 = vmatprep.subr.mxu0 %v810
    %858 = vmatpush1.msra.mxu0 %v809
    %859 = vmatprep.subr.mxu0 %v814
    %860 = vmatpush1.msra.mxu0 %v813
    %861 = vmatprep.subr.mxu0 %v818
    %862 = vmatpush1.msra.mxu0 %v817
    %863 = vmatprep.subr.mxu0 %v822
    %864 = vmatpush1.msra.mxu0 %v821
    %865 = vmatprep.subr.mxu0 %v826
    %866 = vmatpush1.msra.mxu0 %v825
    %867 = vmatprep.subr.mxu0 %v830
    %868 = vmatpush1.msra.mxu0 %v829
    %869 = vmatprep.subr.mxu0 %v834
    %870 = vmatpush1.msra.mxu0 %v833
    %871 = vmatprep.subr.mxu0 %v838
    %872 = vmatpush1.msra.mxu0 %v837
    %873 = vmatprep.subr.mxu0 0.0
    %874 = vmatpush1.msra.mxu0 0.0
    %875 = vmatprep.subr.mxu0 0.0
    %876 = vmatpush1.msra.mxu0 0.0
    %877 = vmatprep.subr.mxu0 0.0
    %878 = vmatpush1.msra.mxu0 0.0
    %879 = vmatprep.subr.mxu0 0.0
    %880 = vmatpush1.msra.mxu0 0.0
    %881 = vmatprep.subr.mxu0 0.0
    %882 = vmatpush1.msra.mxu0 0.0
    %883 = vmatprep.subr.mxu0 0.0
    %884 = vmatpush1.msra.mxu0 0.0
    %885 = vmatprep.subr.mxu0 0.0
    %886 = vmatpush1.msra.mxu0 0.0
    %887 = vmatprep.subr.mxu0 0.0
    %888 = vmatpush1.msra.mxu0 0.0
    %889 = vmatprep.subr.mxu0 0.0
    %890 = vmatpush1.msra.mxu0 0.0
    %891 = vmatprep.subr.mxu0 0.0
    %892 = vmatpush1.msra.mxu0 0.0
    %893 = vmatprep.subr.mxu0 0.0
    %894 = vmatpush1.msra.mxu0 0.0
    %895 = vmatprep.subr.mxu0 0.0
    %896 = vmatpush1.msra.mxu0 0.0
    %897 = vmatprep.subr.mxu0 0.0
    %898 = vmatpush1.msra.mxu0 0.0
    %899 = vmatprep.subr.mxu0 0.0
    %900 = vmatpush1.msra.mxu0 0.0
    %901 = vmatprep.subr.mxu0 0.0
    %902 = vmatpush1.msra.mxu0 0.0
    %903 = vmatprep.subr.mxu0 0.0
    %904 = vmatpush1.msra.mxu0 0.0
    %905 = vmatprep.mubr.f32.mxu0 0.0
    %906 = vmatmul.mubr.f32.gmra.mrb[0].mxu0 %v769
    %v907 = vpop.f32.mrb[0].mxu0
    %v908 = vadd.f32 0.0, %v907
    %v909 = vpop.f32.mrb[0].mxu0
    %v910 = vadd.f32 0.0, %v909
    %911 = vdwg.mxu0
    %912 = vmatprep.subr.mxu0 %v780
    %913 = vmatpush1.msra.mxu0 %v779
    %914 = vmatprep.subr.mxu0 %v784
    %915 = vmatpush1.msra.mxu0 %v783
    %916 = vmatprep.subr.mxu0 %v788
    %917 = vmatpush1.msra.mxu0 %v787
    %918 = vmatprep.subr.mxu0 %v792
    %919 = vmatpush1.msra.mxu0 %v791
    %920 = vmatprep.subr.mxu0 %v796
    %921 = vmatpush1.msra.mxu0 %v795
    %922 = vmatprep.subr.mxu0 %v800
    %923 = vmatpush1.msra.mxu0 %v799
    %924 = vmatprep.subr.mxu0 %v804
    %925 = vmatpush1.msra.mxu0 %v803
    %926 = vmatprep.subr.mxu0 %v808
    %927 = vmatpush1.msra.mxu0 %v807
    %928 = vmatprep.subr.mxu0 %v812
    %929 = vmatpush1.msra.mxu0 %v811
    %930 = vmatprep.subr.mxu0 %v816
    %931 = vmatpush1.msra.mxu0 %v815
    %932 = vmatprep.subr.mxu0 %v820
    %933 = vmatpush1.msra.mxu0 %v819
    %934 = vmatprep.subr.mxu0 %v824
    %935 = vmatpush1.msra.mxu0 %v823
    %936 = vmatprep.subr.mxu0 %v828
    %937 = vmatpush1.msra.mxu0 %v827
    %938 = vmatprep.subr.mxu0 %v832
    %939 = vmatpush1.msra.mxu0 %v831
    %940 = vmatprep.subr.mxu0 %v836
    %941 = vmatpush1.msra.mxu0 %v835
    %942 = vmatprep.subr.mxu0 %v840
    %943 = vmatpush1.msra.mxu0 %v839
    %944 = vmatprep.subr.mxu0 0.0
    %945 = vmatpush1.msra.mxu0 0.0
    %946 = vmatprep.subr.mxu0 0.0
    %947 = vmatpush1.msra.mxu0 0.0
    %948 = vmatprep.subr.mxu0 0.0
    %949 = vmatpush1.msra.mxu0 0.0
    %950 = vmatprep.subr.mxu0 0.0
    %951 = vmatpush1.msra.mxu0 0.0
    %952 = vmatprep.subr.mxu0 0.0
    %953 = vmatpush1.msra.mxu0 0.0
    %954 = vmatprep.subr.mxu0 0.0
    %955 = vmatpush1.msra.mxu0 0.0
    %956 = vmatprep.subr.mxu0 0.0
    %957 = vmatpush1.msra.mxu0 0.0
    %958 = vmatprep.subr.mxu0 0.0
    %959 = vmatpush1.msra.mxu0 0.0
    %960 = vmatprep.subr.mxu0 0.0
    %961 = vmatpush1.msra.mxu0 0.0
    %962 = vmatprep.subr.mxu0 0.0
    %963 = vmatpush1.msra.mxu0 0.0
    %964 = vmatprep.subr.mxu0 0.0
    %965 = vmatpush1.msra.mxu0 0.0
    %966 = vmatprep.subr.mxu0 0.0
    %967 = vmatpush1.msra.mxu0 0.0
    %968 = vmatprep.subr.mxu0 0.0
    %969 = vmatpush1.msra.mxu0 0.0
    %970 = vmatprep.subr.mxu0 0.0
    %971 = vmatpush1.msra.mxu0 0.0
    %972 = vmatprep.subr.mxu0 0.0
    %973 = vmatpush1.msra.mxu0 0.0
    %974 = vmatprep.subr.mxu0 0.0
    %975 = vmatpush1.msra.mxu0 0.0
    %976 = vmatprep.mubr.f32.mxu0 0.0
    %977 = vmatmul.mubr.f32.gmra.mrb[0].mxu0 %v769
    %v978 = vpop.f32.mrb[0].mxu0
    %v979 = vadd.f32 0.0, %v978
    %v980 = vpop.f32.mrb[0].mxu0
    %v981 = vadd.f32 0.0, %v980
    %982 = vdwg.mxu0
    %v983 = vadd.f32 %v773, %v908
    %v984 = vadd.f32 %v774, %v910
    %v985 = vadd.f32 %v775, %v979
    %v986 = vadd.f32 %v776, %v981
    %v987 = vxor.u32 %v983, 2147483648
    %v988 = vxor.u32 %v984, 2147483648
    %v989 = vxor.u32 %v985, 2147483648
    %v990 = vmul.f32 %v987, 1.442695
    %v991 = vpow.pop %v990
    %v992 = vmul.f32 %v988, 1.442695
    %v993 = vpow.pop %v992
    %v994 = vmul.f32 %v989, 1.442695
    %v995 = vpow.pop %v994
    %v996 = vadd.f32 %v991, 1.0
    %v997 = vadd.f32 %v993, 1.0
    %v998 = vadd.f32 %v995, 1.0
    %v999 = vrcp.pop %v996
    %v1000 = vmul.f32 1.0, %v999
    %v1001 = vrcp.pop %v997
    %v1002 = vmul.f32 1.0, %v1001
    %v1003 = vrcp.pop %v998
    %v1004 = vmul.f32 1.0, %v1003
    %v1005 = vtanh.pop %v986
    %v1006 = vmul.f32 %v1002, %v767
    %v1007 = vmul.f32 %v1000, %v1005
    %v1008 = vadd.f32 %v1006, %v1007
    %v1009 = vtanh.pop %v1008
    %v1010 = vmul.f32 %v1004, %v1009
    %s1011 = scalar_lea.vmem [#allocation9], 24
    %1012 = vst [vmem:[%s1011] sm:$0xff] %v1010
    %s1013 = scalar_lea.vmem [#allocation4], 128
    %v1014 = vld [vmem:[%s1013] sm:$0xff]
    %v1015 = vld [vmem:[%s1013 + $0x8] sm:$0xff]
    %v1016 = vld [vmem:[%s1013 + $0x10] sm:$0xff]
    %v1017 = vld [vmem:[%s1013 + $0x18] sm:$0xff]
    %v1018 = vld [vmem:[#allocation7] sm:$0xff]
    %v1019 = vld [vmem:[#allocation7 + $0x8] sm:$0xff]
    %v1020 = vld [vmem:[#allocation7 + $0x10] sm:$0xff]
    %v1021 = vld [vmem:[#allocation7 + $0x18] sm:$0xff]
    %v1022 = vld [vmem:[#allocation7 + $0x20] sm:$0xff]
    %v1023 = vld [vmem:[#allocation7 + $0x28] sm:$0xff]
    %v1024 = vld [vmem:[#allocation7 + $0x30] sm:$0xff]
    %v1025 = vld [vmem:[#allocation7 + $0x38] sm:$0xff]
    %v1026 = vld [vmem:[#allocation7 + $0x40] sm:$0xff]
    %v1027 = vld [vmem:[#allocation7 + $0x48] sm:$0xff]
    %v1028 = vld [vmem:[#allocation7 + $0x50] sm:$0xff]
    %v1029 = vld [vmem:[#allocation7 + $0x58] sm:$0xff]
    %v1030 = vld [vmem:[#allocation7 + $0x60] sm:$0xff]
    %v1031 = vld [vmem:[#allocation7 + $0x68] sm:$0xff]
    %v1032 = vld [vmem:[#allocation7 + $0x70] sm:$0xff]
    %v1033 = vld [vmem:[#allocation7 + $0x78] sm:$0xff]
    %v1034 = vld [vmem:[#allocation7 + $0x80] sm:$0xff]
    %v1035 = vld [vmem:[#allocation7 + $0x88] sm:$0xff]
    %v1036 = vld [vmem:[#allocation7 + $0x90] sm:$0xff]
    %v1037 = vld [vmem:[#allocation7 + $0x98] sm:$0xff]
    %v1038 = vld [vmem:[#allocation7 + $0xa0] sm:$0xff]
    %v1039 = vld [vmem:[#allocation7 + $0xa8] sm:$0xff]
    %v1040 = vld [vmem:[#allocation7 + $0xb0] sm:$0xff]
    %v1041 = vld [vmem:[#allocation7 + $0xb8] sm:$0xff]
    %v1042 = vld [vmem:[#allocation7 + $0xc0] sm:$0xff]
    %v1043 = vld [vmem:[#allocation7 + $0xc8] sm:$0xff]
    %v1044 = vld [vmem:[#allocation7 + $0xd0] sm:$0xff]
    %v1045 = vld [vmem:[#allocation7 + $0xd8] sm:$0xff]
    %v1046 = vld [vmem:[#allocation7 + $0xe0] sm:$0xff]
    %v1047 = vld [vmem:[#allocation7 + $0xe8] sm:$0xff]
    %v1048 = vld [vmem:[#allocation7 + $0xf0] sm:$0xff]
    %v1049 = vld [vmem:[#allocation7 + $0xf8] sm:$0xff]
    %v1050 = vld [vmem:[#allocation7 + $0x100] sm:$0xff]
    %v1051 = vld [vmem:[#allocation7 + $0x108] sm:$0xff]
    %v1052 = vld [vmem:[#allocation7 + $0x110] sm:$0xff]
    %v1053 = vld [vmem:[#allocation7 + $0x118] sm:$0xff]
    %v1054 = vld [vmem:[#allocation7 + $0x120] sm:$0xff]
    %v1055 = vld [vmem:[#allocation7 + $0x128] sm:$0xff]
    %v1056 = vld [vmem:[#allocation7 + $0x130] sm:$0xff]
    %v1057 = vld [vmem:[#allocation7 + $0x138] sm:$0xff]
    %v1058 = vld [vmem:[#allocation7 + $0x140] sm:$0xff]
    %v1059 = vld [vmem:[#allocation7 + $0x148] sm:$0xff]
    %v1060 = vld [vmem:[#allocation7 + $0x150] sm:$0xff]
    %v1061 = vld [vmem:[#allocation7 + $0x158] sm:$0xff]
    %v1062 = vld [vmem:[#allocation7 + $0x160] sm:$0xff]
    %v1063 = vld [vmem:[#allocation7 + $0x168] sm:$0xff]
    %v1064 = vld [vmem:[#allocation7 + $0x170] sm:$0xff]
    %v1065 = vld [vmem:[#allocation7 + $0x178] sm:$0xff]
    %v1066 = vld [vmem:[#allocation7 + $0x180] sm:$0xff]
    %v1067 = vld [vmem:[#allocation7 + $0x188] sm:$0xff]
    %v1068 = vld [vmem:[#allocation7 + $0x190] sm:$0xff]
    %v1069 = vld [vmem:[#allocation7 + $0x198] sm:$0xff]
    %v1070 = vld [vmem:[#allocation7 + $0x1a0] sm:$0xff]
    %v1071 = vld [vmem:[#allocation7 + $0x1a8] sm:$0xff]
    %v1072 = vld [vmem:[#allocation7 + $0x1b0] sm:$0xff]
    %v1073 = vld [vmem:[#allocation7 + $0x1b8] sm:$0xff]
    %v1074 = vld [vmem:[#allocation7 + $0x1c0] sm:$0xff]
    %v1075 = vld [vmem:[#allocation7 + $0x1c8] sm:$0xff]
    %v1076 = vld [vmem:[#allocation7 + $0x1d0] sm:$0xff]
    %v1077 = vld [vmem:[#allocation7 + $0x1d8] sm:$0xff]
    %v1078 = vld [vmem:[#allocation7 + $0x1e0] sm:$0xff]
    %v1079 = vld [vmem:[#allocation7 + $0x1e8] sm:$0xff]
    %v1080 = vld [vmem:[#allocation7 + $0x1f0] sm:$0xff]
    %v1081 = vld [vmem:[#allocation7 + $0x1f8] sm:$0xff]
    %1082 = vmatprep.subr.mxu0 %v1019
    %1083 = vmatpush1.msra.mxu0 %v1018
    %1084 = vmatprep.subr.mxu0 %v1023
    %1085 = vmatpush1.msra.mxu0 %v1022
    %1086 = vmatprep.subr.mxu0 %v1027
    %1087 = vmatpush1.msra.mxu0 %v1026
    %1088 = vmatprep.subr.mxu0 %v1031
    %1089 = vmatpush1.msra.mxu0 %v1030
    %1090 = vmatprep.subr.mxu0 %v1035
    %1091 = vmatpush1.msra.mxu0 %v1034
    %1092 = vmatprep.subr.mxu0 %v1039
    %1093 = vmatpush1.msra.mxu0 %v1038
    %1094 = vmatprep.subr.mxu0 %v1043
    %1095 = vmatpush1.msra.mxu0 %v1042
    %1096 = vmatprep.subr.mxu0 %v1047
    %1097 = vmatpush1.msra.mxu0 %v1046
    %1098 = vmatprep.subr.mxu0 %v1051
    %1099 = vmatpush1.msra.mxu0 %v1050
    %1100 = vmatprep.subr.mxu0 %v1055
    %1101 = vmatpush1.msra.mxu0 %v1054
    %1102 = vmatprep.subr.mxu0 %v1059
    %1103 = vmatpush1.msra.mxu0 %v1058
    %1104 = vmatprep.subr.mxu0 %v1063
    %1105 = vmatpush1.msra.mxu0 %v1062
    %1106 = vmatprep.subr.mxu0 %v1067
    %1107 = vmatpush1.msra.mxu0 %v1066
    %1108 = vmatprep.subr.mxu0 %v1071
    %1109 = vmatpush1.msra.mxu0 %v1070
    %1110 = vmatprep.subr.mxu0 %v1075
    %1111 = vmatpush1.msra.mxu0 %v1074
    %1112 = vmatprep.subr.mxu0 %v1079
    %1113 = vmatpush1.msra.mxu0 %v1078
    %1114 = vmatprep.subr.mxu0 0.0
    %1115 = vmatpush1.msra.mxu0 0.0
    %1116 = vmatprep.subr.mxu0 0.0
    %1117 = vmatpush1.msra.mxu0 0.0
    %1118 = vmatprep.subr.mxu0 0.0
    %1119 = vmatpush1.msra.mxu0 0.0
    %1120 = vmatprep.subr.mxu0 0.0
    %1121 = vmatpush1.msra.mxu0 0.0
    %1122 = vmatprep.subr.mxu0 0.0
    %1123 = vmatpush1.msra.mxu0 0.0
    %1124 = vmatprep.subr.mxu0 0.0
    %1125 = vmatpush1.msra.mxu0 0.0
    %1126 = vmatprep.subr.mxu0 0.0
    %1127 = vmatpush1.msra.mxu0 0.0
    %1128 = vmatprep.subr.mxu0 0.0
    %1129 = vmatpush1.msra.mxu0 0.0
    %1130 = vmatprep.subr.mxu0 0.0
    %1131 = vmatpush1.msra.mxu0 0.0
    %1132 = vmatprep.subr.mxu0 0.0
    %1133 = vmatpush1.msra.mxu0 0.0
    %1134 = vmatprep.subr.mxu0 0.0
    %1135 = vmatpush1.msra.mxu0 0.0
    %1136 = vmatprep.subr.mxu0 0.0
    %1137 = vmatpush1.msra.mxu0 0.0
    %1138 = vmatprep.subr.mxu0 0.0
    %1139 = vmatpush1.msra.mxu0 0.0
    %1140 = vmatprep.subr.mxu0 0.0
    %1141 = vmatpush1.msra.mxu0 0.0
    %1142 = vmatprep.subr.mxu0 0.0
    %1143 = vmatpush1.msra.mxu0 0.0
    %1144 = vmatprep.subr.mxu0 0.0
    %1145 = vmatpush1.msra.mxu0 0.0
    %1146 = vmatprep.mubr.f32.mxu0 0.0
    %1147 = vmatmul.mubr.f32.gmra.mrb[0].mxu0 %v1010
    %v1148 = vpop.f32.mrb[0].mxu0
    %v1149 = vadd.f32 0.0, %v1148
    %v1150 = vpop.f32.mrb[0].mxu0
    %v1151 = vadd.f32 0.0, %v1150
    %1152 = vdwg.mxu0
    %1153 = vmatprep.subr.mxu0 %v1021
    %1154 = vmatpush1.msra.mxu0 %v1020
    %1155 = vmatprep.subr.mxu0 %v1025
    %1156 = vmatpush1.msra.mxu0 %v1024
    %1157 = vmatprep.subr.mxu0 %v1029
    %1158 = vmatpush1.msra.mxu0 %v1028
    %1159 = vmatprep.subr.mxu0 %v1033
    %1160 = vmatpush1.msra.mxu0 %v1032
    %1161 = vmatprep.subr.mxu0 %v1037
    %1162 = vmatpush1.msra.mxu0 %v1036
    %1163 = vmatprep.subr.mxu0 %v1041
    %1164 = vmatpush1.msra.mxu0 %v1040
    %1165 = vmatprep.subr.mxu0 %v1045
    %1166 = vmatpush1.msra.mxu0 %v1044
    %1167 = vmatprep.subr.mxu0 %v1049
    %1168 = vmatpush1.msra.mxu0 %v1048
    %1169 = vmatprep.subr.mxu0 %v1053
    %1170 = vmatpush1.msra.mxu0 %v1052
    %1171 = vmatprep.subr.mxu0 %v1057
    %1172 = vmatpush1.msra.mxu0 %v1056
    %1173 = vmatprep.subr.mxu0 %v1061
    %1174 = vmatpush1.msra.mxu0 %v1060
    %1175 = vmatprep.subr.mxu0 %v1065
    %1176 = vmatpush1.msra.mxu0 %v1064
    %1177 = vmatprep.subr.mxu0 %v1069
    %1178 = vmatpush1.msra.mxu0 %v1068
    %1179 = vmatprep.subr.mxu0 %v1073
    %1180 = vmatpush1.msra.mxu0 %v1072
    %1181 = vmatprep.subr.mxu0 %v1077
    %1182 = vmatpush1.msra.mxu0 %v1076
    %1183 = vmatprep.subr.mxu0 %v1081
    %1184 = vmatpush1.msra.mxu0 %v1080
    %1185 = vmatprep.subr.mxu0 0.0
    %1186 = vmatpush1.msra.mxu0 0.0
    %1187 = vmatprep.subr.mxu0 0.0
    %1188 = vmatpush1.msra.mxu0 0.0
    %1189 = vmatprep.subr.mxu0 0.0
    %1190 = vmatpush1.msra.mxu0 0.0
    %1191 = vmatprep.subr.mxu0 0.0
    %1192 = vmatpush1.msra.mxu0 0.0
    %1193 = vmatprep.subr.mxu0 0.0
    %1194 = vmatpush1.msra.mxu0 0.0
    %1195 = vmatprep.subr.mxu0 0.0
    %1196 = vmatpush1.msra.mxu0 0.0
    %1197 = vmatprep.subr.mxu0 0.0
    %1198 = vmatpush1.msra.mxu0 0.0
    %1199 = vmatprep.subr.mxu0 0.0
    %1200 = vmatpush1.msra.mxu0 0.0
    %1201 = vmatprep.subr.mxu0 0.0
    %1202 = vmatpush1.msra.mxu0 0.0
    %1203 = vmatprep.subr.mxu0 0.0
    %1204 = vmatpush1.msra.mxu0 0.0
    %1205 = vmatprep.subr.mxu0 0.0
    %1206 = vmatpush1.msra.mxu0 0.0
    %1207 = vmatprep.subr.mxu0 0.0
    %1208 = vmatpush1.msra.mxu0 0.0
    %1209 = vmatprep.subr.mxu0 0.0
    %1210 = vmatpush1.msra.mxu0 0.0
    %1211 = vmatprep.subr.mxu0 0.0
    %1212 = vmatpush1.msra.mxu0 0.0
    %1213 = vmatprep.subr.mxu0 0.0
    %1214 = vmatpush1.msra.mxu0 0.0
    %1215 = vmatprep.subr.mxu0 0.0
    %1216 = vmatpush1.msra.mxu0 0.0
    %1217 = vmatprep.mubr.f32.mxu0 0.0
    %1218 = vmatmul.mubr.f32.gmra.mrb[0].mxu0 %v1010
    %v1219 = vpop.f32.mrb[0].mxu0
    %v1220 = vadd.f32 0.0, %v1219
    %v1221 = vpop.f32.mrb[0].mxu0
    %v1222 = vadd.f32 0.0, %v1221
    %1223 = vdwg.mxu0
    %v1224 = vadd.f32 %v1014, %v1149
    %v1225 = vadd.f32 %v1015, %v1151
    %v1226 = vadd.f32 %v1016, %v1220
    %v1227 = vadd.f32 %v1017, %v1222
    %v1228 = vxor.u32 %v1224, 2147483648
    %v1229 = vxor.u32 %v1225, 2147483648
    %v1230 = vxor.u32 %v1226, 2147483648
    %v1231 = vmul.f32 %v1228, 1.442695
    %v1232 = vpow.pop %v1231
    %v1233 = vmul.f32 %v1229, 1.442695
    %v1234 = vpow.pop %v1233
    %v1235 = vmul.f32 %v1230, 1.442695
    %v1236 = vpow.pop %v1235
    %v1237 = vadd.f32 %v1232, 1.0
    %v1238 = vadd.f32 %v1234, 1.0
    %v1239 = vadd.f32 %v1236, 1.0
    %v1240 = vrcp.pop %v1237
    %v1241 = vmul.f32 1.0, %v1240
    %v1242 = vrcp.pop %v1238
    %v1243 = vmul.f32 1.0, %v1242
    %v1244 = vrcp.pop %v1239
    %v1245 = vmul.f32 1.0, %v1244
    %v1246 = vtanh.pop %v1227
    %v1247 = vmul.f32 %v1243, %v1008
    %v1248 = vmul.f32 %v1241, %v1246
    %v1249 = vadd.f32 %v1247, %v1248
    %v1250 = vtanh.pop %v1249
    %v1251 = vmul.f32 %v1245, %v1250
    %s1252 = scalar_lea.vmem [#allocation9], 32
    %1253 = vst [vmem:[%s1252] sm:$0xff] %v1251
    %s1254 = scalar_lea.vmem [#allocation4], 160
    %v1255 = vld [vmem:[%s1254] sm:$0xff]
    %v1256 = vld [vmem:[%s1254 + $0x8] sm:$0xff]
    %v1257 = vld [vmem:[%s1254 + $0x10] sm:$0xff]
    %v1258 = vld [vmem:[%s1254 + $0x18] sm:$0xff]
    %v1259 = vld [vmem:[#allocation7] sm:$0xff]
    %v1260 = vld [vmem:[#allocation7 + $0x8] sm:$0xff]
    %v1261 = vld [vmem:[#allocation7 + $0x10] sm:$0xff]
    %v1262 = vld [vmem:[#allocation7 + $0x18] sm:$0xff]
    %v1263 = vld [vmem:[#allocation7 + $0x20] sm:$0xff]
    %v1264 = vld [vmem:[#allocation7 + $0x28] sm:$0xff]
    %v1265 = vld [vmem:[#allocation7 + $0x30] sm:$0xff]
    %v1266 = vld [vmem:[#allocation7 + $0x38] sm:$0xff]
    %v1267 = vld [vmem:[#allocation7 + $0x40] sm:$0xff]
    %v1268 = vld [vmem:[#allocation7 + $0x48] sm:$0xff]
    %v1269 = vld [vmem:[#allocation7 + $0x50] sm:$0xff]
    %v1270 = vld [vmem:[#allocation7 + $0x58] sm:$0xff]
    %v1271 = vld [vmem:[#allocation7 + $0x60] sm:$0xff]
    %v1272 = vld [vmem:[#allocation7 + $0x68] sm:$0xff]
    %v1273 = vld [vmem:[#allocation7 + $0x70] sm:$0xff]
    %v1274 = vld [vmem:[#allocation7 + $0x78] sm:$0xff]
    %v1275 = vld [vmem:[#allocation7 + $0x80] sm:$0xff]
    %v1276 = vld [vmem:[#allocation7 + $0x88] sm:$0xff]
    %v1277 = vld [vmem:[#allocation7 + $0x90] sm:$0xff]
    %v1278 = vld [vmem:[#allocation7 + $0x98] sm:$0xff]
    %v1279 = vld [vmem:[#allocation7 + $0xa0] sm:$0xff]
    %v1280 = vld [vmem:[#allocation7 + $0xa8] sm:$0xff]
    %v1281 = vld [vmem:[#allocation7 + $0xb0] sm:$0xff]
    %v1282 = vld [vmem:[#allocation7 + $0xb8] sm:$0xff]
    %v1283 = vld [vmem:[#allocation7 + $0xc0] sm:$0xff]
    %v1284 = vld [vmem:[#allocation7 + $0xc8] sm:$0xff]
    %v1285 = vld [vmem:[#allocation7 + $0xd0] sm:$0xff]
    %v1286 = vld [vmem:[#allocation7 + $0xd8] sm:$0xff]
    %v1287 = vld [vmem:[#allocation7 + $0xe0] sm:$0xff]
    %v1288 = vld [vmem:[#allocation7 + $0xe8] sm:$0xff]
    %v1289 = vld [vmem:[#allocation7 + $0xf0] sm:$0xff]
    %v1290 = vld [vmem:[#allocation7 + $0xf8] sm:$0xff]
    %v1291 = vld [vmem:[#allocation7 + $0x100] sm:$0xff]
    %v1292 = vld [vmem:[#allocation7 + $0x108] sm:$0xff]
    %v1293 = vld [vmem:[#allocation7 + $0x110] sm:$0xff]
    %v1294 = vld [vmem:[#allocation7 + $0x118] sm:$0xff]
    %v1295 = vld [vmem:[#allocation7 + $0x120] sm:$0xff]
    %v1296 = vld [vmem:[#allocation7 + $0x128] sm:$0xff]
    %v1297 = vld [vmem:[#allocation7 + $0x130] sm:$0xff]
    %v1298 = vld [vmem:[#allocation7 + $0x138] sm:$0xff]
    %v1299 = vld [vmem:[#allocation7 + $0x140] sm:$0xff]
    %v1300 = vld [vmem:[#allocation7 + $0x148] sm:$0xff]
    %v1301 = vld [vmem:[#allocation7 + $0x150] sm:$0xff]
    %v1302 = vld [vmem:[#allocation7 + $0x158] sm:$0xff]
    %v1303 = vld [vmem:[#allocation7 + $0x160] sm:$0xff]
    %v1304 = vld [vmem:[#allocation7 + $0x168] sm:$0xff]
    %v1305 = vld [vmem:[#allocation7 + $0x170] sm:$0xff]
    %v1306 = vld [vmem:[#allocation7 + $0x178] sm:$0xff]
    %v1307 = vld [vmem:[#allocation7 + $0x180] sm:$0xff]
    %v1308 = vld [vmem:[#allocation7 + $0x188] sm:$0xff]
    %v1309 = vld [vmem:[#allocation7 + $0x190] sm:$0xff]
    %v1310 = vld [vmem:[#allocation7 + $0x198] sm:$0xff]
    %v1311 = vld [vmem:[#allocation7 + $0x1a0] sm:$0xff]
    %v1312 = vld [vmem:[#allocation7 + $0x1a8] sm:$0xff]
    %v1313 = vld [vmem:[#allocation7 + $0x1b0] sm:$0xff]
    %v1314 = vld [vmem:[#allocation7 + $0x1b8] sm:$0xff]
    %v1315 = vld [vmem:[#allocation7 + $0x1c0] sm:$0xff]
    %v1316 = vld [vmem:[#allocation7 + $0x1c8] sm:$0xff]
    %v1317 = vld [vmem:[#allocation7 + $0x1d0] sm:$0xff]
    %v1318 = vld [vmem:[#allocation7 + $0x1d8] sm:$0xff]
    %v1319 = vld [vmem:[#allocation7 + $0x1e0] sm:$0xff]
    %v1320 = vld [vmem:[#allocation7 + $0x1e8] sm:$0xff]
    %v1321 = vld [vmem:[#allocation7 + $0x1f0] sm:$0xff]
    %v1322 = vld [vmem:[#allocation7 + $0x1f8] sm:$0xff]
    %1323 = vmatprep.subr.mxu0 %v1260
    %1324 = vmatpush1.msra.mxu0 %v1259
    %1325 = vmatprep.subr.mxu0 %v1264
    %1326 = vmatpush1.msra.mxu0 %v1263
    %1327 = vmatprep.subr.mxu0 %v1268
    %1328 = vmatpush1.msra.mxu0 %v1267
    %1329 = vmatprep.subr.mxu0 %v1272
    %1330 = vmatpush1.msra.mxu0 %v1271
    %1331 = vmatprep.subr.mxu0 %v1276
    %1332 = vmatpush1.msra.mxu0 %v1275
    %1333 = vmatprep.subr.mxu0 %v1280
    %1334 = vmatpush1.msra.mxu0 %v1279
    %1335 = vmatprep.subr.mxu0 %v1284
    %1336 = vmatpush1.msra.mxu0 %v1283
    %1337 = vmatprep.subr.mxu0 %v1288
    %1338 = vmatpush1.msra.mxu0 %v1287
    %1339 = vmatprep.subr.mxu0 %v1292
    %1340 = vmatpush1.msra.mxu0 %v1291
    %1341 = vmatprep.subr.mxu0 %v1296
    %1342 = vmatpush1.msra.mxu0 %v1295
    %1343 = vmatprep.subr.mxu0 %v1300
    %1344 = vmatpush1.msra.mxu0 %v1299
    %1345 = vmatprep.subr.mxu0 %v1304
    %1346 = vmatpush1.msra.mxu0 %v1303
    %1347 = vmatprep.subr.mxu0 %v1308
    %1348 = vmatpush1.msra.mxu0 %v1307
    %1349 = vmatprep.subr.mxu0 %v1312
    %1350 = vmatpush1.msra.mxu0 %v1311
    %1351 = vmatprep.subr.mxu0 %v1316
    %1352 = vmatpush1.msra.mxu0 %v1315
    %1353 = vmatprep.subr.mxu0 %v1320
    %1354 = vmatpush1.msra.mxu0 %v1319
    %1355 = vmatprep.subr.mxu0 0.0
    %1356 = vmatpush1.msra.mxu0 0.0
    %1357 = vmatprep.subr.mxu0 0.0
    %1358 = vmatpush1.msra.mxu0 0.0
    %1359 = vmatprep.subr.mxu0 0.0
    %1360 = vmatpush1.msra.mxu0 0.0
    %1361 = vmatprep.subr.mxu0 0.0
    %1362 = vmatpush1.msra.mxu0 0.0
    %1363 = vmatprep.subr.mxu0 0.0
    %1364 = vmatpush1.msra.mxu0 0.0
    %1365 = vmatprep.subr.mxu0 0.0
    %1366 = vmatpush1.msra.mxu0 0.0
    %1367 = vmatprep.subr.mxu0 0.0
    %1368 = vmatpush1.msra.mxu0 0.0
    %1369 = vmatprep.subr.mxu0 0.0
    %1370 = vmatpush1.msra.mxu0 0.0
    %1371 = vmatprep.subr.mxu0 0.0
    %1372 = vmatpush1.msra.mxu0 0.0
    %1373 = vmatprep.subr.mxu0 0.0
    %1374 = vmatpush1.msra.mxu0 0.0
    %1375 = vmatprep.subr.mxu0 0.0
    %1376 = vmatpush1.msra.mxu0 0.0
    %1377 = vmatprep.subr.mxu0 0.0
    %1378 = vmatpush1.msra.mxu0 0.0
    %1379 = vmatprep.subr.mxu0 0.0
    %1380 = vmatpush1.msra.mxu0 0.0
    %1381 = vmatprep.subr.mxu0 0.0
    %1382 = vmatpush1.msra.mxu0 0.0
    %1383 = vmatprep.subr.mxu0 0.0
    %1384 = vmatpush1.msra.mxu0 0.0
    %1385 = vmatprep.subr.mxu0 0.0
    %1386 = vmatpush1.msra.mxu0 0.0
    %1387 = vmatprep.mubr.f32.mxu0 0.0
    %1388 = vmatmul.mubr.f32.gmra.mrb[0].mxu0 %v1251
    %v1389 = vpop.f32.mrb[0].mxu0
    %v1390 = vadd.f32 0.0, %v1389
    %v1391 = vpop.f32.mrb[0].mxu0
    %v1392 = vadd.f32 0.0, %v1391
    %1393 = vdwg.mxu0
    %1394 = vmatprep.subr.mxu0 %v1262
    %1395 = vmatpush1.msra.mxu0 %v1261
    %1396 = vmatprep.subr.mxu0 %v1266
    %1397 = vmatpush1.msra.mxu0 %v1265
    %1398 = vmatprep.subr.mxu0 %v1270
    %1399 = vmatpush1.msra.mxu0 %v1269
    %1400 = vmatprep.subr.mxu0 %v1274
    %1401 = vmatpush1.msra.mxu0 %v1273
    %1402 = vmatprep.subr.mxu0 %v1278
    %1403 = vmatpush1.msra.mxu0 %v1277
    %1404 = vmatprep.subr.mxu0 %v1282
    %1405 = vmatpush1.msra.mxu0 %v1281
    %1406 = vmatprep.subr.mxu0 %v1286
    %1407 = vmatpush1.msra.mxu0 %v1285
    %1408 = vmatprep.subr.mxu0 %v1290
    %1409 = vmatpush1.msra.mxu0 %v1289
    %1410 = vmatprep.subr.mxu0 %v1294
    %1411 = vmatpush1.msra.mxu0 %v1293
    %1412 = vmatprep.subr.mxu0 %v1298
    %1413 = vmatpush1.msra.mxu0 %v1297
    %1414 = vmatprep.subr.mxu0 %v1302
    %1415 = vmatpush1.msra.mxu0 %v1301
    %1416 = vmatprep.subr.mxu0 %v1306
    %1417 = vmatpush1.msra.mxu0 %v1305
    %1418 = vmatprep.subr.mxu0 %v1310
    %1419 = vmatpush1.msra.mxu0 %v1309
    %1420 = vmatprep.subr.mxu0 %v1314
    %1421 = vmatpush1.msra.mxu0 %v1313
    %1422 = vmatprep.subr.mxu0 %v1318
    %1423 = vmatpush1.msra.mxu0 %v1317
    %1424 = vmatprep.subr.mxu0 %v1322
    %1425 = vmatpush1.msra.mxu0 %v1321
    %1426 = vmatprep.subr.mxu0 0.0
    %1427 = vmatpush1.msra.mxu0 0.0
    %1428 = vmatprep.subr.mxu0 0.0
    %1429 = vmatpush1.msra.mxu0 0.0
    %1430 = vmatprep.subr.mxu0 0.0
    %1431 = vmatpush1.msra.mxu0 0.0
    %1432 = vmatprep.subr.mxu0 0.0
    %1433 = vmatpush1.msra.mxu0 0.0
    %1434 = vmatprep.subr.mxu0 0.0
    %1435 = vmatpush1.msra.mxu0 0.0
    %1436 = vmatprep.subr.mxu0 0.0
    %1437 = vmatpush1.msra.mxu0 0.0
    %1438 = vmatprep.subr.mxu0 0.0
    %1439 = vmatpush1.msra.mxu0 0.0
    %1440 = vmatprep.subr.mxu0 0.0
    %1441 = vmatpush1.msra.mxu0 0.0
    %1442 = vmatprep.subr.mxu0 0.0
    %1443 = vmatpush1.msra.mxu0 0.0
    %1444 = vmatprep.subr.mxu0 0.0
    %1445 = vmatpush1.msra.mxu0 0.0
    %1446 = vmatprep.subr.mxu0 0.0
    %1447 = vmatpush1.msra.mxu0 0.0
    %1448 = vmatprep.subr.mxu0 0.0
    %1449 = vmatpush1.msra.mxu0 0.0
    %1450 = vmatprep.subr.mxu0 0.0
    %1451 = vmatpush1.msra.mxu0 0.0
    %1452 = vmatprep.subr.mxu0 0.0
    %1453 = vmatpush1.msra.mxu0 0.0
    %1454 = vmatprep.subr.mxu0 0.0
    %1455 = vmatpush1.msra.mxu0 0.0
    %1456 = vmatprep.subr.mxu0 0.0
    %1457 = vmatpush1.msra.mxu0 0.0
    %1458 = vmatprep.mubr.f32.mxu0 0.0
    %1459 = vmatmul.mubr.f32.gmra.mrb[0].mxu0 %v1251
    %v1460 = vpop.f32.mrb[0].mxu0
    %v1461 = vadd.f32 0.0, %v1460
    %v1462 = vpop.f32.mrb[0].mxu0
    %v1463 = vadd.f32 0.0, %v1462
    %1464 = vdwg.mxu0
    %v1465 = vadd.f32 %v1255, %v1390
    %v1466 = vadd.f32 %v1256, %v1392
    %v1467 = vadd.f32 %v1257, %v1461
    %v1468 = vadd.f32 %v1258, %v1463
    %v1469 = vxor.u32 %v1465, 2147483648
    %v1470 = vxor.u32 %v1466, 2147483648
    %v1471 = vxor.u32 %v1467, 2147483648
    %v1472 = vmul.f32 %v1469, 1.442695
    %v1473 = vpow.pop %v1472
    %v1474 = vmul.f32 %v1470, 1.442695
    %v1475 = vpow.pop %v1474
    %v1476 = vmul.f32 %v1471, 1.442695
    %v1477 = vpow.pop %v1476
    %v1478 = vadd.f32 %v1473, 1.0
    %v1479 = vadd.f32 %v1475, 1.0
    %v1480 = vadd.f32 %v1477, 1.0
    %v1481 = vrcp.pop %v1478
    %v1482 = vmul.f32 1.0, %v1481
    %v1483 = vrcp.pop %v1479
    %v1484 = vmul.f32 1.0, %v1483
    %v1485 = vrcp.pop %v1480
    %v1486 = vmul.f32 1.0, %v1485
    %v1487 = vtanh.pop %v1468
    %v1488 = vmul.f32 %v1484, %v1249
    %v1489 = vmul.f32 %v1482, %v1487
    %v1490 = vadd.f32 %v1488, %v1489
    %v1491 = vtanh.pop %v1490
    %v1492 = vmul.f32 %v1486, %v1491
    %s1493 = scalar_lea.vmem [#allocation9], 40
    %1494 = vst [vmem:[%s1493] sm:$0xff] %v1492
    %s1495 = scalar_lea.vmem [#allocation4], 192
    %v1496 = vld [vmem:[%s1495] sm:$0xff]
    %v1497 = vld [vmem:[%s1495 + $0x8] sm:$0xff]
    %v1498 = vld [vmem:[%s1495 + $0x10] sm:$0xff]
    %v1499 = vld [vmem:[%s1495 + $0x18] sm:$0xff]
    %v1500 = vld [vmem:[#allocation7] sm:$0xff]
    %v1501 = vld [vmem:[#allocation7 + $0x8] sm:$0xff]
    %v1502 = vld [vmem:[#allocation7 + $0x10] sm:$0xff]
    %v1503 = vld [vmem:[#allocation7 + $0x18] sm:$0xff]
    %v1504 = vld [vmem:[#allocation7 + $0x20] sm:$0xff]
    %v1505 = vld [vmem:[#allocation7 + $0x28] sm:$0xff]
    %v1506 = vld [vmem:[#allocation7 + $0x30] sm:$0xff]
    %v1507 = vld [vmem:[#allocation7 + $0x38] sm:$0xff]
    %v1508 = vld [vmem:[#allocation7 + $0x40] sm:$0xff]
    %v1509 = vld [vmem:[#allocation7 + $0x48] sm:$0xff]
    %v1510 = vld [vmem:[#allocation7 + $0x50] sm:$0xff]
    %v1511 = vld [vmem:[#allocation7 + $0x58] sm:$0xff]
    %v1512 = vld [vmem:[#allocation7 + $0x60] sm:$0xff]
    %v1513 = vld [vmem:[#allocation7 + $0x68] sm:$0xff]
    %v1514 = vld [vmem:[#allocation7 + $0x70] sm:$0xff]
    %v1515 = vld [vmem:[#allocation7 + $0x78] sm:$0xff]
    %v1516 = vld [vmem:[#allocation7 + $0x80] sm:$0xff]
    %v1517 = vld [vmem:[#allocation7 + $0x88] sm:$0xff]
    %v1518 = vld [vmem:[#allocation7 + $0x90] sm:$0xff]
    %v1519 = vld [vmem:[#allocation7 + $0x98] sm:$0xff]
    %v1520 = vld [vmem:[#allocation7 + $0xa0] sm:$0xff]
    %v1521 = vld [vmem:[#allocation7 + $0xa8] sm:$0xff]
    %v1522 = vld [vmem:[#allocation7 + $0xb0] sm:$0xff]
    %v1523 = vld [vmem:[#allocation7 + $0xb8] sm:$0xff]
    %v1524 = vld [vmem:[#allocation7 + $0xc0] sm:$0xff]
    %v1525 = vld [vmem:[#allocation7 + $0xc8] sm:$0xff]
    %v1526 = vld [vmem:[#allocation7 + $0xd0] sm:$0xff]
    %v1527 = vld [vmem:[#allocation7 + $0xd8] sm:$0xff]
    %v1528 = vld [vmem:[#allocation7 + $0xe0] sm:$0xff]
    %v1529 = vld [vmem:[#allocation7 + $0xe8] sm:$0xff]
    %v1530 = vld [vmem:[#allocation7 + $0xf0] sm:$0xff]
    %v1531 = vld [vmem:[#allocation7 + $0xf8] sm:$0xff]
    %v1532 = vld [vmem:[#allocation7 + $0x100] sm:$0xff]
    %v1533 = vld [vmem:[#allocation7 + $0x108] sm:$0xff]
    %v1534 = vld [vmem:[#allocation7 + $0x110] sm:$0xff]
    %v1535 = vld [vmem:[#allocation7 + $0x118] sm:$0xff]
    %v1536 = vld [vmem:[#allocation7 + $0x120] sm:$0xff]
    %v1537 = vld [vmem:[#allocation7 + $0x128] sm:$0xff]
    %v1538 = vld [vmem:[#allocation7 + $0x130] sm:$0xff]
    %v1539 = vld [vmem:[#allocation7 + $0x138] sm:$0xff]
    %v1540 = vld [vmem:[#allocation7 + $0x140] sm:$0xff]
    %v1541 = vld [vmem:[#allocation7 + $0x148] sm:$0xff]
    %v1542 = vld [vmem:[#allocation7 + $0x150] sm:$0xff]
    %v1543 = vld [vmem:[#allocation7 + $0x158] sm:$0xff]
    %v1544 = vld [vmem:[#allocation7 + $0x160] sm:$0xff]
    %v1545 = vld [vmem:[#allocation7 + $0x168] sm:$0xff]
    %v1546 = vld [vmem:[#allocation7 + $0x170] sm:$0xff]
    %v1547 = vld [vmem:[#allocation7 + $0x178] sm:$0xff]
    %v1548 = vld [vmem:[#allocation7 + $0x180] sm:$0xff]
    %v1549 = vld [vmem:[#allocation7 + $0x188] sm:$0xff]
    %v1550 = vld [vmem:[#allocation7 + $0x190] sm:$0xff]
    %v1551 = vld [vmem:[#allocation7 + $0x198] sm:$0xff]
    %v1552 = vld [vmem:[#allocation7 + $0x1a0] sm:$0xff]
    %v1553 = vld [vmem:[#allocation7 + $0x1a8] sm:$0xff]
    %v1554 = vld [vmem:[#allocation7 + $0x1b0] sm:$0xff]
    %v1555 = vld [vmem:[#allocation7 + $0x1b8] sm:$0xff]
    %v1556 = vld [vmem:[#allocation7 + $0x1c0] sm:$0xff]
    %v1557 = vld [vmem:[#allocation7 + $0x1c8] sm:$0xff]
    %v1558 = vld [vmem:[#allocation7 + $0x1d0] sm:$0xff]
    %v1559 = vld [vmem:[#allocation7 + $0x1d8] sm:$0xff]
    %v1560 = vld [vmem:[#allocation7 + $0x1e0] sm:$0xff]
    %v1561 = vld [vmem:[#allocation7 + $0x1e8] sm:$0xff]
    %v1562 = vld [vmem:[#allocation7 + $0x1f0] sm:$0xff]
    %v1563 = vld [vmem:[#allocation7 + $0x1f8] sm:$0xff]
    %1564 = vmatprep.subr.mxu0 %v1501
    %1565 = vmatpush1.msra.mxu0 %v1500
    %1566 = vmatprep.subr.mxu0 %v1505
    %1567 = vmatpush1.msra.mxu0 %v1504
    %1568 = vmatprep.subr.mxu0 %v1509
    %1569 = vmatpush1.msra.mxu0 %v1508
    %1570 = vmatprep.subr.mxu0 %v1513
    %1571 = vmatpush1.msra.mxu0 %v1512
    %1572 = vmatprep.subr.mxu0 %v1517
    %1573 = vmatpush1.msra.mxu0 %v1516
    %1574 = vmatprep.subr.mxu0 %v1521
    %1575 = vmatpush1.msra.mxu0 %v1520
    %1576 = vmatprep.subr.mxu0 %v1525
    %1577 = vmatpush1.msra.mxu0 %v1524
    %1578 = vmatprep.subr.mxu0 %v1529
    %1579 = vmatpush1.msra.mxu0 %v1528
    %1580 = vmatprep.subr.mxu0 %v1533
    %1581 = vmatpush1.msra.mxu0 %v1532
    %1582 = vmatprep.subr.mxu0 %v1537
    %1583 = vmatpush1.msra.mxu0 %v1536
    %1584 = vmatprep.subr.mxu0 %v1541
    %1585 = vmatpush1.msra.mxu0 %v1540
    %1586 = vmatprep.subr.mxu0 %v1545
    %1587 = vmatpush1.msra.mxu0 %v1544
    %1588 = vmatprep.subr.mxu0 %v1549
    %1589 = vmatpush1.msra.mxu0 %v1548
    %1590 = vmatprep.subr.mxu0 %v1553
    %1591 = vmatpush1.msra.mxu0 %v1552
    %1592 = vmatprep.subr.mxu0 %v1557
    %1593 = vmatpush1.msra.mxu0 %v1556
    %1594 = vmatprep.subr.mxu0 %v1561
    %1595 = vmatpush1.msra.mxu0 %v1560
    %1596 = vmatprep.subr.mxu0 0.0
    %1597 = vmatpush1.msra.mxu0 0.0
    %1598 = vmatprep.subr.mxu0 0.0
    %1599 = vmatpush1.msra.mxu0 0.0
    %1600 = vmatprep.subr.mxu0 0.0
    %1601 = vmatpush1.msra.mxu0 0.0
    %1602 = vmatprep.subr.mxu0 0.0
    %1603 = vmatpush1.msra.mxu0 0.0
    %1604 = vmatprep.subr.mxu0 0.0
    %1605 = vmatpush1.msra.mxu0 0.0
    %1606 = vmatprep.subr.mxu0 0.0
    %1607 = vmatpush1.msra.mxu0 0.0
    %1608 = vmatprep.subr.mxu0 0.0
    %1609 = vmatpush1.msra.mxu0 0.0
    %1610 = vmatprep.subr.mxu0 0.0
    %1611 = vmatpush1.msra.mxu0 0.0
    %1612 = vmatprep.subr.mxu0 0.0
    %1613 = vmatpush1.msra.mxu0 0.0
    %1614 = vmatprep.subr.mxu0 0.0
    %1615 = vmatpush1.msra.mxu0 0.0
    %1616 = vmatprep.subr.mxu0 0.0
    %1617 = vmatpush1.msra.mxu0 0.0
    %1618 = vmatprep.subr.mxu0 0.0
    %1619 = vmatpush1.msra.mxu0 0.0
    %1620 = vmatprep.subr.mxu0 0.0
    %1621 = vmatpush1.msra.mxu0 0.0
    %1622 = vmatprep.subr.mxu0 0.0
    %1623 = vmatpush1.msra.mxu0 0.0
    %1624 = vmatprep.subr.mxu0 0.0
    %1625 = vmatpush1.msra.mxu0 0.0
    %1626 = vmatprep.subr.mxu0 0.0
    %1627 = vmatpush1.msra.mxu0 0.0
    %1628 = vmatprep.mubr.f32.mxu0 0.0
    %1629 = vmatmul.mubr.f32.gmra.mrb[0].mxu0 %v1492
    %v1630 = vpop.f32.mrb[0].mxu0
    %v1631 = vadd.f32 0.0, %v1630
    %v1632 = vpop.f32.mrb[0].mxu0
    %v1633 = vadd.f32 0.0, %v1632
    %1634 = vdwg.mxu0
    %1635 = vmatprep.subr.mxu0 %v1503
    %1636 = vmatpush1.msra.mxu0 %v1502
    %1637 = vmatprep.subr.mxu0 %v1507
    %1638 = vmatpush1.msra.mxu0 %v1506
    %1639 = vmatprep.subr.mxu0 %v1511
    %1640 = vmatpush1.msra.mxu0 %v1510
    %1641 = vmatprep.subr.mxu0 %v1515
    %1642 = vmatpush1.msra.mxu0 %v1514
    %1643 = vmatprep.subr.mxu0 %v1519
    %1644 = vmatpush1.msra.mxu0 %v1518
    %1645 = vmatprep.subr.mxu0 %v1523
    %1646 = vmatpush1.msra.mxu0 %v1522
    %1647 = vmatprep.subr.mxu0 %v1527
    %1648 = vmatpush1.msra.mxu0 %v1526
    %1649 = vmatprep.subr.mxu0 %v1531
    %1650 = vmatpush1.msra.mxu0 %v1530
    %1651 = vmatprep.subr.mxu0 %v1535
    %1652 = vmatpush1.msra.mxu0 %v1534
    %1653 = vmatprep.subr.mxu0 %v1539
    %1654 = vmatpush1.msra.mxu0 %v1538
    %1655 = vmatprep.subr.mxu0 %v1543
    %1656 = vmatpush1.msra.mxu0 %v1542
    %1657 = vmatprep.subr.mxu0 %v1547
    %1658 = vmatpush1.msra.mxu0 %v1546
    %1659 = vmatprep.subr.mxu0 %v1551
    %1660 = vmatpush1.msra.mxu0 %v1550
    %1661 = vmatprep.subr.mxu0 %v1555
    %1662 = vmatpush1.msra.mxu0 %v1554
    %1663 = vmatprep.subr.mxu0 %v1559
    %1664 = vmatpush1.msra.mxu0 %v1558
    %1665 = vmatprep.subr.mxu0 %v1563
    %1666 = vmatpush1.msra.mxu0 %v1562
    %1667 = vmatprep.subr.mxu0 0.0
    %1668 = vmatpush1.msra.mxu0 0.0
    %1669 = vmatprep.subr.mxu0 0.0
    %1670 = vmatpush1.msra.mxu0 0.0
    %1671 = vmatprep.subr.mxu0 0.0
    %1672 = vmatpush1.msra.mxu0 0.0
    %1673 = vmatprep.subr.mxu0 0.0
    %1674 = vmatpush1.msra.mxu0 0.0
    %1675 = vmatprep.subr.mxu0 0.0
    %1676 = vmatpush1.msra.mxu0 0.0
    %1677 = vmatprep.subr.mxu0 0.0
    %1678 = vmatpush1.msra.mxu0 0.0
    %1679 = vmatprep.subr.mxu0 0.0
    %1680 = vmatpush1.msra.mxu0 0.0
    %1681 = vmatprep.subr.mxu0 0.0
    %1682 = vmatpush1.msra.mxu0 0.0
    %1683 = vmatprep.subr.mxu0 0.0
    %1684 = vmatpush1.msra.mxu0 0.0
    %1685 = vmatprep.subr.mxu0 0.0
    %1686 = vmatpush1.msra.mxu0 0.0
    %1687 = vmatprep.subr.mxu0 0.0
    %1688 = vmatpush1.msra.mxu0 0.0
    %1689 = vmatprep.subr.mxu0 0.0
    %1690 = vmatpush1.msra.mxu0 0.0
    %1691 = vmatprep.subr.mxu0 0.0
    %1692 = vmatpush1.msra.mxu0 0.0
    %1693 = vmatprep.subr.mxu0 0.0
    %1694 = vmatpush1.msra.mxu0 0.0
    %1695 = vmatprep.subr.mxu0 0.0
    %1696 = vmatpush1.msra.mxu0 0.0
    %1697 = vmatprep.subr.mxu0 0.0
    %1698 = vmatpush1.msra.mxu0 0.0
    %1699 = vmatprep.mubr.f32.mxu0 0.0
    %1700 = vmatmul.mubr.f32.gmra.mrb[0].mxu0 %v1492
    %v1701 = vpop.f32.mrb[0].mxu0
    %v1702 = vadd.f32 0.0, %v1701
    %v1703 = vpop.f32.mrb[0].mxu0
    %v1704 = vadd.f32 0.0, %v1703
    %1705 = vdwg.mxu0
    %v1706 = vadd.f32 %v1496, %v1631
    %v1707 = vadd.f32 %v1497, %v1633
    %v1708 = vadd.f32 %v1498, %v1702
    %v1709 = vadd.f32 %v1499, %v1704
    %v1710 = vxor.u32 %v1706, 2147483648
    %v1711 = vxor.u32 %v1707, 2147483648
    %v1712 = vxor.u32 %v1708, 2147483648
    %v1713 = vmul.f32 %v1710, 1.442695
    %v1714 = vpow.pop %v1713
    %v1715 = vmul.f32 %v1711, 1.442695
    %v1716 = vpow.pop %v1715
    %v1717 = vmul.f32 %v1712, 1.442695
    %v1718 = vpow.pop %v1717
    %v1719 = vadd.f32 %v1714, 1.0
    %v1720 = vadd.f32 %v1716, 1.0
    %v1721 = vadd.f32 %v1718, 1.0
    %v1722 = vrcp.pop %v1719
    %v1723 = vmul.f32 1.0, %v1722
    %v1724 = vrcp.pop %v1720
    %v1725 = vmul.f32 1.0, %v1724
    %v1726 = vrcp.pop %v1721
    %v1727 = vmul.f32 1.0, %v1726
    %v1728 = vtanh.pop %v1709
    %v1729 = vmul.f32 %v1725, %v1490
    %v1730 = vmul.f32 %v1723, %v1728
    %v1731 = vadd.f32 %v1729, %v1730
    %v1732 = vtanh.pop %v1731
    %v1733 = vmul.f32 %v1727, %v1732
    %s1734 = scalar_lea.vmem [#allocation9], 48
    %1735 = vst [vmem:[%s1734] sm:$0xff] %v1733
    %s1736 = scalar_lea.vmem [#allocation4], 224
    %v1737 = vld [vmem:[%s1736] sm:$0xff]
    %v1738 = vld [vmem:[%s1736 + $0x8] sm:$0xff]
    %v1739 = vld [vmem:[%s1736 + $0x10] sm:$0xff]
    %v1740 = vld [vmem:[%s1736 + $0x18] sm:$0xff]
    %v1741 = vld [vmem:[#allocation7] sm:$0xff]
    %v1742 = vld [vmem:[#allocation7 + $0x8] sm:$0xff]
    %v1743 = vld [vmem:[#allocation7 + $0x10] sm:$0xff]
    %v1744 = vld [vmem:[#allocation7 + $0x18] sm:$0xff]
    %v1745 = vld [vmem:[#allocation7 + $0x20] sm:$0xff]
    %v1746 = vld [vmem:[#allocation7 + $0x28] sm:$0xff]
    %v1747 = vld [vmem:[#allocation7 + $0x30] sm:$0xff]
    %v1748 = vld [vmem:[#allocation7 + $0x38] sm:$0xff]
    %v1749 = vld [vmem:[#allocation7 + $0x40] sm:$0xff]
    %v1750 = vld [vmem:[#allocation7 + $0x48] sm:$0xff]
    %v1751 = vld [vmem:[#allocation7 + $0x50] sm:$0xff]
    %v1752 = vld [vmem:[#allocation7 + $0x58] sm:$0xff]
    %v1753 = vld [vmem:[#allocation7 + $0x60] sm:$0xff]
    %v1754 = vld [vmem:[#allocation7 + $0x68] sm:$0xff]
    %v1755 = vld [vmem:[#allocation7 + $0x70] sm:$0xff]
    %v1756 = vld [vmem:[#allocation7 + $0x78] sm:$0xff]
    %v1757 = vld [vmem:[#allocation7 + $0x80] sm:$0xff]
    %v1758 = vld [vmem:[#allocation7 + $0x88] sm:$0xff]
    %v1759 = vld [vmem:[#allocation7 + $0x90] sm:$0xff]
    %v1760 = vld [vmem:[#allocation7 + $0x98] sm:$0xff]
    %v1761 = vld [vmem:[#allocation7 + $0xa0] sm:$0xff]
    %v1762 = vld [vmem:[#allocation7 + $0xa8] sm:$0xff]
    %v1763 = vld [vmem:[#allocation7 + $0xb0] sm:$0xff]
    %v1764 = vld [vmem:[#allocation7 + $0xb8] sm:$0xff]
    %v1765 = vld [vmem:[#allocation7 + $0xc0] sm:$0xff]
    %v1766 = vld [vmem:[#allocation7 + $0xc8] sm:$0xff]
    %v1767 = vld [vmem:[#allocation7 + $0xd0] sm:$0xff]
    %v1768 = vld [vmem:[#allocation7 + $0xd8] sm:$0xff]
    %v1769 = vld [vmem:[#allocation7 + $0xe0] sm:$0xff]
    %v1770 = vld [vmem:[#allocation7 + $0xe8] sm:$0xff]
    %v1771 = vld [vmem:[#allocation7 + $0xf0] sm:$0xff]
    %v1772 = vld [vmem:[#allocation7 + $0xf8] sm:$0xff]
    %v1773 = vld [vmem:[#allocation7 + $0x100] sm:$0xff]
    %v1774 = vld [vmem:[#allocation7 + $0x108] sm:$0xff]
    %v1775 = vld [vmem:[#allocation7 + $0x110] sm:$0xff]
    %v1776 = vld [vmem:[#allocation7 + $0x118] sm:$0xff]
    %v1777 = vld [vmem:[#allocation7 + $0x120] sm:$0xff]
    %v1778 = vld [vmem:[#allocation7 + $0x128] sm:$0xff]
    %v1779 = vld [vmem:[#allocation7 + $0x130] sm:$0xff]
    %v1780 = vld [vmem:[#allocation7 + $0x138] sm:$0xff]
    %v1781 = vld [vmem:[#allocation7 + $0x140] sm:$0xff]
    %v1782 = vld [vmem:[#allocation7 + $0x148] sm:$0xff]
    %v1783 = vld [vmem:[#allocation7 + $0x150] sm:$0xff]
    %v1784 = vld [vmem:[#allocation7 + $0x158] sm:$0xff]
    %v1785 = vld [vmem:[#allocation7 + $0x160] sm:$0xff]
    %v1786 = vld [vmem:[#allocation7 + $0x168] sm:$0xff]
    %v1787 = vld [vmem:[#allocation7 + $0x170] sm:$0xff]
    %v1788 = vld [vmem:[#allocation7 + $0x178] sm:$0xff]
    %v1789 = vld [vmem:[#allocation7 + $0x180] sm:$0xff]
    %v1790 = vld [vmem:[#allocation7 + $0x188] sm:$0xff]
    %v1791 = vld [vmem:[#allocation7 + $0x190] sm:$0xff]
    %v1792 = vld [vmem:[#allocation7 + $0x198] sm:$0xff]
    %v1793 = vld [vmem:[#allocation7 + $0x1a0] sm:$0xff]
    %v1794 = vld [vmem:[#allocation7 + $0x1a8] sm:$0xff]
    %v1795 = vld [vmem:[#allocation7 + $0x1b0] sm:$0xff]
    %v1796 = vld [vmem:[#allocation7 + $0x1b8] sm:$0xff]
    %v1797 = vld [vmem:[#allocation7 + $0x1c0] sm:$0xff]
    %v1798 = vld [vmem:[#allocation7 + $0x1c8] sm:$0xff]
    %v1799 = vld [vmem:[#allocation7 + $0x1d0] sm:$0xff]
    %v1800 = vld [vmem:[#allocation7 + $0x1d8] sm:$0xff]
    %v1801 = vld [vmem:[#allocation7 + $0x1e0] sm:$0xff]
    %v1802 = vld [vmem:[#allocation7 + $0x1e8] sm:$0xff]
    %v1803 = vld [vmem:[#allocation7 + $0x1f0] sm:$0xff]
    %v1804 = vld [vmem:[#allocation7 + $0x1f8] sm:$0xff]
    %1805 = vmatprep.subr.mxu0 %v1742
    %1806 = vmatpush1.msra.mxu0 %v1741
    %1807 = vmatprep.subr.mxu0 %v1746
    %1808 = vmatpush1.msra.mxu0 %v1745
    %1809 = vmatprep.subr.mxu0 %v1750
    %1810 = vmatpush1.msra.mxu0 %v1749
    %1811 = vmatprep.subr.mxu0 %v1754
    %1812 = vmatpush1.msra.mxu0 %v1753
    %1813 = vmatprep.subr.mxu0 %v1758
    %1814 = vmatpush1.msra.mxu0 %v1757
    %1815 = vmatprep.subr.mxu0 %v1762
    %1816 = vmatpush1.msra.mxu0 %v1761
    %1817 = vmatprep.subr.mxu0 %v1766
    %1818 = vmatpush1.msra.mxu0 %v1765
    %1819 = vmatprep.subr.mxu0 %v1770
    %1820 = vmatpush1.msra.mxu0 %v1769
    %1821 = vmatprep.subr.mxu0 %v1774
    %1822 = vmatpush1.msra.mxu0 %v1773
    %1823 = vmatprep.subr.mxu0 %v1778
    %1824 = vmatpush1.msra.mxu0 %v1777
    %1825 = vmatprep.subr.mxu0 %v1782
    %1826 = vmatpush1.msra.mxu0 %v1781
    %1827 = vmatprep.subr.mxu0 %v1786
    %1828 = vmatpush1.msra.mxu0 %v1785
    %1829 = vmatprep.subr.mxu0 %v1790
    %1830 = vmatpush1.msra.mxu0 %v1789
    %1831 = vmatprep.subr.mxu0 %v1794
    %1832 = vmatpush1.msra.mxu0 %v1793
    %1833 = vmatprep.subr.mxu0 %v1798
    %1834 = vmatpush1.msra.mxu0 %v1797
    %1835 = vmatprep.subr.mxu0 %v1802
    %1836 = vmatpush1.msra.mxu0 %v1801
    %1837 = vmatprep.subr.mxu0 0.0
    %1838 = vmatpush1.msra.mxu0 0.0
    %1839 = vmatprep.subr.mxu0 0.0
    %1840 = vmatpush1.msra.mxu0 0.0
    %1841 = vmatprep.subr.mxu0 0.0
    %1842 = vmatpush1.msra.mxu0 0.0
    %1843 = vmatprep.subr.mxu0 0.0
    %1844 = vmatpush1.msra.mxu0 0.0
    %1845 = vmatprep.subr.mxu0 0.0
    %1846 = vmatpush1.msra.mxu0 0.0
    %1847 = vmatprep.subr.mxu0 0.0
    %1848 = vmatpush1.msra.mxu0 0.0
    %1849 = vmatprep.subr.mxu0 0.0
    %1850 = vmatpush1.msra.mxu0 0.0
    %1851 = vmatprep.subr.mxu0 0.0
    %1852 = vmatpush1.msra.mxu0 0.0
    %1853 = vmatprep.subr.mxu0 0.0
    %1854 = vmatpush1.msra.mxu0 0.0
    %1855 = vmatprep.subr.mxu0 0.0
    %1856 = vmatpush1.msra.mxu0 0.0
    %1857 = vmatprep.subr.mxu0 0.0
    %1858 = vmatpush1.msra.mxu0 0.0
    %1859 = vmatprep.subr.mxu0 0.0
    %1860 = vmatpush1.msra.mxu0 0.0
    %1861 = vmatprep.subr.mxu0 0.0
    %1862 = vmatpush1.msra.mxu0 0.0
    %1863 = vmatprep.subr.mxu0 0.0
    %1864 = vmatpush1.msra.mxu0 0.0
    %1865 = vmatprep.subr.mxu0 0.0
    %1866 = vmatpush1.msra.mxu0 0.0
    %1867 = vmatprep.subr.mxu0 0.0
    %1868 = vmatpush1.msra.mxu0 0.0
    %1869 = vmatprep.mubr.f32.mxu0 0.0
    %1870 = vmatmul.mubr.f32.gmra.mrb[0].mxu0 %v1733
    %v1871 = vpop.f32.mrb[0].mxu0
    %v1872 = vadd.f32 0.0, %v1871
    %v1873 = vpop.f32.mrb[0].mxu0
    %v1874 = vadd.f32 0.0, %v1873
    %1875 = vdwg.mxu0
    %1876 = vmatprep.subr.mxu0 %v1744
    %1877 = vmatpush1.msra.mxu0 %v1743
    %1878 = vmatprep.subr.mxu0 %v1748
    %1879 = vmatpush1.msra.mxu0 %v1747
    %1880 = vmatprep.subr.mxu0 %v1752
    %1881 = vmatpush1.msra.mxu0 %v1751
    %1882 = vmatprep.subr.mxu0 %v1756
    %1883 = vmatpush1.msra.mxu0 %v1755
    %1884 = vmatprep.subr.mxu0 %v1760
    %1885 = vmatpush1.msra.mxu0 %v1759
    %1886 = vmatprep.subr.mxu0 %v1764
    %1887 = vmatpush1.msra.mxu0 %v1763
    %1888 = vmatprep.subr.mxu0 %v1768
    %1889 = vmatpush1.msra.mxu0 %v1767
    %1890 = vmatprep.subr.mxu0 %v1772
    %1891 = vmatpush1.msra.mxu0 %v1771
    %1892 = vmatprep.subr.mxu0 %v1776
    %1893 = vmatpush1.msra.mxu0 %v1775
    %1894 = vmatprep.subr.mxu0 %v1780
    %1895 = vmatpush1.msra.mxu0 %v1779
    %1896 = vmatprep.subr.mxu0 %v1784
    %1897 = vmatpush1.msra.mxu0 %v1783
    %1898 = vmatprep.subr.mxu0 %v1788
    %1899 = vmatpush1.msra.mxu0 %v1787
    %1900 = vmatprep.subr.mxu0 %v1792
    %1901 = vmatpush1.msra.mxu0 %v1791
    %1902 = vmatprep.subr.mxu0 %v1796
    %1903 = vmatpush1.msra.mxu0 %v1795
    %1904 = vmatprep.subr.mxu0 %v1800
    %1905 = vmatpush1.msra.mxu0 %v1799
    %1906 = vmatprep.subr.mxu0 %v1804
    %1907 = vmatpush1.msra.mxu0 %v1803
    %1908 = vmatprep.subr.mxu0 0.0
    %1909 = vmatpush1.msra.mxu0 0.0
    %1910 = vmatprep.subr.mxu0 0.0
    %1911 = vmatpush1.msra.mxu0 0.0
    %1912 = vmatprep.subr.mxu0 0.0
    %1913 = vmatpush1.msra.mxu0 0.0
    %1914 = vmatprep.subr.mxu0 0.0
    %1915 = vmatpush1.msra.mxu0 0.0
    %1916 = vmatprep.subr.mxu0 0.0
    %1917 = vmatpush1.msra.mxu0 0.0
    %1918 = vmatprep.subr.mxu0 0.0
    %1919 = vmatpush1.msra.mxu0 0.0
    %1920 = vmatprep.subr.mxu0 0.0
    %1921 = vmatpush1.msra.mxu0 0.0
    %1922 = vmatprep.subr.mxu0 0.0
    %1923 = vmatpush1.msra.mxu0 0.0
    %1924 = vmatprep.subr.mxu0 0.0
    %1925 = vmatpush1.msra.mxu0 0.0
    %1926 = vmatprep.subr.mxu0 0.0
    %1927 = vmatpush1.msra.mxu0 0.0
    %1928 = vmatprep.subr.mxu0 0.0
    %1929 = vmatpush1.msra.mxu0 0.0
    %1930 = vmatprep.subr.mxu0 0.0
    %1931 = vmatpush1.msra.mxu0 0.0
    %1932 = vmatprep.subr.mxu0 0.0
    %1933 = vmatpush1.msra.mxu0 0.0
    %1934 = vmatprep.subr.mxu0 0.0
    %1935 = vmatpush1.msra.mxu0 0.0
    %1936 = vmatprep.subr.mxu0 0.0
    %1937 = vmatpush1.msra.mxu0 0.0
    %1938 = vmatprep.subr.mxu0 0.0
    %1939 = vmatpush1.msra.mxu0 0.0
    %1940 = vmatprep.mubr.f32.mxu0 0.0
    %1941 = vmatmul.mubr.f32.gmra.mrb[0].mxu0 %v1733
    %v1942 = vpop.f32.mrb[0].mxu0
    %v1943 = vadd.f32 0.0, %v1942
    %v1944 = vpop.f32.mrb[0].mxu0
    %v1945 = vadd.f32 0.0, %v1944
    %1946 = vdwg.mxu0
    %v1947 = vadd.f32 %v1737, %v1872
    %v1948 = vadd.f32 %v1738, %v1874
    %v1949 = vadd.f32 %v1739, %v1943
    %v1950 = vadd.f32 %v1740, %v1945
    %v1951 = vxor.u32 %v1947, 2147483648
    %v1952 = vxor.u32 %v1948, 2147483648
    %v1953 = vxor.u32 %v1949, 2147483648
    %v1954 = vmul.f32 %v1951, 1.442695
    %v1955 = vpow.pop %v1954
    %v1956 = vmul.f32 %v1952, 1.442695
    %v1957 = vpow.pop %v1956
    %v1958 = vmul.f32 %v1953, 1.442695
    %v1959 = vpow.pop %v1958
    %v1960 = vadd.f32 %v1955, 1.0
    %v1961 = vadd.f32 %v1957, 1.0
    %v1962 = vadd.f32 %v1959, 1.0
    %v1963 = vrcp.pop %v1960
    %v1964 = vmul.f32 1.0, %v1963
    %v1965 = vrcp.pop %v1961
    %v1966 = vmul.f32 1.0, %v1965
    %v1967 = vrcp.pop %v1962
    %v1968 = vmul.f32 1.0, %v1967
    %v1969 = vtanh.pop %v1950
    %v1970 = vmul.f32 %v1966, %v1731
    %v1971 = vmul.f32 %v1964, %v1969
    %v1972 = vadd.f32 %v1970, %v1971
    %v1973 = vtanh.pop %v1972
    %v1974 = vmul.f32 %v1968, %v1973
    %s1975 = scalar_lea.vmem [#allocation9], 56
    %1976 = vst [vmem:[%s1975] sm:$0xff] %v1974
    %1977 = vst [vmem:[#allocation2] sm:$0xff] %v1972
    %1978 = vst [vmem:[#allocation3] sm:$0xff] %v1974
    // Predicated region
    $region22: #{tpu_custom_call.1} parent=1 // pred_check
      %p1979 = pneg %p43
    $region23: #{tpu_custom_call.1} parent=1 // pred_check_branch
      %1981 = sbr.rel (%p1979) target = $region25
    $region24: #{tpu_custom_call.1} parent=1 // pred_region
      %1982 = vst [vmem:[#allocation10] sm:$0xff] %v1972
    $region25: #{tpu_custom_call.1} parent=1 // pred_fallthru
      _
    // Predicated region
    $region26: #{tpu_custom_call.1} parent=1 // pred_check
      _
    $region27: #{tpu_custom_call.1} parent=1 // pred_check_branch
      %1984 = sbr.rel (0) target = $region29
    $region28: #{tpu_custom_call.1} parent=1 // pred_region
      %s1986 = ssub.s32 1024, 1024
      %1987 = vsyncadd [#allocation6], %s1986
      %s1988 = sshll.u32 [#allocation9], 4
      %s1989 = int_to_ptr.vmem [resolvable:$true] %s1988
      %1994 = dma.vmem_to_hbm [thread:$0]  %s1989, 1024, %s2, [#allocation6], 128, 128, 8
    $region29: #{tpu_custom_call.1} parent=1 // pred_fallthru
      _
    // Predicated region
    $region30: #{tpu_custom_call.1} parent=1 // pred_check
      _
    $region31: #{tpu_custom_call.1} parent=1 // pred_check_branch
      %1996 = sbr.rel (0) target = $region33
    $region32: #{tpu_custom_call.1} parent=1 // pred_region
      %s1998 = ssub.s32 128, 128
      %1999 = vsyncadd [#allocation11], %s1998
      %s2001 = sshll.u32 [#allocation10], 4
      %s2002 = int_to_ptr.vmem [resolvable:$true] %s2001
      %2004 = dma.vmem_to_hbm [thread:$0]  %s2002, 128, %s3, [#allocation11]
    $region33: #{tpu_custom_call.1} parent=1 // pred_fallthru
      _
    // Predicated region
    $region34: #{tpu_custom_call.1} parent=1 // pred_check
      _
    $region35: #{tpu_custom_call.1} parent=1 // pred_check_branch
      %2006 = sbr.rel (0) target = $region37
    $region36: #{tpu_custom_call.1} parent=1 // pred_region
      %2007 = dma.done [#allocation6], 1024
    $region37: #{tpu_custom_call.1} parent=1 // pred_fallthru
      _
    // Predicated region
    $region38: #{tpu_custom_call.1} parent=1 // pred_check
      _
    $region39: #{tpu_custom_call.1} parent=1 // pred_check_branch
      %2009 = sbr.rel (0) target = $region41
    $region40: #{tpu_custom_call.1} parent=1 // pred_region
      %2010 = dma.done [#allocation11], 128
    $region41: #{tpu_custom_call.1} parent=1 // pred_fallthru
      _
    %2011 = vsyncpa [#allocation5], 1
    %2012 = vsyncpa [#allocation8], 1
    %2013 = vsyncpa [#allocation6], 1
    %2014 = vsyncpa [#allocation11], 1

</llo_original>
